<compile_context>
chip_gen: v7x
topology: tpu7x:2x2x1
jax: 0.10.0
libtpu: 0.0.40
codegen_flags: <defaults>
</compile_context>

<pallas_src>
import numpy as np
import jax
import jax.numpy as jnp
from jax.experimental import pallas as pl
from jax.experimental.pallas import tpu as pltpu

# ----- configuration matching ConditionGenerator(n_fft, overlap) ------------
N_FFT = 254                   # chosen so in_features = n_fft//2 + 1 = 128 (lane aligned)
OVERLAP = 0.75
N_SAMPLES = 64000             # hardcoded in synths.Harmonic(n_samples=64000)
SAMPLE_RATE = 16000
N_HARMONICS = 101
IN_FEATURES = N_FFT // 2 + 1  # 128


# ============================ Pallas kernel ==================================
def film_kernel(x_ref, w1_ref, b1_ref, wg2_ref, bg2_ref, wb2_ref, bb2_ref,
                gamma_ref, beta_ref):
    # Fused gamma/beta FiLM branches:
    #   h     = tanh(x @ [Wg1|Wb1] + [bg1|bb1])       (tm, 2F)   one MXU matmul
    #   gamma = relu(h[:, :F] @ Wg2 + bg2)             (tm, F)
    #   beta  = relu(h[:, F:] @ Wb2 + bb2)             (tm, F)
    F = gamma_ref.shape[-1]
    x = x_ref[...]                                                   # (tm, F)
    h = jnp.tanh(jnp.dot(x, w1_ref[...],
                         preferred_element_type=jnp.float32) + b1_ref[...])
    # Lane-aligned split (F == 128): picks whole vregs, zero relayout cost.
    g = jnp.dot(h[:, :F], wg2_ref[...],
                preferred_element_type=jnp.float32) + bg2_ref[...]
    b = jnp.dot(h[:, F:], wb2_ref[...],
                preferred_element_type=jnp.float32) + bb2_ref[...]
    gamma_ref[...] = jnp.maximum(g, 0.0)                             # (tm, F)
    beta_ref[...] = jnp.maximum(b, 0.0)                              # (tm, F)


def film_pallas(x2d, w1, b1, wg2, bg2, wb2, bb2, tm=1024):
    """x2d: (M, F) f32; w1 (F,2F), b1 (1,2F), wg2/wb2 (F,F), bg2/bb2 (1,F).

    Returns (gamma, beta), each (M, F) f32.
    """
    M, F = x2d.shape
    F2 = 2 * F

    # Tile choice: as large as practical (per-grid-step overhead ~0.35us), but
    # keep >= 2 grid steps so v7x's two TensorCores both get work.  VMEM
    # footprint at tm=1024 is ~3.5 MiB double-buffered — well within limits.
    half = (((M + 1) // 2) + 7) // 8 * 8
    tm = max(8, min(tm, half))
    grid = pl.cdiv(M, tm)   # no host-side padding: ragged last tile is masked

    cost = pl.CostEstimate(
        flops=2 * M * F * F2 + 2 * (2 * M * F * F),
        transcendentals=M * F2,
        bytes_accessed=4 * (3 * M * F + F * F2 + 2 * F * F + F2 + 2 * F),
    )

    row_in_spec = pl.BlockSpec((tm, F), lambda i: (i, 0))
    gamma_out_spec = pl.BlockSpec((tm, F), lambda i: (i, 0))
    beta_out_spec = pl.BlockSpec((tm, F), lambda i: (i, 0))
    # Weights/biases: constant index maps -> Pallas DMAs them once and keeps
    # them resident across the row grid.
    w1_spec = pl.BlockSpec((F, F2), lambda i: (0, 0))
    b1_spec = pl.BlockSpec((1, F2), lambda i: (0, 0))
    w2_spec_g = pl.BlockSpec((F, F), lambda i: (0, 0))
    b2_spec_g = pl.BlockSpec((1, F), lambda i: (0, 0))
    w2_spec_b = pl.BlockSpec((F, F), lambda i: (0, 0))
    b2_spec_b = pl.BlockSpec((1, F), lambda i: (0, 0))

    gamma2d, beta2d = pl.pallas_call(
        film_kernel,
        out_shape=(jax.ShapeDtypeStruct((M, F), jnp.float32),
                   jax.ShapeDtypeStruct((M, F), jnp.float32)),
        grid=(grid,),
        in_specs=[row_in_spec, w1_spec, b1_spec,
                  w2_spec_g, b2_spec_g, w2_spec_b, b2_spec_b],
        out_specs=[gamma_out_spec, beta_out_spec],
        compiler_params=pltpu.CompilerParams(
            dimension_semantics=("parallel",)),
        cost_estimate=cost,
    )(x2d, w1, b1, wg2, bg2, wb2, bb2)
    return gamma2d, beta2d


def pack_film_params(params):
    """Pack per-branch Linear layers into fused kernel operands."""
    w1 = jnp.concatenate([params["wg1"], params["wb1"]], axis=1)        # (F, 2F)
    b1 = jnp.concatenate([params["bg1"], params["bb1"]], axis=1)        # (1, 2F)
    return w1, b1, params["wg2"], params["bg2"], params["wb2"], params["bb2"]


# ====================== plain-JAX preprocessing (glue) =======================
def exp_sigmoid(x, exponent=10.0, max_value=2.0, threshold=1e-7):
    return max_value * jax.nn.sigmoid(x) ** jnp.log(exponent) + threshold


def harmonic_synth(amplitudes, harmonic_distribution, f0_hz,
                   n_samples=N_SAMPLES, sample_rate=SAMPLE_RATE):
    """DDSP-style harmonic additive synthesizer (control-rate -> audio)."""
    amplitudes = exp_sigmoid(amplitudes)                         # (B, T, 1)
    harmonic_distribution = exp_sigmoid(harmonic_distribution)   # (B, T, H)
    n_h = harmonic_distribution.shape[-1]
    harm_numbers = jnp.arange(1, n_h + 1, dtype=jnp.float32)     # (H,)
    harm_freqs = f0_hz * harm_numbers                            # (B, T, H)
    # zero out harmonics above Nyquist, renormalize distribution
    harmonic_distribution = jnp.where(harm_freqs < sample_rate / 2.0,
                                      harmonic_distribution, 0.0)
    harmonic_distribution = harmonic_distribution / (
        jnp.sum(harmonic_distribution, axis=-1, keepdims=True) + 1e-7)
    harm_amps = amplitudes * harmonic_distribution               # (B, T, H)

    B = f0_hz.shape[0]
    # TODO(synk): DDSP upsamples control signals with overlapping Hann windows;
    # linear interpolation is used here instead.
    f0_env = jax.image.resize(f0_hz, (B, n_samples, 1), method="linear")
    amp_env = jax.image.resize(harm_amps, (B, n_samples, n_h), method="linear")

    # Accumulate only the fundamental phase and scale per harmonic: linear
    # interpolation and cumsum commute with the per-harmonic scaling, so this
    # is mathematically identical to cumsum'ing all H channels but does 101x
    # less resize/cumsum work.
    # TODO(synk): f32 phase accumulation over 64000 samples still drifts for
    # high harmonics; DDSP's angular_cumsum (chunked mod-2pi) is more precise.
    omega0 = 2.0 * np.pi * f0_env / sample_rate                  # (B, n, 1)
    phase0 = jnp.cumsum(omega0, axis=1)                          # (B, n, 1)
    phases = phase0 * harm_numbers                               # (B, n, H)
    signal = jnp.sum(jnp.sin(phases) * amp_env, axis=-1)         # (B, n_samples)
    return signal.astype(jnp.float32)


def compute_mag(audio, n_fft, overlap):
    """STFT magnitude, returns (B, freq_bins, n_frames)."""
    # TODO(synk): exact frame-count convention of spectral_ops.compute_mag
    # (torch.stft center/pad_end) is approximated by reflect-center + zero pad_end.
    hop = int(n_fft * (1.0 - overlap))
    pad = n_fft // 2
    audio = jnp.pad(audio, ((0, 0), (pad, pad)), mode="reflect")
    length = audio.shape[-1]
    rem = (length - n_fft) % hop
    if rem:
        audio = jnp.pad(audio, ((0, 0), (0, hop - rem)))
    length = audio.shape[-1]
    n_frames = 1 + (length - n_fft) // hop
    starts = np.arange(n_frames) * hop
    idx = starts[:, None] + np.arange(n_fft)[None, :]            # (T, n_fft)
    frames = audio[:, idx]                                       # (B, T, n_fft)
    n = np.arange(n_fft)
    win = (0.5 - 0.5 * np.cos(2.0 * np.pi * n / n_fft)).astype(np.float32)
    spec = jnp.fft.rfft(frames * win, axis=-1)                   # (B, T, F)
    mag = jnp.abs(spec).astype(jnp.float32)
    return jnp.transpose(mag, (0, 2, 1))                         # (B, F, T)


# =========================== forward (full module) ===========================
def condition_generator_forward(f0_hz, params):
    B, n_frames, _ = f0_hz.shape
    harmonic_amplitudes = jnp.ones((B, n_frames, 1), jnp.float32)
    harmonic_distribution = jnp.ones((B, n_frames, N_HARMONICS), jnp.float32)
    harmonic_signal = harmonic_synth(harmonic_amplitudes,
                                     harmonic_distribution, f0_hz)
    harmonic_mag = compute_mag(harmonic_signal, N_FFT, OVERLAP)   # (B, F, T)
    x = jnp.transpose(harmonic_mag, (0, 2, 1))                    # (B, T, F)
    Bx, T, F = x.shape
    x2d = x.reshape(Bx * T, F)                                    # free bitcast

    w1, b1, wg2, bg2, wb2, bb2 = pack_film_params(params)
    gamma2d, beta2d = film_pallas(x2d, w1, b1, wg2, bg2, wb2, bb2)

    gamma = jnp.transpose(gamma2d.reshape(Bx, T, F), (0, 2, 1))   # (B, F, T)
    beta = jnp.transpose(beta2d.reshape(Bx, T, F), (0, 2, 1))     # (B, F, T)
    return beta, gamma


# ============================ parameter init =================================
def init_params(key, in_features):
    # Mimic PyTorch nn.Linear default init: U(-k, k), k = 1/sqrt(in_features).
    k = 1.0 / np.sqrt(in_features)
    names = ["wg1", "bg1", "wg2", "bg2", "wb1", "bb1", "wb2", "bb2"]
    keys = jax.random.split(key, len(names))
    params = {}
    for name, kk in zip(names, keys):
        if name.startswith("w"):
            shape = (in_features, in_features)   # stored as (in, out)
        else:
            shape = (1, in_features)
        params[name] = jax.random.uniform(kk, shape, jnp.float32, -k, k)
    return params


if __name__ == "__main__":
    key = jax.random.PRNGKey(0)
    pkey, fkey = jax.random.split(key)
    params = init_params(pkey, IN_FEATURES)

    # f0 input: (batch=2, n_frames=8, 1), pitches in [100, 400] Hz
    f0_hz = jax.random.uniform(fkey, (2, 8, 1), jnp.float32, 100.0, 400.0)

    beta, gamma = jax.jit(condition_generator_forward)(f0_hz, params)
    jax.block_until_ready((beta, gamma))

    assert beta.shape == gamma.shape
    assert beta.shape[0] == 2 and beta.shape[1] == IN_FEATURES
    assert bool(jnp.all(beta >= 0.0)) and bool(jnp.all(gamma >= 0.0))
    assert bool(jnp.all(jnp.isfinite(beta))) and bool(jnp.all(jnp.isfinite(gamma)))
    print("KERNEL_OK")
</pallas_src>

<mosaic_0001>
module attributes {stable_mosaic.version = 11 : i64} {
  func.func @film_kernel(%arg0: i32, %arg1: memref<1024x128xf32, #tpu.memory_space<vmem>>, %arg2: memref<128x256xf32, #tpu.memory_space<vmem>>, %arg3: memref<1x256xf32, #tpu.memory_space<vmem>>, %arg4: memref<128x128xf32, #tpu.memory_space<vmem>>, %arg5: memref<1x128xf32, #tpu.memory_space<vmem>>, %arg6: memref<128x128xf32, #tpu.memory_space<vmem>>, %arg7: memref<1x128xf32, #tpu.memory_space<vmem>>, %arg8: memref<1024x128xf32, #tpu.memory_space<vmem>>, %arg9: memref<1024x128xf32, #tpu.memory_space<vmem>>) attributes {dimension_semantics = [#tpu.dimension_semantics<parallel>], iteration_bounds = array<i64: 2>, scalar_prefetch = 0 : i64, scratch_operands = 0 : i64, tpu.core_type = #tpu.core_type<tc>, window_params = [{transform_indices = @transform_0, window_bounds = array<i64: 1024, 128>}, {pipeline_mode = #tpu.pipeline_mode<synchronous>, transform_indices = @transform_1, window_bounds = array<i64: 128, 256>}, {pipeline_mode = #tpu.pipeline_mode<synchronous>, transform_indices = @transform_2, window_bounds = array<i64: 1, 256>}, {pipeline_mode = #tpu.pipeline_mode<synchronous>, transform_indices = @transform_3, window_bounds = array<i64: 128, 128>}, {pipeline_mode = #tpu.pipeline_mode<synchronous>, transform_indices = @transform_4, window_bounds = array<i64: 1, 128>}, {pipeline_mode = #tpu.pipeline_mode<synchronous>, transform_indices = @transform_5, window_bounds = array<i64: 128, 128>}, {pipeline_mode = #tpu.pipeline_mode<synchronous>, transform_indices = @transform_6, window_bounds = array<i64: 1, 128>}, {transform_indices = @transform_7, window_bounds = array<i64: 1024, 128>}, {transform_indices = @transform_8, window_bounds = array<i64: 1024, 128>}]} {
    %c0 = arith.constant 0 : index
    %c0_0 = arith.constant 0 : index
    %0 = vector.load %arg1[%c0, %c0_0] : memref<1024x128xf32, #tpu.memory_space<vmem>>, vector<1024x128xf32>
    %c0_1 = arith.constant 0 : index
    %c0_2 = arith.constant 0 : index
    %1 = vector.load %arg2[%c0_1, %c0_2] : memref<128x256xf32, #tpu.memory_space<vmem>>, vector<128x256xf32>
    %cst = arith.constant dense<0.000000e+00> : vector<1024x256xf32>
    %2 = tpu.matmul %0, %1, %cst {dimension_numbers = #tpu.dot_dimension_numbers<[1], [0], [0], [1], [0, 0, 1, 1], [], []>} : vector<1024x128xf32>, vector<128x256xf32>, vector<1024x256xf32> -> vector<1024x256xf32>
    %c0_3 = arith.constant 0 : index
    %c0_4 = arith.constant 0 : index
    %3 = vector.load %arg3[%c0_3, %c0_4] : memref<1x256xf32, #tpu.memory_space<vmem>>, vector<1x256xf32>
    %4 = vector.broadcast %3 : vector<1x256xf32> to vector<1024x256xf32>
    %5 = arith.addf %2, %4 : vector<1024x256xf32>
    %6 = math.tanh %5 : vector<1024x256xf32>
    %7 = vector.extract_strided_slice %6 {offsets = [0, 0], sizes = [1024, 128], strides = [1, 1]} : vector<1024x256xf32> to vector<1024x128xf32>
    %c0_5 = arith.constant 0 : index
    %c0_6 = arith.constant 0 : index
    %8 = vector.load %arg4[%c0_5, %c0_6] : memref<128x128xf32, #tpu.memory_space<vmem>>, vector<128x128xf32>
    %cst_7 = arith.constant dense<0.000000e+00> : vector<1024x128xf32>
    %9 = tpu.matmul %7, %8, %cst_7 {dimension_numbers = #tpu.dot_dimension_numbers<[1], [0], [0], [1], [0, 0, 1, 1], [], []>} : vector<1024x128xf32>, vector<128x128xf32>, vector<1024x128xf32> -> vector<1024x128xf32>
    %c0_8 = arith.constant 0 : index
    %c0_9 = arith.constant 0 : index
    %10 = vector.load %arg5[%c0_8, %c0_9] : memref<1x128xf32, #tpu.memory_space<vmem>>, vector<1x128xf32>
    %11 = vector.broadcast %10 : vector<1x128xf32> to vector<1024x128xf32>
    %12 = arith.addf %9, %11 : vector<1024x128xf32>
    %13 = vector.extract_strided_slice %6 {offsets = [0, 128], sizes = [1024, 128], strides = [1, 1]} : vector<1024x256xf32> to vector<1024x128xf32>
    %c0_10 = arith.constant 0 : index
    %c0_11 = arith.constant 0 : index
    %14 = vector.load %arg6[%c0_10, %c0_11] : memref<128x128xf32, #tpu.memory_space<vmem>>, vector<128x128xf32>
    %cst_12 = arith.constant dense<0.000000e+00> : vector<1024x128xf32>
    %15 = tpu.matmul %13, %14, %cst_12 {dimension_numbers = #tpu.dot_dimension_numbers<[1], [0], [0], [1], [0, 0, 1, 1], [], []>} : vector<1024x128xf32>, vector<128x128xf32>, vector<1024x128xf32> -> vector<1024x128xf32>
    %c0_13 = arith.constant 0 : index
    %c0_14 = arith.constant 0 : index
    %16 = vector.load %arg7[%c0_13, %c0_14] : memref<1x128xf32, #tpu.memory_space<vmem>>, vector<1x128xf32>
    %17 = vector.broadcast %16 : vector<1x128xf32> to vector<1024x128xf32>
    %18 = arith.addf %15, %17 : vector<1024x128xf32>
    %cst_15 = arith.constant 0.000000e+00 : f32
    %19 = vector.broadcast %cst_15 : f32 to vector<1024x128xf32>
    %20 = arith.maximumf %12, %19 : vector<1024x128xf32>
    %c0_16 = arith.constant 0 : index
    %c0_17 = arith.constant 0 : index
    %21 = vector.load %arg8[%c0_16, %c0_17] : memref<1024x128xf32, #tpu.memory_space<vmem>>, vector<1024x128xf32>
    tpu.vector_store %arg8[%c0_16, %c0_17], %20 {strides = array<i32>} : memref<1024x128xf32, #tpu.memory_space<vmem>>, vector<1024x128xf32>,
    %cst_18 = arith.constant 0.000000e+00 : f32
    %22 = vector.broadcast %cst_18 : f32 to vector<1024x128xf32>
    %23 = arith.maximumf %18, %22 : vector<1024x128xf32>
    %c0_19 = arith.constant 0 : index
    %c0_20 = arith.constant 0 : index
    %24 = vector.load %arg9[%c0_19, %c0_20] : memref<1024x128xf32, #tpu.memory_space<vmem>>, vector<1024x128xf32>
    tpu.vector_store %arg9[%c0_19, %c0_20], %23 {strides = array<i32>} : memref<1024x128xf32, #tpu.memory_space<vmem>>, vector<1024x128xf32>,
    return
  }
  func.func @transform_0(%arg0: i32) -> (i32, i32) {
    %c0_i32 = arith.constant 0 : i32
    %c0_i32_0 = arith.constant 0 : i32
    return %arg0, %c0_i32 : i32, i32
  }
  func.func @transform_1(%arg0: i32) -> (i32, i32) {
    %c0_i32 = arith.constant 0 : i32
    %c0_i32_0 = arith.constant 0 : i32
    %c0_i32_1 = arith.constant 0 : i32
    return %c0_i32, %c0_i32_0 : i32, i32
  }
  func.func @transform_2(%arg0: i32) -> (i32, i32) {
    %c0_i32 = arith.constant 0 : i32
    %c0_i32_0 = arith.constant 0 : i32
    %c0_i32_1 = arith.constant 0 : i32
    return %c0_i32, %c0_i32_0 : i32, i32
  }
  func.func @transform_3(%arg0: i32) -> (i32, i32) {
    %c0_i32 = arith.constant 0 : i32
    %c0_i32_0 = arith.constant 0 : i32
    %c0_i32_1 = arith.constant 0 : i32
    return %c0_i32, %c0_i32_0 : i32, i32
  }
  func.func @transform_4(%arg0: i32) -> (i32, i32) {
    %c0_i32 = arith.constant 0 : i32
    %c0_i32_0 = arith.constant 0 : i32
    %c0_i32_1 = arith.constant 0 : i32
    return %c0_i32, %c0_i32_0 : i32, i32
  }
  func.func @transform_5(%arg0: i32) -> (i32, i32) {
    %c0_i32 = arith.constant 0 : i32
    %c0_i32_0 = arith.constant 0 : i32
    %c0_i32_1 = arith.constant 0 : i32
    return %c0_i32, %c0_i32_0 : i32, i32
  }
  func.func @transform_6(%arg0: i32) -> (i32, i32) {
    %c0_i32 = arith.constant 0 : i32
    %c0_i32_0 = arith.constant 0 : i32
    %c0_i32_1 = arith.constant 0 : i32
    return %c0_i32, %c0_i32_0 : i32, i32
  }
  func.func @transform_7(%arg0: i32) -> (i32, i32) {
    %c0_i32 = arith.constant 0 : i32
    %c0_i32_0 = arith.constant 0 : i32
    return %arg0, %c0_i32 : i32, i32
  }
  func.func @transform_8(%arg0: i32) -> (i32, i32) {
    %c0_i32 = arith.constant 0 : i32
    %c0_i32_0 = arith.constant 0 : i32
    return %arg0, %c0_i32 : i32, i32
  }
}

</mosaic_0001>

<llo_original>
// kernel: custom-call
$region0: #{custom-call}
  %s0 = inlined_call_operand.vmem [shape: f32[2,64254], index: 0, kind: output, shape index: {}]

// kernel: condition_generator_forward.1
$region0: #{condition_generator_forward.1}
  #allocation0 [shape = 'u32[]', space=smem, size = 0x4, offset = 0x4, fixed_abs, tag = 'smem constant byte address 0x4 - core index']
  #allocation1 [shape = 'u32[144,128]{1,0:T(1,128)}', space=vmem, size = 0x12000, scoped, tag = 'internal scratch']
  %s0 = inlined_call_operand.vmem [shape: f32[2034,128], index: 0, kind: input, shape index: {}]
  %s1 = inlined_call_operand.vmem [shape: f32[128,256], index: 1, kind: input, shape index: {}]
  %s2 = inlined_call_operand.vmem [shape: f32[1,256], index: 2, kind: input, shape index: {}]
  %s3 = inlined_call_operand.vmem [shape: f32[128,128], index: 3, kind: input, shape index: {}]
  %s4 = inlined_call_operand.vmem [shape: f32[1,128], index: 4, kind: input, shape index: {}]
  %s5 = inlined_call_operand.vmem [shape: f32[128,128], index: 5, kind: input, shape index: {}]
  %s6 = inlined_call_operand.vmem [shape: f32[1,128], index: 6, kind: input, shape index: {}]
  %s7 = inlined_call_operand.vmem [shape: f32[2034,128], index: 7, kind: output, shape index: {0}]
  %s8 = inlined_call_operand.vmem [shape: f32[2034,128], index: 8, kind: output, shape index: {1}]
  %9 = xla_tuple %s7, %s8
  %s10 = sld [smem:[#allocation0]]
  $region165: #{condition_generator_forward.1} parent=0
    _
  %s12 = ssub.s32 1, %s10
  %s13 = scalar_select 0, %s12, %s10
  $region1: #{condition_generator_forward.1} parent=0
    #allocation2 [shape = 'u8[1048576]{0}', space=vmem, size = 0x100000, scoped, tag = 'output window, operand 0']
    #allocation3 [shape = 'u8[1048576]{0}', space=vmem, size = 0x100000, scoped, tag = 'output window, operand 1']
    loop: start=0, step=1, limit=4
    $region2: #{condition_generator_forward.1} parent=1 // loop_pre_header
      _
    $region3: #{condition_generator_forward.1} parent=1 // loop_header
      %s15 = sphi 0, %s19
      %p16 = scmp.ge.s32.totalorder %s15, 4
      %s25 = sphi 0, %s27
      %s28 = sphi 0, %s25
      %s29 = sphi 0, %s28
      %s45 = sphi 0, %s29
      %s49 = sphi 0, %s49
      %s51 = sphi 0, %s49
      %s52 = sphi 0, %s51
      %s66 = sphi 0, %s52
      %s70 = sphi 0, %s70
      %s72 = sphi 0, %s70
      %s73 = sphi 0, %s72
      %s87 = sphi 0, %s73
      %s91 = sphi 0, %s91
      %s93 = sphi 0, %s91
      %s94 = sphi 0, %s93
      %s108 = sphi 0, %s94
      %s112 = sphi 0, %s112
      %s114 = sphi 0, %s112
      %s115 = sphi 0, %s114
      %s129 = sphi 0, %s115
      %s133 = sphi 0, %s133
      %s135 = sphi 0, %s133
      %s136 = sphi 0, %s135
      %s150 = sphi 0, %s136
      %s154 = sphi 0, %s154
      %s156 = sphi 0, %s154
      %s157 = sphi 0, %s156
      %s171 = sphi 0, %s157
      %s177 = sphi 0, %s179
      %s180 = sphi 0, %s177
      %s181 = sphi 0, %s180
      %s197 = sphi 0, %s181
      %s203 = sphi 0, %s205
      %s206 = sphi 0, %s203
      %s207 = sphi 0, %s206
      %s223 = sphi 0, %s207
    $region4: #{condition_generator_forward.1} parent=1 // loop_header_branch
      %18 = sbr.rel (%p16) target = $region8
    $region5: #{condition_generator_forward.1} parent=1 // loop_body
      %s20 = ssub.s32 %s15, 1
      %s21 = ssub.s32 %s15, 2
      %s22 = sadd.s32 %s15, 1
      %s23 = ssub.s32 %s15, %s22
      %p24 = scmp.eq.s32.totalorder %s23, 0
      %s26 = sadd.s32 %s25, 1
      %s27 = scalar_select %p24, %s25, %s26
      %p30 = pneg %p24
      %p31 = scmp.eq.s32.totalorder %s15, 1
      %p32 = por %p30, %p31
      %p33 = scmp.ne.s32.totalorder %s25, %s28
      %p34 = scmp.eq.s32.totalorder %s15, 0
      %p35 = por %p33, %p34
      %p36 = scmp.ne.s32.totalorder %s25, %s28
      %p37 = scmp.eq.s32.totalorder %s20, 1
      %p38 = por %p36, %p37
      %p39 = scmp.ne.s32.totalorder %s28, %s29
      %p40 = scmp.eq.s32.totalorder %s20, 0
      %p41 = por %p39, %p40
      %p42 = scmp.ne.s32.totalorder %s28, %s29
      %p43 = scmp.eq.s32.totalorder %s21, 1
      %p44 = por %p42, %p43
      %p46 = scmp.ne.s32.totalorder %s29, %s45
      %p47 = scmp.eq.s32.totalorder %s21, 0
      %p48 = por %p46, %p47
      %s50 = sadd.s32 %s49, 1
      %p53 = scmp.eq.s32.totalorder %s15, 1
      %p54 = scmp.ne.s32.totalorder %s49, %s51
      %p55 = scmp.eq.s32.totalorder %s15, 0
      %p56 = por %p54, %p55
      %p57 = scmp.ne.s32.totalorder %s49, %s51
      %p58 = scmp.eq.s32.totalorder %s20, 1
      %p59 = por %p57, %p58
      %p60 = scmp.ne.s32.totalorder %s51, %s52
      %p61 = scmp.eq.s32.totalorder %s20, 0
      %p62 = por %p60, %p61
      %p63 = scmp.ne.s32.totalorder %s51, %s52
      %p64 = scmp.eq.s32.totalorder %s21, 1
      %p65 = por %p63, %p64
      %p67 = scmp.ne.s32.totalorder %s52, %s66
      %p68 = scmp.eq.s32.totalorder %s21, 0
      %p69 = por %p67, %p68
      %s71 = sadd.s32 %s70, 1
      %p74 = scmp.eq.s32.totalorder %s15, 1
      %p75 = scmp.ne.s32.totalorder %s70, %s72
      %p76 = scmp.eq.s32.totalorder %s15, 0
      %p77 = por %p75, %p76
      %p78 = scmp.ne.s32.totalorder %s70, %s72
      %p79 = scmp.eq.s32.totalorder %s20, 1
      %p80 = por %p78, %p79
      %p81 = scmp.ne.s32.totalorder %s72, %s73
      %p82 = scmp.eq.s32.totalorder %s20, 0
      %p83 = por %p81, %p82
      %p84 = scmp.ne.s32.totalorder %s72, %s73
      %p85 = scmp.eq.s32.totalorder %s21, 1
      %p86 = por %p84, %p85
      %p88 = scmp.ne.s32.totalorder %s73, %s87
      %p89 = scmp.eq.s32.totalorder %s21, 0
      %p90 = por %p88, %p89
      %s92 = sadd.s32 %s91, 1
      %p95 = scmp.eq.s32.totalorder %s15, 1
      %p96 = scmp.ne.s32.totalorder %s91, %s93
      %p97 = scmp.eq.s32.totalorder %s15, 0
      %p98 = por %p96, %p97
      %p99 = scmp.ne.s32.totalorder %s91, %s93
      %p100 = scmp.eq.s32.totalorder %s20, 1
      %p101 = por %p99, %p100
      %p102 = scmp.ne.s32.totalorder %s93, %s94
      %p103 = scmp.eq.s32.totalorder %s20, 0
      %p104 = por %p102, %p103
      %p105 = scmp.ne.s32.totalorder %s93, %s94
      %p106 = scmp.eq.s32.totalorder %s21, 1
      %p107 = por %p105, %p106
      %p109 = scmp.ne.s32.totalorder %s94, %s108
      %p110 = scmp.eq.s32.totalorder %s21, 0
      %p111 = por %p109, %p110
      %s113 = sadd.s32 %s112, 1
      %p116 = scmp.eq.s32.totalorder %s15, 1
      %p117 = scmp.ne.s32.totalorder %s112, %s114
      %p118 = scmp.eq.s32.totalorder %s15, 0
      %p119 = por %p117, %p118
      %p120 = scmp.ne.s32.totalorder %s112, %s114
      %p121 = scmp.eq.s32.totalorder %s20, 1
      %p122 = por %p120, %p121
      %p123 = scmp.ne.s32.totalorder %s114, %s115
      %p124 = scmp.eq.s32.totalorder %s20, 0
      %p125 = por %p123, %p124
      %p126 = scmp.ne.s32.totalorder %s114, %s115
      %p127 = scmp.eq.s32.totalorder %s21, 1
      %p128 = por %p126, %p127
      %p130 = scmp.ne.s32.totalorder %s115, %s129
      %p131 = scmp.eq.s32.totalorder %s21, 0
      %p132 = por %p130, %p131
      %s134 = sadd.s32 %s133, 1
      %p137 = scmp.eq.s32.totalorder %s15, 1
      %p138 = scmp.ne.s32.totalorder %s133, %s135
      %p139 = scmp.eq.s32.totalorder %s15, 0
      %p140 = por %p138, %p139
      %p141 = scmp.ne.s32.totalorder %s133, %s135
      %p142 = scmp.eq.s32.totalorder %s20, 1
      %p143 = por %p141, %p142
      %p144 = scmp.ne.s32.totalorder %s135, %s136
      %p145 = scmp.eq.s32.totalorder %s20, 0
      %p146 = por %p144, %p145
      %p147 = scmp.ne.s32.totalorder %s135, %s136
      %p148 = scmp.eq.s32.totalorder %s21, 1
      %p149 = por %p147, %p148
      %p151 = scmp.ne.s32.totalorder %s136, %s150
      %p152 = scmp.eq.s32.totalorder %s21, 0
      %p153 = por %p151, %p152
      %s155 = sadd.s32 %s154, 1
      %p158 = scmp.eq.s32.totalorder %s15, 1
      %p159 = scmp.ne.s32.totalorder %s154, %s156
      %p160 = scmp.eq.s32.totalorder %s15, 0
      %p161 = por %p159, %p160
      %p162 = scmp.ne.s32.totalorder %s154, %s156
      %p163 = scmp.eq.s32.totalorder %s20, 1
      %p164 = por %p162, %p163
      %p165 = scmp.ne.s32.totalorder %s156, %s157
      %p166 = scmp.eq.s32.totalorder %s20, 0
      %p167 = por %p165, %p166
      %p168 = scmp.ne.s32.totalorder %s156, %s157
      %p169 = scmp.eq.s32.totalorder %s21, 1
      %p170 = por %p168, %p169
      %p172 = scmp.ne.s32.totalorder %s157, %s171
      %p173 = scmp.eq.s32.totalorder %s21, 0
      %p174 = por %p172, %p173
      %s175 = ssub.s32 %s15, %s22
      %p176 = scmp.eq.s32.totalorder %s175, 0
      %s178 = sadd.s32 %s177, 1
      %s179 = scalar_select %p176, %s177, %s178
      %p182 = pneg %p176
      %p183 = scmp.eq.s32.totalorder %s15, 1
      %p184 = por %p182, %p183
      %p185 = scmp.ne.s32.totalorder %s177, %s180
      %p186 = scmp.eq.s32.totalorder %s15, 0
      %p187 = por %p185, %p186
      %p188 = scmp.ne.s32.totalorder %s177, %s180
      %p189 = scmp.eq.s32.totalorder %s20, 1
      %p190 = por %p188, %p189
      %p191 = scmp.ne.s32.totalorder %s180, %s181
      %p192 = scmp.eq.s32.totalorder %s20, 0
      %p193 = por %p191, %p192
      %p194 = scmp.ne.s32.totalorder %s180, %s181
      %p195 = scmp.eq.s32.totalorder %s21, 1
      %p196 = por %p194, %p195
      %p198 = scmp.ne.s32.totalorder %s181, %s197
      %p199 = scmp.eq.s32.totalorder %s21, 0
      %p200 = por %p198, %p199
      %s201 = ssub.s32 %s15, %s22
      %p202 = scmp.eq.s32.totalorder %s201, 0
      %s204 = sadd.s32 %s203, 1
      %s205 = scalar_select %p202, %s203, %s204
      %p208 = pneg %p202
      %p209 = scmp.eq.s32.totalorder %s15, 1
      %p210 = por %p208, %p209
      %p211 = scmp.ne.s32.totalorder %s203, %s206
      %p212 = scmp.eq.s32.totalorder %s15, 0
      %p213 = por %p211, %p212
      %p214 = scmp.ne.s32.totalorder %s203, %s206
      %p215 = scmp.eq.s32.totalorder %s20, 1
      %p216 = por %p214, %p215
      %p217 = scmp.ne.s32.totalorder %s206, %s207
      %p218 = scmp.eq.s32.totalorder %s20, 0
      %p219 = por %p217, %p218
      %p220 = scmp.ne.s32.totalorder %s206, %s207
      %p221 = scmp.eq.s32.totalorder %s21, 1
      %p222 = por %p220, %p221
      %p224 = scmp.ne.s32.totalorder %s207, %s223
      %p225 = scmp.eq.s32.totalorder %s21, 0
      %p226 = por %p224, %p225
      %p227 = scmp.le.s32.totalorder 1, %s15
      %p228 = scmp.lt.s32.totalorder %s15, 3
      %p229 = pnand %p227, %p228
      %p230 = pneg %p229
      // Predicated region
      $region9: #{condition_generator_forward.1} parent=5 // pred_check
        _
      $region10: #{condition_generator_forward.1} parent=5 // pred_check_branch
        %232 = sbr.rel (%p229) target = $region12
      $region11: #{condition_generator_forward.1} parent=5 // pred_region
        %s233 = ssub.s32 %s15, 1
        // Predicated region
        $region13: #{condition_generator_forward.1} parent=11 // pred_check
          %p234 = pneg %p62
        $region14: #{condition_generator_forward.1} parent=11 // pred_check_branch
          %236 = sbr.rel (%p234) target = $region16
        $region15: #{condition_generator_forward.1} parent=11 // pred_region
          _
        $region16: #{condition_generator_forward.1} parent=11 // pred_fallthru
          _
        // Predicated region
        $region17: #{condition_generator_forward.1} parent=11 // pred_check
          %p237 = pneg %p83
        $region18: #{condition_generator_forward.1} parent=11 // pred_check_branch
          %239 = sbr.rel (%p237) target = $region20
        $region19: #{condition_generator_forward.1} parent=11 // pred_region
          _
        $region20: #{condition_generator_forward.1} parent=11 // pred_fallthru
          _
        // Predicated region
        $region21: #{condition_generator_forward.1} parent=11 // pred_check
          %p240 = pneg %p104
        $region22: #{condition_generator_forward.1} parent=11 // pred_check_branch
          %242 = sbr.rel (%p240) target = $region24
        $region23: #{condition_generator_forward.1} parent=11 // pred_region
          _
        $region24: #{condition_generator_forward.1} parent=11 // pred_fallthru
          _
        // Predicated region
        $region25: #{condition_generator_forward.1} parent=11 // pred_check
          %p243 = pneg %p125
        $region26: #{condition_generator_forward.1} parent=11 // pred_check_branch
          %245 = sbr.rel (%p243) target = $region28
        $region27: #{condition_generator_forward.1} parent=11 // pred_region
          _
        $region28: #{condition_generator_forward.1} parent=11 // pred_fallthru
          _
        // Predicated region
        $region29: #{condition_generator_forward.1} parent=11 // pred_check
          %p246 = pneg %p146
        $region30: #{condition_generator_forward.1} parent=11 // pred_check_branch
          %248 = sbr.rel (%p246) target = $region32
        $region31: #{condition_generator_forward.1} parent=11 // pred_region
          _
        $region32: #{condition_generator_forward.1} parent=11 // pred_fallthru
          _
        // Predicated region
        $region33: #{condition_generator_forward.1} parent=11 // pred_check
          %p249 = pneg %p167
        $region34: #{condition_generator_forward.1} parent=11 // pred_check_branch
          %251 = sbr.rel (%p249) target = $region36
        $region35: #{condition_generator_forward.1} parent=11 // pred_region
          _
        $region36: #{condition_generator_forward.1} parent=11 // pred_fallthru
          _
      $region12: #{condition_generator_forward.1} parent=5 // pred_fallthru
        _
      %p252 = scmp.lt.s32.totalorder %s15, 2
      // Predicated region
      $region37: #{condition_generator_forward.1} parent=5 // pred_check
        %p253 = pneg %p252
      $region38: #{condition_generator_forward.1} parent=5 // pred_check_branch
        %255 = sbr.rel (%p253) target = $region40
      $region39: #{condition_generator_forward.1} parent=5 // pred_region
        // Predicated region
        $region41: #{condition_generator_forward.1} parent=39 // pred_check
          %p256 = pneg %p35
        $region42: #{condition_generator_forward.1} parent=39 // pred_check_branch
          %258 = sbr.rel (%p256) target = $region44
        $region43: #{condition_generator_forward.1} parent=39 // pred_region
          %s259 = smul.u32 128, %s15
          %s260 = ssub.s32 255, %s259
          %p261 = scmp.lt.s32.totalorder %s260, 128
          %s262 = scalar_select %p261, %s260, 128
          %s263 = smul.u32 128, %s262
          %p264 = scmp.lt.s32.totalorder %s259, 254
          %s265 = scalar_select %p264, %s259, 254
          %s266 = smul.addr %s265, 8
          %s267 = scalar_lea.vmem %s0, %s266
          %s268 = smul.u32 128, %s15
          %s269 = ssub.s32 255, %s268
          %p270 = scmp.lt.s32.totalorder %s269, 128
          %s271 = scalar_select %p270, %s269, 128
          %s272 = smul.u32 128, %s271
        $region44: #{condition_generator_forward.1} parent=39 // pred_fallthru
          _
      $region40: #{condition_generator_forward.1} parent=5 // pred_fallthru
        _
      %p273 = scmp.le.s32.totalorder 1, %s15
      %p274 = scmp.lt.s32.totalorder %s15, 3
      %p275 = pnand %p273, %p274
      %p276 = pneg %p275
      // Predicated region
      $region45: #{condition_generator_forward.1} parent=5 // pred_check
        _
      $region46: #{condition_generator_forward.1} parent=5 // pred_check_branch
        %278 = sbr.rel (%p275) target = $region48
      $region47: #{condition_generator_forward.1} parent=5 // pred_region
        %s279 = ssub.s32 %s15, 1
        %s280 = smul.u32 128, %s20
        %s281 = ssub.s32 255, %s280
        %p282 = scmp.lt.s32.totalorder %s281, 128
        %s283 = scalar_select %p282, %s281, 128
        %s284 = smul.u32 128, %s283
        %p285 = scmp.lt.s32.totalorder %s280, 254
        %s286 = scalar_select %p285, %s280, 254
        %s287 = smul.addr %s286, 8
        %s288 = scalar_lea.vmem %s0, %s287
        %p289 = pneg %p41
        %p290 = pneg %p38
        %p291 = pneg %p62
        %p292 = pneg %p59
        %p293 = pneg %p83
        %p294 = pneg %p80
        %p295 = pneg %p104
        %p296 = pneg %p101
        %p297 = pneg %p125
        %p298 = pneg %p122
        %p299 = pneg %p146
        %p300 = pneg %p143
        %p301 = pneg %p167
        %p302 = pneg %p164
        %p303 = pneg %p193
        %p304 = pneg %p190
        %s305 = sand.u32 %s180, 1
        %s306 = sand.u32 %s180, 1
        %s307 = smul.addr %s306, 1024
        %s308 = scalar_lea.vmem [#allocation2], %s307
        %p309 = pneg %p219
        %p310 = pneg %p216
        %s311 = sand.u32 %s206, 1
        %s312 = sand.u32 %s206, 1
        %s313 = smul.addr %s312, 1024
        %s314 = scalar_lea.vmem [#allocation3], %s313
        %s315 = smul.u32 128, %s20
        %s316 = ssub.s32 255, %s315
        %p317 = scmp.lt.s32.totalorder %s316, 128
        %s318 = scalar_select %p317, %s316, 128
        %s319 = smul.u32 128, %s318
        %p320 = scmp.lt.s32.totalorder %s315, 254
        %s321 = scalar_select %p320, %s315, 254
        %s322 = smul.addr %s321, 8
        %s323 = scalar_lea.vmem %s0, %s322
        %s324 = smul.u32 128, %s20
        %s325 = ssub.s32 255, %s324
        %p326 = scmp.lt.s32.totalorder %s325, 128
        %s327 = scalar_select %p326, %s325, 128
        %s328 = smul.u32 128, %s327
        %s329 = smul.u32 128, %s20
        %s330 = ssub.s32 255, %s329
        %p331 = scmp.lt.s32.totalorder %s330, 128
        %s332 = scalar_select %p331, %s330, 128
        %s333 = smul.u32 128, %s332
        %s334 = smul.u32 128, %s20
        %s335 = ssub.s32 255, %s334
        %p336 = scmp.lt.s32.totalorder %s335, 128
        %s337 = scalar_select %p336, %s335, 128
        %s338 = smul.u32 128, %s337
        %v339 = vld [vmem:[%s323] sm:$0xff]
        %v340 = vld [vmem:[%s323 + $0x8] sm:$0xff]
        %v341 = vld [vmem:[%s323 + $0x10] sm:$0xff]
        %v342 = vld [vmem:[%s323 + $0x18] sm:$0xff]
        %v343 = vld [vmem:[%s323 + $0x20] sm:$0xff]
        %v344 = vld [vmem:[%s323 + $0x28] sm:$0xff]
        %v345 = vld [vmem:[%s323 + $0x30] sm:$0xff]
        %v346 = vld [vmem:[%s323 + $0x38] sm:$0xff]
        %v347 = vld [vmem:[%s323 + $0x40] sm:$0xff]
        %v348 = vld [vmem:[%s323 + $0x48] sm:$0xff]
        %v349 = vld [vmem:[%s323 + $0x50] sm:$0xff]
        %v350 = vld [vmem:[%s323 + $0x58] sm:$0xff]
        %v351 = vld [vmem:[%s323 + $0x60] sm:$0xff]
        %v352 = vld [vmem:[%s323 + $0x68] sm:$0xff]
        %v353 = vld [vmem:[%s323 + $0x70] sm:$0xff]
        %v354 = vld [vmem:[%s323 + $0x78] sm:$0xff]
        %v355 = vld [vmem:[%s323 + $0x80] sm:$0xff]
        %v356 = vld [vmem:[%s323 + $0x88] sm:$0xff]
        %v357 = vld [vmem:[%s323 + $0x90] sm:$0xff]
        %v358 = vld [vmem:[%s323 + $0x98] sm:$0xff]
        %v359 = vld [vmem:[%s323 + $0xa0] sm:$0xff]
        %v360 = vld [vmem:[%s323 + $0xa8] sm:$0xff]
        %v361 = vld [vmem:[%s323 + $0xb0] sm:$0xff]
        %v362 = vld [vmem:[%s323 + $0xb8] sm:$0xff]
        %v363 = vld [vmem:[%s323 + $0xc0] sm:$0xff]
        %v364 = vld [vmem:[%s323 + $0xc8] sm:$0xff]
        %v365 = vld [vmem:[%s323 + $0xd0] sm:$0xff]
        %v366 = vld [vmem:[%s323 + $0xd8] sm:$0xff]
        %v367 = vld [vmem:[%s323 + $0xe0] sm:$0xff]
        %v368 = vld [vmem:[%s323 + $0xe8] sm:$0xff]
        %v369 = vld [vmem:[%s323 + $0xf0] sm:$0xff]
        %v370 = vld [vmem:[%s323 + $0xf8] sm:$0xff]
        %v371 = vld [vmem:[%s323 + $0x100] sm:$0xff]
        %v372 = vld [vmem:[%s323 + $0x108] sm:$0xff]
        %v373 = vld [vmem:[%s323 + $0x110] sm:$0xff]
        %v374 = vld [vmem:[%s323 + $0x118] sm:$0xff]
        %v375 = vld [vmem:[%s323 + $0x120] sm:$0xff]
        %v376 = vld [vmem:[%s323 + $0x128] sm:$0xff]
        %v377 = vld [vmem:[%s323 + $0x130] sm:$0xff]
        %v378 = vld [vmem:[%s323 + $0x138] sm:$0xff]
        %v379 = vld [vmem:[%s323 + $0x140] sm:$0xff]
        %v380 = vld [vmem:[%s323 + $0x148] sm:$0xff]
        %v381 = vld [vmem:[%s323 + $0x150] sm:$0xff]
        %v382 = vld [vmem:[%s323 + $0x158] sm:$0xff]
        %v383 = vld [vmem:[%s323 + $0x160] sm:$0xff]
        %v384 = vld [vmem:[%s323 + $0x168] sm:$0xff]
        %v385 = vld [vmem:[%s323 + $0x170] sm:$0xff]
        %v386 = vld [vmem:[%s323 + $0x178] sm:$0xff]
        %v387 = vld [vmem:[%s323 + $0x180] sm:$0xff]
        %v388 = vld [vmem:[%s323 + $0x188] sm:$0xff]
        %v389 = vld [vmem:[%s323 + $0x190] sm:$0xff]
        %v390 = vld [vmem:[%s323 + $0x198] sm:$0xff]
        %v391 = vld [vmem:[%s323 + $0x1a0] sm:$0xff]
        %v392 = vld [vmem:[%s323 + $0x1a8] sm:$0xff]
        %v393 = vld [vmem:[%s323 + $0x1b0] sm:$0xff]
        %v394 = vld [vmem:[%s323 + $0x1b8] sm:$0xff]
        %v395 = vld [vmem:[%s323 + $0x1c0] sm:$0xff]
        %v396 = vld [vmem:[%s323 + $0x1c8] sm:$0xff]
        %v397 = vld [vmem:[%s323 + $0x1d0] sm:$0xff]
        %v398 = vld [vmem:[%s323 + $0x1d8] sm:$0xff]
        %v399 = vld [vmem:[%s323 + $0x1e0] sm:$0xff]
        %v400 = vld [vmem:[%s323 + $0x1e8] sm:$0xff]
        %v401 = vld [vmem:[%s323 + $0x1f0] sm:$0xff]
        %v402 = vld [vmem:[%s323 + $0x1f8] sm:$0xff]
        %v403 = vld [vmem:[%s323 + $0x200] sm:$0xff]
        %v404 = vld [vmem:[%s323 + $0x208] sm:$0xff]
        %v405 = vld [vmem:[%s323 + $0x210] sm:$0xff]
        %v406 = vld [vmem:[%s323 + $0x218] sm:$0xff]
        %v407 = vld [vmem:[%s323 + $0x220] sm:$0xff]
        %v408 = vld [vmem:[%s323 + $0x228] sm:$0xff]
        %v409 = vld [vmem:[%s323 + $0x230] sm:$0xff]
        %v410 = vld [vmem:[%s323 + $0x238] sm:$0xff]
        %v411 = vld [vmem:[%s323 + $0x240] sm:$0xff]
        %v412 = vld [vmem:[%s323 + $0x248] sm:$0xff]
        %v413 = vld [vmem:[%s323 + $0x250] sm:$0xff]
        %v414 = vld [vmem:[%s323 + $0x258] sm:$0xff]
        %v415 = vld [vmem:[%s323 + $0x260] sm:$0xff]
        %v416 = vld [vmem:[%s323 + $0x268] sm:$0xff]
        %v417 = vld [vmem:[%s323 + $0x270] sm:$0xff]
        %v418 = vld [vmem:[%s323 + $0x278] sm:$0xff]
        %v419 = vld [vmem:[%s323 + $0x280] sm:$0xff]
        %v420 = vld [vmem:[%s323 + $0x288] sm:$0xff]
        %v421 = vld [vmem:[%s323 + $0x290] sm:$0xff]
        %v422 = vld [vmem:[%s323 + $0x298] sm:$0xff]
        %v423 = vld [vmem:[%s323 + $0x2a0] sm:$0xff]
        %v424 = vld [vmem:[%s323 + $0x2a8] sm:$0xff]
        %v425 = vld [vmem:[%s323 + $0x2b0] sm:$0xff]
        %v426 = vld [vmem:[%s323 + $0x2b8] sm:$0xff]
        %v427 = vld [vmem:[%s323 + $0x2c0] sm:$0xff]
        %v428 = vld [vmem:[%s323 + $0x2c8] sm:$0xff]
        %v429 = vld [vmem:[%s323 + $0x2d0] sm:$0xff]
        %v430 = vld [vmem:[%s323 + $0x2d8] sm:$0xff]
        %v431 = vld [vmem:[%s323 + $0x2e0] sm:$0xff]
        %v432 = vld [vmem:[%s323 + $0x2e8] sm:$0xff]
        %v433 = vld [vmem:[%s323 + $0x2f0] sm:$0xff]
        %v434 = vld [vmem:[%s323 + $0x2f8] sm:$0xff]
        %v435 = vld [vmem:[%s323 + $0x300] sm:$0xff]
        %v436 = vld [vmem:[%s323 + $0x308] sm:$0xff]
        %v437 = vld [vmem:[%s323 + $0x310] sm:$0xff]
        %v438 = vld [vmem:[%s323 + $0x318] sm:$0xff]
        %v439 = vld [vmem:[%s323 + $0x320] sm:$0xff]
        %v440 = vld [vmem:[%s323 + $0x328] sm:$0xff]
        %v441 = vld [vmem:[%s323 + $0x330] sm:$0xff]
        %v442 = vld [vmem:[%s323 + $0x338] sm:$0xff]
        %v443 = vld [vmem:[%s323 + $0x340] sm:$0xff]
        %v444 = vld [vmem:[%s323 + $0x348] sm:$0xff]
        %v445 = vld [vmem:[%s323 + $0x350] sm:$0xff]
        %v446 = vld [vmem:[%s323 + $0x358] sm:$0xff]
        %v447 = vld [vmem:[%s323 + $0x360] sm:$0xff]
        %v448 = vld [vmem:[%s323 + $0x368] sm:$0xff]
        %v449 = vld [vmem:[%s323 + $0x370] sm:$0xff]
        %v450 = vld [vmem:[%s323 + $0x378] sm:$0xff]
        %v451 = vld [vmem:[%s323 + $0x380] sm:$0xff]
        %v452 = vld [vmem:[%s323 + $0x388] sm:$0xff]
        %v453 = vld [vmem:[%s323 + $0x390] sm:$0xff]
        %v454 = vld [vmem:[%s323 + $0x398] sm:$0xff]
        %v455 = vld [vmem:[%s323 + $0x3a0] sm:$0xff]
        %v456 = vld [vmem:[%s323 + $0x3a8] sm:$0xff]
        %v457 = vld [vmem:[%s323 + $0x3b0] sm:$0xff]
        %v458 = vld [vmem:[%s323 + $0x3b8] sm:$0xff]
        %v459 = vld [vmem:[%s323 + $0x3c0] sm:$0xff]
        %v460 = vld [vmem:[%s323 + $0x3c8] sm:$0xff]
        %v461 = vld [vmem:[%s323 + $0x3d0] sm:$0xff]
        %v462 = vld [vmem:[%s323 + $0x3d8] sm:$0xff]
        %v463 = vld [vmem:[%s323 + $0x3e0] sm:$0xff]
        %v464 = vld [vmem:[%s323 + $0x3e8] sm:$0xff]
        %v465 = vld [vmem:[%s323 + $0x3f0] sm:$0xff]
        %v466 = vld [vmem:[%s323 + $0x3f8] sm:$0xff]
        %v467 = vld [vmem:[%s1] sm:$0xff]
        %v468 = vld [vmem:[%s1 + $0x8] sm:$0xff]
        %v469 = vld [vmem:[%s1 + $0x10] sm:$0xff]
        %v470 = vld [vmem:[%s1 + $0x18] sm:$0xff]
        %v471 = vld [vmem:[%s1 + $0x20] sm:$0xff]
        %v472 = vld [vmem:[%s1 + $0x28] sm:$0xff]
        %v473 = vld [vmem:[%s1 + $0x30] sm:$0xff]
        %v474 = vld [vmem:[%s1 + $0x38] sm:$0xff]
        %v475 = vld [vmem:[%s1 + $0x40] sm:$0xff]
        %v476 = vld [vmem:[%s1 + $0x48] sm:$0xff]
        %v477 = vld [vmem:[%s1 + $0x50] sm:$0xff]
        %v478 = vld [vmem:[%s1 + $0x58] sm:$0xff]
        %v479 = vld [vmem:[%s1 + $0x60] sm:$0xff]
        %v480 = vld [vmem:[%s1 + $0x68] sm:$0xff]
        %v481 = vld [vmem:[%s1 + $0x70] sm:$0xff]
        %v482 = vld [vmem:[%s1 + $0x78] sm:$0xff]
        %v483 = vld [vmem:[%s1 + $0x80] sm:$0xff]
        %v484 = vld [vmem:[%s1 + $0x88] sm:$0xff]
        %v485 = vld [vmem:[%s1 + $0x90] sm:$0xff]
        %v486 = vld [vmem:[%s1 + $0x98] sm:$0xff]
        %v487 = vld [vmem:[%s1 + $0xa0] sm:$0xff]
        %v488 = vld [vmem:[%s1 + $0xa8] sm:$0xff]
        %v489 = vld [vmem:[%s1 + $0xb0] sm:$0xff]
        %v490 = vld [vmem:[%s1 + $0xb8] sm:$0xff]
        %v491 = vld [vmem:[%s1 + $0xc0] sm:$0xff]
        %v492 = vld [vmem:[%s1 + $0xc8] sm:$0xff]
        %v493 = vld [vmem:[%s1 + $0xd0] sm:$0xff]
        %v494 = vld [vmem:[%s1 + $0xd8] sm:$0xff]
        %v495 = vld [vmem:[%s1 + $0xe0] sm:$0xff]
        %v496 = vld [vmem:[%s1 + $0xe8] sm:$0xff]
        %v497 = vld [vmem:[%s1 + $0xf0] sm:$0xff]
        %v498 = vld [vmem:[%s1 + $0xf8] sm:$0xff]
        %v499 = vld [vmem:[%s2] sm:$0x3]
        %v501 = vlaneseq
        %v502 = vshrl.u32 %v501, 7
        %v503 = vsub.s32 0, %v502
        %v504 = vrot.slane %v499, %v503
        %v505 = vlaneseq
        %v506 = vshrl.u32 %v505, 7
        %v507 = vsub.s32 1, %v506
        %v508 = vrot.slane %v499, %v507
        %511 = vmatprep.subr.mxu0 %v468
        %512 = vmatpush1.msra.mxu0 %v467
        %513 = vmatprep.subr.mxu0 %v470
        %514 = vmatpush1.msra.mxu0 %v469
        %515 = vmatprep.subr.mxu0 %v472
        %516 = vmatpush1.msra.mxu0 %v471
        %517 = vmatprep.subr.mxu0 %v474
        %518 = vmatpush1.msra.mxu0 %v473
        %519 = vmatprep.subr.mxu0 %v476
        %520 = vmatpush1.msra.mxu0 %v475
        %521 = vmatprep.subr.mxu0 %v478
        %522 = vmatpush1.msra.mxu0 %v477
        %523 = vmatprep.subr.mxu0 %v480
        %524 = vmatpush1.msra.mxu0 %v479
        %525 = vmatprep.subr.mxu0 %v482
        %526 = vmatpush1.msra.mxu0 %v481
        %527 = vmatprep.subr.mxu0 %v484
        %528 = vmatpush1.msra.mxu0 %v483
        %529 = vmatprep.subr.mxu0 %v486
        %530 = vmatpush1.msra.mxu0 %v485
        %531 = vmatprep.subr.mxu0 %v488
        %532 = vmatpush1.msra.mxu0 %v487
        %533 = vmatprep.subr.mxu0 %v490
        %534 = vmatpush1.msra.mxu0 %v489
        %535 = vmatprep.subr.mxu0 %v492
        %536 = vmatpush1.msra.mxu0 %v491
        %537 = vmatprep.subr.mxu0 %v494
        %538 = vmatpush1.msra.mxu0 %v493
        %539 = vmatprep.subr.mxu0 %v496
        %540 = vmatpush1.msra.mxu0 %v495
        %541 = vmatprep.subr.mxu0 %v498
        %542 = vmatpush1.msra.mxu0 %v497
        %543 = vmatprep.subr.mxu0 0.0
        %544 = vmatpush1.msra.mxu0 0.0
        %545 = vmatprep.subr.mxu0 0.0
        %546 = vmatpush1.msra.mxu0 0.0
        %547 = vmatprep.subr.mxu0 0.0
        %548 = vmatpush1.msra.mxu0 0.0
        %549 = vmatprep.subr.mxu0 0.0
        %550 = vmatpush1.msra.mxu0 0.0
        %551 = vmatprep.subr.mxu0 0.0
        %552 = vmatpush1.msra.mxu0 0.0
        %553 = vmatprep.subr.mxu0 0.0
        %554 = vmatpush1.msra.mxu0 0.0
        %555 = vmatprep.subr.mxu0 0.0
        %556 = vmatpush1.msra.mxu0 0.0
        %557 = vmatprep.subr.mxu0 0.0
        %558 = vmatpush1.msra.mxu0 0.0
        %559 = vmatprep.subr.mxu0 0.0
        %560 = vmatpush1.msra.mxu0 0.0
        %561 = vmatprep.subr.mxu0 0.0
        %562 = vmatpush1.msra.mxu0 0.0
        %563 = vmatprep.subr.mxu0 0.0
        %564 = vmatpush1.msra.mxu0 0.0
        %565 = vmatprep.subr.mxu0 0.0
        %566 = vmatpush1.msra.mxu0 0.0
        %567 = vmatprep.subr.mxu0 0.0
        %568 = vmatpush1.msra.mxu0 0.0
        %569 = vmatprep.subr.mxu0 0.0
        %570 = vmatpush1.msra.mxu0 0.0
        %571 = vmatprep.subr.mxu0 0.0
        %572 = vmatpush1.msra.mxu0 0.0
        %573 = vmatprep.subr.mxu0 0.0
        %574 = vmatpush1.msra.mxu0 0.0
        %575 = vmatprep.mubr.f32.mxu0 0.0
        %576 = vmatmul.mubr.f32.gmra.mrb[0].mxu0 %v339
        %v577 = vpop.f32.mrb[0].mxu0
        %v578 = vadd.f32 %v504, %v577
        %v579 = vpop.f32.mrb[0].mxu0
        %v580 = vadd.f32 %v508, %v579
        %581 = vmatprep.mubr.f32.mxu0 0.0
        %582 = vmatmul.mubr.f32.gmra.mrb[0].mxu0 %v340
        %v583 = vpop.f32.mrb[0].mxu0
        %v584 = vadd.f32 %v504, %v583
        %v585 = vpop.f32.mrb[0].mxu0
        %v586 = vadd.f32 %v508, %v585
        %587 = vmatprep.mubr.f32.mxu0 0.0
        %588 = vmatmul.mubr.f32.gmra.mrb[0].mxu0 %v341
        %v589 = vpop.f32.mrb[0].mxu0
        %v590 = vadd.f32 %v504, %v589
        %v591 = vpop.f32.mrb[0].mxu0
        %v592 = vadd.f32 %v508, %v591
        %593 = vmatprep.mubr.f32.mxu0 0.0
        %594 = vmatmul.mubr.f32.gmra.mrb[0].mxu0 %v342
        %v595 = vpop.f32.mrb[0].mxu0
        %v596 = vadd.f32 %v504, %v595
        %v597 = vpop.f32.mrb[0].mxu0
        %v598 = vadd.f32 %v508, %v597
        %599 = vmatprep.mubr.f32.mxu0 0.0
        %600 = vmatmul.mubr.f32.gmra.mrb[0].mxu0 %v343
        %v601 = vpop.f32.mrb[0].mxu0
        %v602 = vadd.f32 %v504, %v601
        %v603 = vpop.f32.mrb[0].mxu0
        %v604 = vadd.f32 %v508, %v603
        %605 = vmatprep.mubr.f32.mxu0 0.0
        %606 = vmatmul.mubr.f32.gmra.mrb[0].mxu0 %v344
        %v607 = vpop.f32.mrb[0].mxu0
        %v608 = vadd.f32 %v504, %v607
        %v609 = vpop.f32.mrb[0].mxu0
        %v610 = vadd.f32 %v508, %v609
        %611 = vmatprep.mubr.f32.mxu0 0.0
        %612 = vmatmul.mubr.f32.gmra.mrb[0].mxu0 %v345
        %v613 = vpop.f32.mrb[0].mxu0
        %v614 = vadd.f32 %v504, %v613
        %v615 = vpop.f32.mrb[0].mxu0
        %v616 = vadd.f32 %v508, %v615
        %617 = vmatprep.mubr.f32.mxu0 0.0
        %618 = vmatmul.mubr.f32.gmra.mrb[0].mxu0 %v346
        %v619 = vpop.f32.mrb[0].mxu0
        %v620 = vadd.f32 %v504, %v619
        %v621 = vpop.f32.mrb[0].mxu0
        %v622 = vadd.f32 %v508, %v621
        %623 = vmatprep.mubr.f32.mxu0 0.0
        %624 = vmatmul.mubr.f32.gmra.mrb[0].mxu0 %v347
        %v625 = vpop.f32.mrb[0].mxu0
        %v626 = vadd.f32 %v504, %v625
        %v627 = vpop.f32.mrb[0].mxu0
        %v628 = vadd.f32 %v508, %v627
        %629 = vmatprep.mubr.f32.mxu0 0.0
        %630 = vmatmul.mubr.f32.gmra.mrb[0].mxu0 %v348
        %v631 = vpop.f32.mrb[0].mxu0
        %v632 = vadd.f32 %v504, %v631
        %v633 = vpop.f32.mrb[0].mxu0
        %v634 = vadd.f32 %v508, %v633
        %635 = vmatprep.mubr.f32.mxu0 0.0
        %636 = vmatmul.mubr.f32.gmra.mrb[0].mxu0 %v349
        %v637 = vpop.f32.mrb[0].mxu0
        %v638 = vadd.f32 %v504, %v637
        %v639 = vpop.f32.mrb[0].mxu0
        %v640 = vadd.f32 %v508, %v639
        %641 = vmatprep.mubr.f32.mxu0 0.0
        %642 = vmatmul.mubr.f32.gmra.mrb[0].mxu0 %v350
        %v643 = vpop.f32.mrb[0].mxu0
        %v644 = vadd.f32 %v504, %v643
        %v645 = vpop.f32.mrb[0].mxu0
        %v646 = vadd.f32 %v508, %v645
        %647 = vmatprep.mubr.f32.mxu0 0.0
        %648 = vmatmul.mubr.f32.gmra.mrb[0].mxu0 %v351
        %v649 = vpop.f32.mrb[0].mxu0
        %v650 = vadd.f32 %v504, %v649
        %v651 = vpop.f32.mrb[0].mxu0
        %v652 = vadd.f32 %v508, %v651
        %653 = vmatprep.mubr.f32.mxu0 0.0
        %654 = vmatmul.mubr.f32.gmra.mrb[0].mxu0 %v352
        %v655 = vpop.f32.mrb[0].mxu0
        %v656 = vadd.f32 %v504, %v655
        %v657 = vpop.f32.mrb[0].mxu0
        %v658 = vadd.f32 %v508, %v657
        %659 = vmatprep.mubr.f32.mxu0 0.0
        %660 = vmatmul.mubr.f32.gmra.mrb[0].mxu0 %v353
        %v661 = vpop.f32.mrb[0].mxu0
        %v662 = vadd.f32 %v504, %v661
        %v663 = vpop.f32.mrb[0].mxu0
        %v664 = vadd.f32 %v508, %v663
        %665 = vmatprep.mubr.f32.mxu0 0.0
        %666 = vmatmul.mubr.f32.gmra.mrb[0].mxu0 %v354
        %v667 = vpop.f32.mrb[0].mxu0
        %v668 = vadd.f32 %v504, %v667
        %v669 = vpop.f32.mrb[0].mxu0
        %v670 = vadd.f32 %v508, %v669
        %671 = vmatprep.mubr.f32.mxu0 0.0
        %672 = vmatmul.mubr.f32.gmra.mrb[0].mxu0 %v355
        %v673 = vpop.f32.mrb[0].mxu0
        %v674 = vadd.f32 %v504, %v673
        %v675 = vpop.f32.mrb[0].mxu0
        %v676 = vadd.f32 %v508, %v675
        %677 = vmatprep.mubr.f32.mxu0 0.0
        %678 = vmatmul.mubr.f32.gmra.mrb[0].mxu0 %v356
        %v679 = vpop.f32.mrb[0].mxu0
        %v680 = vadd.f32 %v504, %v679
        %v681 = vpop.f32.mrb[0].mxu0
        %v682 = vadd.f32 %v508, %v681
        %683 = vmatprep.mubr.f32.mxu0 0.0
        %684 = vmatmul.mubr.f32.gmra.mrb[0].mxu0 %v357
        %v685 = vpop.f32.mrb[0].mxu0
        %v686 = vadd.f32 %v504, %v685
        %v687 = vpop.f32.mrb[0].mxu0
        %v688 = vadd.f32 %v508, %v687
        %689 = vmatprep.mubr.f32.mxu0 0.0
        %690 = vmatmul.mubr.f32.gmra.mrb[0].mxu0 %v358
        %v691 = vpop.f32.mrb[0].mxu0
        %v692 = vadd.f32 %v504, %v691
        %v693 = vpop.f32.mrb[0].mxu0
        %v694 = vadd.f32 %v508, %v693
        %695 = vmatprep.mubr.f32.mxu0 0.0
        %696 = vmatmul.mubr.f32.gmra.mrb[0].mxu0 %v359
        %v697 = vpop.f32.mrb[0].mxu0
        %v698 = vadd.f32 %v504, %v697
        %v699 = vpop.f32.mrb[0].mxu0
        %v700 = vadd.f32 %v508, %v699
        %701 = vmatprep.mubr.f32.mxu0 0.0
        %702 = vmatmul.mubr.f32.gmra.mrb[0].mxu0 %v360
        %v703 = vpop.f32.mrb[0].mxu0
        %v704 = vadd.f32 %v504, %v703
        %v705 = vpop.f32.mrb[0].mxu0
        %v706 = vadd.f32 %v508, %v705
        %707 = vmatprep.mubr.f32.mxu0 0.0
        %708 = vmatmul.mubr.f32.gmra.mrb[0].mxu0 %v361
        %v709 = vpop.f32.mrb[0].mxu0
        %v710 = vadd.f32 %v504, %v709
        %v711 = vpop.f32.mrb[0].mxu0
        %v712 = vadd.f32 %v508, %v711
        %713 = vmatprep.mubr.f32.mxu0 0.0
        %714 = vmatmul.mubr.f32.gmra.mrb[0].mxu0 %v362
        %v715 = vpop.f32.mrb[0].mxu0
        %v716 = vadd.f32 %v504, %v715
        %v717 = vpop.f32.mrb[0].mxu0
        %v718 = vadd.f32 %v508, %v717
        %719 = vmatprep.mubr.f32.mxu0 0.0
        %720 = vmatmul.mubr.f32.gmra.mrb[0].mxu0 %v363
        %v721 = vpop.f32.mrb[0].mxu0
        %v722 = vadd.f32 %v504, %v721
        %v723 = vpop.f32.mrb[0].mxu0
        %v724 = vadd.f32 %v508, %v723
        %725 = vmatprep.mubr.f32.mxu0 0.0
        %726 = vmatmul.mubr.f32.gmra.mrb[0].mxu0 %v364
        %v727 = vpop.f32.mrb[0].mxu0
        %v728 = vadd.f32 %v504, %v727
        %v729 = vpop.f32.mrb[0].mxu0
        %v730 = vadd.f32 %v508, %v729
        %731 = vmatprep.mubr.f32.mxu0 0.0
        %732 = vmatmul.mubr.f32.gmra.mrb[0].mxu0 %v365
        %v733 = vpop.f32.mrb[0].mxu0
        %v734 = vadd.f32 %v504, %v733
        %v735 = vpop.f32.mrb[0].mxu0
        %v736 = vadd.f32 %v508, %v735
        %737 = vmatprep.mubr.f32.mxu0 0.0
        %738 = vmatmul.mubr.f32.gmra.mrb[0].mxu0 %v366
        %v739 = vpop.f32.mrb[0].mxu0
        %v740 = vadd.f32 %v504, %v739
        %v741 = vpop.f32.mrb[0].mxu0
        %v742 = vadd.f32 %v508, %v741
        %743 = vmatprep.mubr.f32.mxu0 0.0
        %744 = vmatmul.mubr.f32.gmra.mrb[0].mxu0 %v367
        %v745 = vpop.f32.mrb[0].mxu0
        %v746 = vadd.f32 %v504, %v745
        %v747 = vpop.f32.mrb[0].mxu0
        %v748 = vadd.f32 %v508, %v747
        %749 = vmatprep.mubr.f32.mxu0 0.0
        %750 = vmatmul.mubr.f32.gmra.mrb[0].mxu0 %v368
        %v751 = vpop.f32.mrb[0].mxu0
        %v752 = vadd.f32 %v504, %v751
        %v753 = vpop.f32.mrb[0].mxu0
        %v754 = vadd.f32 %v508, %v753
        %755 = vmatprep.mubr.f32.mxu0 0.0
        %756 = vmatmul.mubr.f32.gmra.mrb[0].mxu0 %v369
        %v757 = vpop.f32.mrb[0].mxu0
        %v758 = vadd.f32 %v504, %v757
        %v759 = vpop.f32.mrb[0].mxu0
        %v760 = vadd.f32 %v508, %v759
        %761 = vmatprep.mubr.f32.mxu0 0.0
        %762 = vmatmul.mubr.f32.gmra.mrb[0].mxu0 %v370
        %v763 = vpop.f32.mrb[0].mxu0
        %v764 = vadd.f32 %v504, %v763
        %v765 = vpop.f32.mrb[0].mxu0
        %v766 = vadd.f32 %v508, %v765
        %767 = vmatprep.mubr.f32.mxu0 0.0
        %768 = vmatmul.mubr.f32.gmra.mrb[0].mxu0 %v371
        %v769 = vpop.f32.mrb[0].mxu0
        %v770 = vadd.f32 %v504, %v769
        %v771 = vpop.f32.mrb[0].mxu0
        %v772 = vadd.f32 %v508, %v771
        %773 = vmatprep.mubr.f32.mxu0 0.0
        %774 = vmatmul.mubr.f32.gmra.mrb[0].mxu0 %v372
        %v775 = vpop.f32.mrb[0].mxu0
        %v776 = vadd.f32 %v504, %v775
        %v777 = vpop.f32.mrb[0].mxu0
        %v778 = vadd.f32 %v508, %v777
        %779 = vmatprep.mubr.f32.mxu0 0.0
        %780 = vmatmul.mubr.f32.gmra.mrb[0].mxu0 %v373
        %v781 = vpop.f32.mrb[0].mxu0
        %v782 = vadd.f32 %v504, %v781
        %v783 = vpop.f32.mrb[0].mxu0
        %v784 = vadd.f32 %v508, %v783
        %785 = vmatprep.mubr.f32.mxu0 0.0
        %786 = vmatmul.mubr.f32.gmra.mrb[0].mxu0 %v374
        %v787 = vpop.f32.mrb[0].mxu0
        %v788 = vadd.f32 %v504, %v787
        %v789 = vpop.f32.mrb[0].mxu0
        %v790 = vadd.f32 %v508, %v789
        %791 = vmatprep.mubr.f32.mxu0 0.0
        %792 = vmatmul.mubr.f32.gmra.mrb[0].mxu0 %v375
        %v793 = vpop.f32.mrb[0].mxu0
        %v794 = vadd.f32 %v504, %v793
        %v795 = vpop.f32.mrb[0].mxu0
        %v796 = vadd.f32 %v508, %v795
        %797 = vmatprep.mubr.f32.mxu0 0.0
        %798 = vmatmul.mubr.f32.gmra.mrb[0].mxu0 %v376
        %v799 = vpop.f32.mrb[0].mxu0
        %v800 = vadd.f32 %v504, %v799
        %v801 = vpop.f32.mrb[0].mxu0
        %v802 = vadd.f32 %v508, %v801
        %803 = vmatprep.mubr.f32.mxu0 0.0
        %804 = vmatmul.mubr.f32.gmra.mrb[0].mxu0 %v377
        %v805 = vpop.f32.mrb[0].mxu0
        %v806 = vadd.f32 %v504, %v805
        %v807 = vpop.f32.mrb[0].mxu0
        %v808 = vadd.f32 %v508, %v807
        %809 = vmatprep.mubr.f32.mxu0 0.0
        %810 = vmatmul.mubr.f32.gmra.mrb[0].mxu0 %v378
        %v811 = vpop.f32.mrb[0].mxu0
        %v812 = vadd.f32 %v504, %v811
        %v813 = vpop.f32.mrb[0].mxu0
        %v814 = vadd.f32 %v508, %v813
        %815 = vmatprep.mubr.f32.mxu0 0.0
        %816 = vmatmul.mubr.f32.gmra.mrb[0].mxu0 %v379
        %v817 = vpop.f32.mrb[0].mxu0
        %v818 = vadd.f32 %v504, %v817
        %v819 = vpop.f32.mrb[0].mxu0
        %v820 = vadd.f32 %v508, %v819
        %821 = vmatprep.mubr.f32.mxu0 0.0
        %822 = vmatmul.mubr.f32.gmra.mrb[0].mxu0 %v380
        %v823 = vpop.f32.mrb[0].mxu0
        %v824 = vadd.f32 %v504, %v823
        %v825 = vpop.f32.mrb[0].mxu0
        %v826 = vadd.f32 %v508, %v825
        %827 = vmatprep.mubr.f32.mxu0 0.0
        %828 = vmatmul.mubr.f32.gmra.mrb[0].mxu0 %v381
        %v829 = vpop.f32.mrb[0].mxu0
        %v830 = vadd.f32 %v504, %v829
        %v831 = vpop.f32.mrb[0].mxu0
        %v832 = vadd.f32 %v508, %v831
        %833 = vmatprep.mubr.f32.mxu0 0.0
        %834 = vmatmul.mubr.f32.gmra.mrb[0].mxu0 %v382
        %v835 = vpop.f32.mrb[0].mxu0
        %v836 = vadd.f32 %v504, %v835
        %v837 = vpop.f32.mrb[0].mxu0
        %v838 = vadd.f32 %v508, %v837
        %839 = vmatprep.mubr.f32.mxu0 0.0
        %840 = vmatmul.mubr.f32.gmra.mrb[0].mxu0 %v383
        %v841 = vpop.f32.mrb[0].mxu0
        %v842 = vadd.f32 %v504, %v841
        %v843 = vpop.f32.mrb[0].mxu0
        %v844 = vadd.f32 %v508, %v843
        %845 = vmatprep.mubr.f32.mxu0 0.0
        %846 = vmatmul.mubr.f32.gmra.mrb[0].mxu0 %v384
        %v847 = vpop.f32.mrb[0].mxu0
        %v848 = vadd.f32 %v504, %v847
        %v849 = vpop.f32.mrb[0].mxu0
        %v850 = vadd.f32 %v508, %v849
        %851 = vmatprep.mubr.f32.mxu0 0.0
        %852 = vmatmul.mubr.f32.gmra.mrb[0].mxu0 %v385
        %v853 = vpop.f32.mrb[0].mxu0
        %v854 = vadd.f32 %v504, %v853
        %v855 = vpop.f32.mrb[0].mxu0
        %v856 = vadd.f32 %v508, %v855
        %857 = vmatprep.mubr.f32.mxu0 0.0
        %858 = vmatmul.mubr.f32.gmra.mrb[0].mxu0 %v386
        %v859 = vpop.f32.mrb[0].mxu0
        %v860 = vadd.f32 %v504, %v859
        %v861 = vpop.f32.mrb[0].mxu0
        %v862 = vadd.f32 %v508, %v861
        %863 = vmatprep.mubr.f32.mxu0 0.0
        %864 = vmatmul.mubr.f32.gmra.mrb[0].mxu0 %v387
        %v865 = vpop.f32.mrb[0].mxu0
        %v866 = vadd.f32 %v504, %v865
        %v867 = vpop.f32.mrb[0].mxu0
        %v868 = vadd.f32 %v508, %v867
        %869 = vmatprep.mubr.f32.mxu0 0.0
        %870 = vmatmul.mubr.f32.gmra.mrb[0].mxu0 %v388
        %v871 = vpop.f32.mrb[0].mxu0
        %v872 = vadd.f32 %v504, %v871
        %v873 = vpop.f32.mrb[0].mxu0
        %v874 = vadd.f32 %v508, %v873
        %875 = vmatprep.mubr.f32.mxu0 0.0
        %876 = vmatmul.mubr.f32.gmra.mrb[0].mxu0 %v389
        %v877 = vpop.f32.mrb[0].mxu0
        %v878 = vadd.f32 %v504, %v877
        %v879 = vpop.f32.mrb[0].mxu0
        %v880 = vadd.f32 %v508, %v879
        %881 = vmatprep.mubr.f32.mxu0 0.0
        %882 = vmatmul.mubr.f32.gmra.mrb[0].mxu0 %v390
        %v883 = vpop.f32.mrb[0].mxu0
        %v884 = vadd.f32 %v504, %v883
        %v885 = vpop.f32.mrb[0].mxu0
        %v886 = vadd.f32 %v508, %v885
        %887 = vmatprep.mubr.f32.mxu0 0.0
        %888 = vmatmul.mubr.f32.gmra.mrb[0].mxu0 %v391
        %v889 = vpop.f32.mrb[0].mxu0
        %v890 = vadd.f32 %v504, %v889
        %v891 = vpop.f32.mrb[0].mxu0
        %v892 = vadd.f32 %v508, %v891
        %893 = vmatprep.mubr.f32.mxu0 0.0
        %894 = vmatmul.mubr.f32.gmra.mrb[0].mxu0 %v392
        %v895 = vpop.f32.mrb[0].mxu0
        %v896 = vadd.f32 %v504, %v895
        %v897 = vpop.f32.mrb[0].mxu0
        %v898 = vadd.f32 %v508, %v897
        %899 = vmatprep.mubr.f32.mxu0 0.0
        %900 = vmatmul.mubr.f32.gmra.mrb[0].mxu0 %v393
        %v901 = vpop.f32.mrb[0].mxu0
        %v902 = vadd.f32 %v504, %v901
        %v903 = vpop.f32.mrb[0].mxu0
        %v904 = vadd.f32 %v508, %v903
        %905 = vmatprep.mubr.f32.mxu0 0.0
        %906 = vmatmul.mubr.f32.gmra.mrb[0].mxu0 %v394
        %v907 = vpop.f32.mrb[0].mxu0
        %v908 = vadd.f32 %v504, %v907
        %v909 = vpop.f32.mrb[0].mxu0
        %v910 = vadd.f32 %v508, %v909
        %911 = vmatprep.mubr.f32.mxu0 0.0
        %912 = vmatmul.mubr.f32.gmra.mrb[0].mxu0 %v395
        %v913 = vpop.f32.mrb[0].mxu0
        %v914 = vadd.f32 %v504, %v913
        %v915 = vpop.f32.mrb[0].mxu0
        %v916 = vadd.f32 %v508, %v915
        %917 = vmatprep.mubr.f32.mxu0 0.0
        %918 = vmatmul.mubr.f32.gmra.mrb[0].mxu0 %v396
        %v919 = vpop.f32.mrb[0].mxu0
        %v920 = vadd.f32 %v504, %v919
        %v921 = vpop.f32.mrb[0].mxu0
        %v922 = vadd.f32 %v508, %v921
        %923 = vmatprep.mubr.f32.mxu0 0.0
        %924 = vmatmul.mubr.f32.gmra.mrb[0].mxu0 %v397
        %v925 = vpop.f32.mrb[0].mxu0
        %v926 = vadd.f32 %v504, %v925
        %v927 = vpop.f32.mrb[0].mxu0
        %v928 = vadd.f32 %v508, %v927
        %929 = vmatprep.mubr.f32.mxu0 0.0
        %930 = vmatmul.mubr.f32.gmra.mrb[0].mxu0 %v398
        %v931 = vpop.f32.mrb[0].mxu0
        %v932 = vadd.f32 %v504, %v931
        %v933 = vpop.f32.mrb[0].mxu0
        %v934 = vadd.f32 %v508, %v933
        %935 = vmatprep.mubr.f32.mxu0 0.0
        %936 = vmatmul.mubr.f32.gmra.mrb[0].mxu0 %v399
        %v937 = vpop.f32.mrb[0].mxu0
        %v938 = vadd.f32 %v504, %v937
        %v939 = vpop.f32.mrb[0].mxu0
        %v940 = vadd.f32 %v508, %v939
        %941 = vmatprep.mubr.f32.mxu0 0.0
        %942 = vmatmul.mubr.f32.gmra.mrb[0].mxu0 %v400
        %v943 = vpop.f32.mrb[0].mxu0
        %v944 = vadd.f32 %v504, %v943
        %v945 = vpop.f32.mrb[0].mxu0
        %v946 = vadd.f32 %v508, %v945
        %947 = vmatprep.mubr.f32.mxu0 0.0
        %948 = vmatmul.mubr.f32.gmra.mrb[0].mxu0 %v401
        %v949 = vpop.f32.mrb[0].mxu0
        %v950 = vadd.f32 %v504, %v949
        %v951 = vpop.f32.mrb[0].mxu0
        %v952 = vadd.f32 %v508, %v951
        %953 = vmatprep.mubr.f32.mxu0 0.0
        %954 = vmatmul.mubr.f32.gmra.mrb[0].mxu0 %v402
        %v955 = vpop.f32.mrb[0].mxu0
        %v956 = vadd.f32 %v504, %v955
        %v957 = vpop.f32.mrb[0].mxu0
        %v958 = vadd.f32 %v508, %v957
        %959 = vmatprep.mubr.f32.mxu0 0.0
        %960 = vmatmul.mubr.f32.gmra.mrb[0].mxu0 %v403
        %v961 = vpop.f32.mrb[0].mxu0
        %v962 = vadd.f32 %v504, %v961
        %v963 = vpop.f32.mrb[0].mxu0
        %v964 = vadd.f32 %v508, %v963
        %965 = vmatprep.mubr.f32.mxu0 0.0
        %966 = vmatmul.mubr.f32.gmra.mrb[0].mxu0 %v404
        %v967 = vpop.f32.mrb[0].mxu0
        %v968 = vadd.f32 %v504, %v967
        %v969 = vpop.f32.mrb[0].mxu0
        %v970 = vadd.f32 %v508, %v969
        %971 = vmatprep.mubr.f32.mxu0 0.0
        %972 = vmatmul.mubr.f32.gmra.mrb[0].mxu0 %v405
        %v973 = vpop.f32.mrb[0].mxu0
        %v974 = vadd.f32 %v504, %v973
        %v975 = vpop.f32.mrb[0].mxu0
        %v976 = vadd.f32 %v508, %v975
        %977 = vmatprep.mubr.f32.mxu0 0.0
        %978 = vmatmul.mubr.f32.gmra.mrb[0].mxu0 %v406
        %v979 = vpop.f32.mrb[0].mxu0
        %v980 = vadd.f32 %v504, %v979
        %v981 = vpop.f32.mrb[0].mxu0
        %v982 = vadd.f32 %v508, %v981
        %983 = vmatprep.mubr.f32.mxu0 0.0
        %984 = vmatmul.mubr.f32.gmra.mrb[0].mxu0 %v407
        %v985 = vpop.f32.mrb[0].mxu0
        %v986 = vadd.f32 %v504, %v985
        %v987 = vpop.f32.mrb[0].mxu0
        %v988 = vadd.f32 %v508, %v987
        %989 = vmatprep.mubr.f32.mxu0 0.0
        %990 = vmatmul.mubr.f32.gmra.mrb[0].mxu0 %v408
        %v991 = vpop.f32.mrb[0].mxu0
        %v992 = vadd.f32 %v504, %v991
        %v993 = vpop.f32.mrb[0].mxu0
        %v994 = vadd.f32 %v508, %v993
        %995 = vmatprep.mubr.f32.mxu0 0.0
        %996 = vmatmul.mubr.f32.gmra.mrb[0].mxu0 %v409
        %v997 = vpop.f32.mrb[0].mxu0
        %v998 = vadd.f32 %v504, %v997
        %v999 = vpop.f32.mrb[0].mxu0
        %v1000 = vadd.f32 %v508, %v999
        %1001 = vmatprep.mubr.f32.mxu0 0.0
        %1002 = vmatmul.mubr.f32.gmra.mrb[0].mxu0 %v410
        %v1003 = vpop.f32.mrb[0].mxu0
        %v1004 = vadd.f32 %v504, %v1003
        %v1005 = vpop.f32.mrb[0].mxu0
        %v1006 = vadd.f32 %v508, %v1005
        %1007 = vmatprep.mubr.f32.mxu0 0.0
        %1008 = vmatmul.mubr.f32.gmra.mrb[0].mxu0 %v411
        %v1009 = vpop.f32.mrb[0].mxu0
        %v1010 = vadd.f32 %v504, %v1009
        %v1011 = vpop.f32.mrb[0].mxu0
        %v1012 = vadd.f32 %v508, %v1011
        %1013 = vmatprep.mubr.f32.mxu0 0.0
        %1014 = vmatmul.mubr.f32.gmra.mrb[0].mxu0 %v412
        %v1015 = vpop.f32.mrb[0].mxu0
        %v1016 = vadd.f32 %v504, %v1015
        %v1017 = vpop.f32.mrb[0].mxu0
        %v1018 = vadd.f32 %v508, %v1017
        %1019 = vmatprep.mubr.f32.mxu0 0.0
        %1020 = vmatmul.mubr.f32.gmra.mrb[0].mxu0 %v413
        %v1021 = vpop.f32.mrb[0].mxu0
        %v1022 = vadd.f32 %v504, %v1021
        %v1023 = vpop.f32.mrb[0].mxu0
        %v1024 = vadd.f32 %v508, %v1023
        %1025 = vmatprep.mubr.f32.mxu0 0.0
        %1026 = vmatmul.mubr.f32.gmra.mrb[0].mxu0 %v414
        %v1027 = vpop.f32.mrb[0].mxu0
        %v1028 = vadd.f32 %v504, %v1027
        %v1029 = vpop.f32.mrb[0].mxu0
        %v1030 = vadd.f32 %v508, %v1029
        %1031 = vmatprep.mubr.f32.mxu0 0.0
        %1032 = vmatmul.mubr.f32.gmra.mrb[0].mxu0 %v415
        %v1033 = vpop.f32.mrb[0].mxu0
        %v1034 = vadd.f32 %v504, %v1033
        %v1035 = vpop.f32.mrb[0].mxu0
        %v1036 = vadd.f32 %v508, %v1035
        %1037 = vmatprep.mubr.f32.mxu0 0.0
        %1038 = vmatmul.mubr.f32.gmra.mrb[0].mxu0 %v416
        %v1039 = vpop.f32.mrb[0].mxu0
        %v1040 = vadd.f32 %v504, %v1039
        %v1041 = vpop.f32.mrb[0].mxu0
        %v1042 = vadd.f32 %v508, %v1041
        %1043 = vmatprep.mubr.f32.mxu0 0.0
        %1044 = vmatmul.mubr.f32.gmra.mrb[0].mxu0 %v417
        %v1045 = vpop.f32.mrb[0].mxu0
        %v1046 = vadd.f32 %v504, %v1045
        %v1047 = vpop.f32.mrb[0].mxu0
        %v1048 = vadd.f32 %v508, %v1047
        %1049 = vmatprep.mubr.f32.mxu0 0.0
        %1050 = vmatmul.mubr.f32.gmra.mrb[0].mxu0 %v418
        %v1051 = vpop.f32.mrb[0].mxu0
        %v1052 = vadd.f32 %v504, %v1051
        %v1053 = vpop.f32.mrb[0].mxu0
        %v1054 = vadd.f32 %v508, %v1053
        %1055 = vmatprep.mubr.f32.mxu0 0.0
        %1056 = vmatmul.mubr.f32.gmra.mrb[0].mxu0 %v419
        %v1057 = vpop.f32.mrb[0].mxu0
        %v1058 = vadd.f32 %v504, %v1057
        %v1059 = vpop.f32.mrb[0].mxu0
        %v1060 = vadd.f32 %v508, %v1059
        %1061 = vmatprep.mubr.f32.mxu0 0.0
        %1062 = vmatmul.mubr.f32.gmra.mrb[0].mxu0 %v420
        %v1063 = vpop.f32.mrb[0].mxu0
        %v1064 = vadd.f32 %v504, %v1063
        %v1065 = vpop.f32.mrb[0].mxu0
        %v1066 = vadd.f32 %v508, %v1065
        %1067 = vmatprep.mubr.f32.mxu0 0.0
        %1068 = vmatmul.mubr.f32.gmra.mrb[0].mxu0 %v421
        %v1069 = vpop.f32.mrb[0].mxu0
        %v1070 = vadd.f32 %v504, %v1069
        %v1071 = vpop.f32.mrb[0].mxu0
        %v1072 = vadd.f32 %v508, %v1071
        %1073 = vmatprep.mubr.f32.mxu0 0.0
        %1074 = vmatmul.mubr.f32.gmra.mrb[0].mxu0 %v422
        %v1075 = vpop.f32.mrb[0].mxu0
        %v1076 = vadd.f32 %v504, %v1075
        %v1077 = vpop.f32.mrb[0].mxu0
        %v1078 = vadd.f32 %v508, %v1077
        %1079 = vmatprep.mubr.f32.mxu0 0.0
        %1080 = vmatmul.mubr.f32.gmra.mrb[0].mxu0 %v423
        %v1081 = vpop.f32.mrb[0].mxu0
        %v1082 = vadd.f32 %v504, %v1081
        %v1083 = vpop.f32.mrb[0].mxu0
        %v1084 = vadd.f32 %v508, %v1083
        %1085 = vmatprep.mubr.f32.mxu0 0.0
        %1086 = vmatmul.mubr.f32.gmra.mrb[0].mxu0 %v424
        %v1087 = vpop.f32.mrb[0].mxu0
        %v1088 = vadd.f32 %v504, %v1087
        %v1089 = vpop.f32.mrb[0].mxu0
        %v1090 = vadd.f32 %v508, %v1089
        %1091 = vmatprep.mubr.f32.mxu0 0.0
        %1092 = vmatmul.mubr.f32.gmra.mrb[0].mxu0 %v425
        %v1093 = vpop.f32.mrb[0].mxu0
        %v1094 = vadd.f32 %v504, %v1093
        %v1095 = vpop.f32.mrb[0].mxu0
        %v1096 = vadd.f32 %v508, %v1095
        %1097 = vmatprep.mubr.f32.mxu0 0.0
        %1098 = vmatmul.mubr.f32.gmra.mrb[0].mxu0 %v426
        %v1099 = vpop.f32.mrb[0].mxu0
        %v1100 = vadd.f32 %v504, %v1099
        %v1101 = vpop.f32.mrb[0].mxu0
        %v1102 = vadd.f32 %v508, %v1101
        %1103 = vmatprep.mubr.f32.mxu0 0.0
        %1104 = vmatmul.mubr.f32.gmra.mrb[0].mxu0 %v427
        %v1105 = vpop.f32.mrb[0].mxu0
        %v1106 = vadd.f32 %v504, %v1105
        %v1107 = vpop.f32.mrb[0].mxu0
        %v1108 = vadd.f32 %v508, %v1107
        %1109 = vmatprep.mubr.f32.mxu0 0.0
        %1110 = vmatmul.mubr.f32.gmra.mrb[0].mxu0 %v428
        %v1111 = vpop.f32.mrb[0].mxu0
        %v1112 = vadd.f32 %v504, %v1111
        %v1113 = vpop.f32.mrb[0].mxu0
        %v1114 = vadd.f32 %v508, %v1113
        %1115 = vmatprep.mubr.f32.mxu0 0.0
        %1116 = vmatmul.mubr.f32.gmra.mrb[0].mxu0 %v429
        %v1117 = vpop.f32.mrb[0].mxu0
        %v1118 = vadd.f32 %v504, %v1117
        %v1119 = vpop.f32.mrb[0].mxu0
        %v1120 = vadd.f32 %v508, %v1119
        %1121 = vmatprep.mubr.f32.mxu0 0.0
        %1122 = vmatmul.mubr.f32.gmra.mrb[0].mxu0 %v430
        %v1123 = vpop.f32.mrb[0].mxu0
        %v1124 = vadd.f32 %v504, %v1123
        %v1125 = vpop.f32.mrb[0].mxu0
        %v1126 = vadd.f32 %v508, %v1125
        %1127 = vmatprep.mubr.f32.mxu0 0.0
        %1128 = vmatmul.mubr.f32.gmra.mrb[0].mxu0 %v431
        %v1129 = vpop.f32.mrb[0].mxu0
        %v1130 = vadd.f32 %v504, %v1129
        %v1131 = vpop.f32.mrb[0].mxu0
        %v1132 = vadd.f32 %v508, %v1131
        %1133 = vmatprep.mubr.f32.mxu0 0.0
        %1134 = vmatmul.mubr.f32.gmra.mrb[0].mxu0 %v432
        %v1135 = vpop.f32.mrb[0].mxu0
        %v1136 = vadd.f32 %v504, %v1135
        %v1137 = vpop.f32.mrb[0].mxu0
        %v1138 = vadd.f32 %v508, %v1137
        %1139 = vmatprep.mubr.f32.mxu0 0.0
        %1140 = vmatmul.mubr.f32.gmra.mrb[0].mxu0 %v433
        %v1141 = vpop.f32.mrb[0].mxu0
        %v1142 = vadd.f32 %v504, %v1141
        %v1143 = vpop.f32.mrb[0].mxu0
        %v1144 = vadd.f32 %v508, %v1143
        %1145 = vmatprep.mubr.f32.mxu0 0.0
        %1146 = vmatmul.mubr.f32.gmra.mrb[0].mxu0 %v434
        %v1147 = vpop.f32.mrb[0].mxu0
        %v1148 = vadd.f32 %v504, %v1147
        %v1149 = vpop.f32.mrb[0].mxu0
        %v1150 = vadd.f32 %v508, %v1149
        %1151 = vmatprep.mubr.f32.mxu0 0.0
        %1152 = vmatmul.mubr.f32.gmra.mrb[0].mxu0 %v435
        %v1153 = vpop.f32.mrb[0].mxu0
        %v1154 = vadd.f32 %v504, %v1153
        %v1155 = vpop.f32.mrb[0].mxu0
        %v1156 = vadd.f32 %v508, %v1155
        %1157 = vmatprep.mubr.f32.mxu0 0.0
        %1158 = vmatmul.mubr.f32.gmra.mrb[0].mxu0 %v436
        %v1159 = vpop.f32.mrb[0].mxu0
        %v1160 = vadd.f32 %v504, %v1159
        %v1161 = vpop.f32.mrb[0].mxu0
        %v1162 = vadd.f32 %v508, %v1161
        %1163 = vmatprep.mubr.f32.mxu0 0.0
        %1164 = vmatmul.mubr.f32.gmra.mrb[0].mxu0 %v437
        %v1165 = vpop.f32.mrb[0].mxu0
        %v1166 = vadd.f32 %v504, %v1165
        %v1167 = vpop.f32.mrb[0].mxu0
        %v1168 = vadd.f32 %v508, %v1167
        %1169 = vmatprep.mubr.f32.mxu0 0.0
        %1170 = vmatmul.mubr.f32.gmra.mrb[0].mxu0 %v438
        %v1171 = vpop.f32.mrb[0].mxu0
        %v1172 = vadd.f32 %v504, %v1171
        %v1173 = vpop.f32.mrb[0].mxu0
        %v1174 = vadd.f32 %v508, %v1173
        %1175 = vmatprep.mubr.f32.mxu0 0.0
        %1176 = vmatmul.mubr.f32.gmra.mrb[0].mxu0 %v439
        %v1177 = vpop.f32.mrb[0].mxu0
        %v1178 = vadd.f32 %v504, %v1177
        %v1179 = vpop.f32.mrb[0].mxu0
        %v1180 = vadd.f32 %v508, %v1179
        %1181 = vmatprep.mubr.f32.mxu0 0.0
        %1182 = vmatmul.mubr.f32.gmra.mrb[0].mxu0 %v440
        %v1183 = vpop.f32.mrb[0].mxu0
        %v1184 = vadd.f32 %v504, %v1183
        %v1185 = vpop.f32.mrb[0].mxu0
        %v1186 = vadd.f32 %v508, %v1185
        %1187 = vmatprep.mubr.f32.mxu0 0.0
        %1188 = vmatmul.mubr.f32.gmra.mrb[0].mxu0 %v441
        %v1189 = vpop.f32.mrb[0].mxu0
        %v1190 = vadd.f32 %v504, %v1189
        %v1191 = vpop.f32.mrb[0].mxu0
        %v1192 = vadd.f32 %v508, %v1191
        %1193 = vmatprep.mubr.f32.mxu0 0.0
        %1194 = vmatmul.mubr.f32.gmra.mrb[0].mxu0 %v442
        %v1195 = vpop.f32.mrb[0].mxu0
        %v1196 = vadd.f32 %v504, %v1195
        %v1197 = vpop.f32.mrb[0].mxu0
        %v1198 = vadd.f32 %v508, %v1197
        %1199 = vmatprep.mubr.f32.mxu0 0.0
        %1200 = vmatmul.mubr.f32.gmra.mrb[0].mxu0 %v443
        %v1201 = vpop.f32.mrb[0].mxu0
        %v1202 = vadd.f32 %v504, %v1201
        %v1203 = vpop.f32.mrb[0].mxu0
        %v1204 = vadd.f32 %v508, %v1203
        %1205 = vmatprep.mubr.f32.mxu0 0.0
        %1206 = vmatmul.mubr.f32.gmra.mrb[0].mxu0 %v444
        %v1207 = vpop.f32.mrb[0].mxu0
        %v1208 = vadd.f32 %v504, %v1207
        %v1209 = vpop.f32.mrb[0].mxu0
        %v1210 = vadd.f32 %v508, %v1209
        %1211 = vmatprep.mubr.f32.mxu0 0.0
        %1212 = vmatmul.mubr.f32.gmra.mrb[0].mxu0 %v445
        %v1213 = vpop.f32.mrb[0].mxu0
        %v1214 = vadd.f32 %v504, %v1213
        %v1215 = vpop.f32.mrb[0].mxu0
        %v1216 = vadd.f32 %v508, %v1215
        %1217 = vmatprep.mubr.f32.mxu0 0.0
        %1218 = vmatmul.mubr.f32.gmra.mrb[0].mxu0 %v446
        %v1219 = vpop.f32.mrb[0].mxu0
        %v1220 = vadd.f32 %v504, %v1219
        %v1221 = vpop.f32.mrb[0].mxu0
        %v1222 = vadd.f32 %v508, %v1221
        %1223 = vmatprep.mubr.f32.mxu0 0.0
        %1224 = vmatmul.mubr.f32.gmra.mrb[0].mxu0 %v447
        %v1225 = vpop.f32.mrb[0].mxu0
        %v1226 = vadd.f32 %v504, %v1225
        %v1227 = vpop.f32.mrb[0].mxu0
        %v1228 = vadd.f32 %v508, %v1227
        %1229 = vmatprep.mubr.f32.mxu0 0.0
        %1230 = vmatmul.mubr.f32.gmra.mrb[0].mxu0 %v448
        %v1231 = vpop.f32.mrb[0].mxu0
        %v1232 = vadd.f32 %v504, %v1231
        %v1233 = vpop.f32.mrb[0].mxu0
        %v1234 = vadd.f32 %v508, %v1233
        %1235 = vmatprep.mubr.f32.mxu0 0.0
        %1236 = vmatmul.mubr.f32.gmra.mrb[0].mxu0 %v449
        %v1237 = vpop.f32.mrb[0].mxu0
        %v1238 = vadd.f32 %v504, %v1237
        %v1239 = vpop.f32.mrb[0].mxu0
        %v1240 = vadd.f32 %v508, %v1239
        %1241 = vmatprep.mubr.f32.mxu0 0.0
        %1242 = vmatmul.mubr.f32.gmra.mrb[0].mxu0 %v450
        %v1243 = vpop.f32.mrb[0].mxu0
        %v1244 = vadd.f32 %v504, %v1243
        %v1245 = vpop.f32.mrb[0].mxu0
        %v1246 = vadd.f32 %v508, %v1245
        %1247 = vmatprep.mubr.f32.mxu0 0.0
        %1248 = vmatmul.mubr.f32.gmra.mrb[0].mxu0 %v451
        %v1249 = vpop.f32.mrb[0].mxu0
        %v1250 = vadd.f32 %v504, %v1249
        %v1251 = vpop.f32.mrb[0].mxu0
        %v1252 = vadd.f32 %v508, %v1251
        %1253 = vmatprep.mubr.f32.mxu0 0.0
        %1254 = vmatmul.mubr.f32.gmra.mrb[0].mxu0 %v452
        %v1255 = vpop.f32.mrb[0].mxu0
        %v1256 = vadd.f32 %v504, %v1255
        %v1257 = vpop.f32.mrb[0].mxu0
        %v1258 = vadd.f32 %v508, %v1257
        %1259 = vmatprep.mubr.f32.mxu0 0.0
        %1260 = vmatmul.mubr.f32.gmra.mrb[0].mxu0 %v453
        %v1261 = vpop.f32.mrb[0].mxu0
        %v1262 = vadd.f32 %v504, %v1261
        %v1263 = vpop.f32.mrb[0].mxu0
        %v1264 = vadd.f32 %v508, %v1263
        %1265 = vmatprep.mubr.f32.mxu0 0.0
        %1266 = vmatmul.mubr.f32.gmra.mrb[0].mxu0 %v454
        %v1267 = vpop.f32.mrb[0].mxu0
        %v1268 = vadd.f32 %v504, %v1267
        %v1269 = vpop.f32.mrb[0].mxu0
        %v1270 = vadd.f32 %v508, %v1269
        %1271 = vmatprep.mubr.f32.mxu0 0.0
        %1272 = vmatmul.mubr.f32.gmra.mrb[0].mxu0 %v455
        %v1273 = vpop.f32.mrb[0].mxu0
        %v1274 = vadd.f32 %v504, %v1273
        %v1275 = vpop.f32.mrb[0].mxu0
        %v1276 = vadd.f32 %v508, %v1275
        %1277 = vmatprep.mubr.f32.mxu0 0.0
        %1278 = vmatmul.mubr.f32.gmra.mrb[0].mxu0 %v456
        %v1279 = vpop.f32.mrb[0].mxu0
        %v1280 = vadd.f32 %v504, %v1279
        %v1281 = vpop.f32.mrb[0].mxu0
        %v1282 = vadd.f32 %v508, %v1281
        %1283 = vmatprep.mubr.f32.mxu0 0.0
        %1284 = vmatmul.mubr.f32.gmra.mrb[0].mxu0 %v457
        %v1285 = vpop.f32.mrb[0].mxu0
        %v1286 = vadd.f32 %v504, %v1285
        %v1287 = vpop.f32.mrb[0].mxu0
        %v1288 = vadd.f32 %v508, %v1287
        %1289 = vmatprep.mubr.f32.mxu0 0.0
        %1290 = vmatmul.mubr.f32.gmra.mrb[0].mxu0 %v458
        %v1291 = vpop.f32.mrb[0].mxu0
        %v1292 = vadd.f32 %v504, %v1291
        %v1293 = vpop.f32.mrb[0].mxu0
        %v1294 = vadd.f32 %v508, %v1293
        %1295 = vmatprep.mubr.f32.mxu0 0.0
        %1296 = vmatmul.mubr.f32.gmra.mrb[0].mxu0 %v459
        %v1297 = vpop.f32.mrb[0].mxu0
        %v1298 = vadd.f32 %v504, %v1297
        %v1299 = vpop.f32.mrb[0].mxu0
        %v1300 = vadd.f32 %v508, %v1299
        %1301 = vmatprep.mubr.f32.mxu0 0.0
        %1302 = vmatmul.mubr.f32.gmra.mrb[0].mxu0 %v460
        %v1303 = vpop.f32.mrb[0].mxu0
        %v1304 = vadd.f32 %v504, %v1303
        %v1305 = vpop.f32.mrb[0].mxu0
        %v1306 = vadd.f32 %v508, %v1305
        %1307 = vmatprep.mubr.f32.mxu0 0.0
        %1308 = vmatmul.mubr.f32.gmra.mrb[0].mxu0 %v461
        %v1309 = vpop.f32.mrb[0].mxu0
        %v1310 = vadd.f32 %v504, %v1309
        %v1311 = vpop.f32.mrb[0].mxu0
        %v1312 = vadd.f32 %v508, %v1311
        %1313 = vmatprep.mubr.f32.mxu0 0.0
        %1314 = vmatmul.mubr.f32.gmra.mrb[0].mxu0 %v462
        %v1315 = vpop.f32.mrb[0].mxu0
        %v1316 = vadd.f32 %v504, %v1315
        %v1317 = vpop.f32.mrb[0].mxu0
        %v1318 = vadd.f32 %v508, %v1317
        %1319 = vmatprep.mubr.f32.mxu0 0.0
        %1320 = vmatmul.mubr.f32.gmra.mrb[0].mxu0 %v463
        %v1321 = vpop.f32.mrb[0].mxu0
        %v1322 = vadd.f32 %v504, %v1321
        %v1323 = vpop.f32.mrb[0].mxu0
        %v1324 = vadd.f32 %v508, %v1323
        %1325 = vmatprep.mubr.f32.mxu0 0.0
        %1326 = vmatmul.mubr.f32.gmra.mrb[0].mxu0 %v464
        %v1327 = vpop.f32.mrb[0].mxu0
        %v1328 = vadd.f32 %v504, %v1327
        %v1329 = vpop.f32.mrb[0].mxu0
        %v1330 = vadd.f32 %v508, %v1329
        %1331 = vmatprep.mubr.f32.mxu0 0.0
        %1332 = vmatmul.mubr.f32.gmra.mrb[0].mxu0 %v465
        %v1333 = vpop.f32.mrb[0].mxu0
        %v1334 = vadd.f32 %v504, %v1333
        %v1335 = vpop.f32.mrb[0].mxu0
        %v1336 = vadd.f32 %v508, %v1335
        %1337 = vmatprep.mubr.f32.mxu0 0.0
        %1338 = vmatmul.mubr.f32.gmra.mrb[0].mxu0 %v466
        %v1339 = vpop.f32.mrb[0].mxu0
        %v1340 = vadd.f32 %v504, %v1339
        %v1341 = vpop.f32.mrb[0].mxu0
        %v1342 = vadd.f32 %v508, %v1341
        %1343 = vdwg.mxu0
        %v1344 = vtanh.pop %v578
        %v1345 = vtanh.pop %v580
        %v1346 = vtanh.pop %v584
        %v1347 = vtanh.pop %v586
        %v1348 = vtanh.pop %v590
        %v1349 = vtanh.pop %v592
        %v1350 = vtanh.pop %v596
        %v1351 = vtanh.pop %v598
        %v1352 = vtanh.pop %v602
        %v1353 = vtanh.pop %v604
        %v1354 = vtanh.pop %v608
        %v1355 = vtanh.pop %v610
        %v1356 = vtanh.pop %v614
        %v1357 = vtanh.pop %v616
        %v1358 = vtanh.pop %v620
        %v1359 = vtanh.pop %v622
        %v1360 = vtanh.pop %v626
        %v1361 = vtanh.pop %v628
        %v1362 = vtanh.pop %v632
        %v1363 = vtanh.pop %v634
        %v1364 = vtanh.pop %v638
        %v1365 = vtanh.pop %v640
        %v1366 = vtanh.pop %v644
        %v1367 = vtanh.pop %v646
        %v1368 = vtanh.pop %v650
        %v1369 = vtanh.pop %v652
        %v1370 = vtanh.pop %v656
        %v1371 = vtanh.pop %v658
        %v1372 = vtanh.pop %v662
        %v1373 = vtanh.pop %v664
        %v1374 = vtanh.pop %v668
        %v1375 = vtanh.pop %v670
        %v1376 = vtanh.pop %v674
        %v1377 = vtanh.pop %v676
        %v1378 = vtanh.pop %v680
        %v1379 = vtanh.pop %v682
        %v1380 = vtanh.pop %v686
        %v1381 = vtanh.pop %v688
        %v1382 = vtanh.pop %v692
        %v1383 = vtanh.pop %v694
        %v1384 = vtanh.pop %v698
        %v1385 = vtanh.pop %v700
        %v1386 = vtanh.pop %v704
        %v1387 = vtanh.pop %v706
        %v1388 = vtanh.pop %v710
        %v1389 = vtanh.pop %v712
        %v1390 = vtanh.pop %v716
        %v1391 = vtanh.pop %v718
        %v1392 = vtanh.pop %v722
        %v1393 = vtanh.pop %v724
        %v1394 = vtanh.pop %v728
        %v1395 = vtanh.pop %v730
        %v1396 = vtanh.pop %v734
        %v1397 = vtanh.pop %v736
        %v1398 = vtanh.pop %v740
        %v1399 = vtanh.pop %v742
        %v1400 = vtanh.pop %v746
        %v1401 = vtanh.pop %v748
        %v1402 = vtanh.pop %v752
        %v1403 = vtanh.pop %v754
        %v1404 = vtanh.pop %v758
        %v1405 = vtanh.pop %v760
        %v1406 = vtanh.pop %v764
        %v1407 = vtanh.pop %v766
        %v1408 = vtanh.pop %v770
        %v1409 = vtanh.pop %v772
        %v1410 = vtanh.pop %v776
        %v1411 = vtanh.pop %v778
        %v1412 = vtanh.pop %v782
        %v1413 = vtanh.pop %v784
        %v1414 = vtanh.pop %v788
        %v1415 = vtanh.pop %v790
        %v1416 = vtanh.pop %v794
        %v1417 = vtanh.pop %v796
        %v1418 = vtanh.pop %v800
        %v1419 = vtanh.pop %v802
        %v1420 = vtanh.pop %v806
        %v1421 = vtanh.pop %v808
        %v1422 = vtanh.pop %v812
        %v1423 = vtanh.pop %v814
        %v1424 = vtanh.pop %v818
        %v1425 = vtanh.pop %v820
        %v1426 = vtanh.pop %v824
        %v1427 = vtanh.pop %v826
        %v1428 = vtanh.pop %v830
        %v1429 = vtanh.pop %v832
        %v1430 = vtanh.pop %v836
        %v1431 = vtanh.pop %v838
        %v1432 = vtanh.pop %v842
        %v1433 = vtanh.pop %v844
        %v1434 = vtanh.pop %v848
        %v1435 = vtanh.pop %v850
        %v1436 = vtanh.pop %v854
        %v1437 = vtanh.pop %v856
        %v1438 = vtanh.pop %v860
        %v1439 = vtanh.pop %v862
        %v1440 = vtanh.pop %v866
        %v1441 = vtanh.pop %v868
        %v1442 = vtanh.pop %v872
        %v1443 = vtanh.pop %v874
        %v1444 = vtanh.pop %v878
        %v1445 = vtanh.pop %v880
        %v1446 = vtanh.pop %v884
        %v1447 = vtanh.pop %v886
        %v1448 = vtanh.pop %v890
        %v1449 = vtanh.pop %v892
        %v1450 = vtanh.pop %v896
        %v1451 = vtanh.pop %v898
        %v1452 = vtanh.pop %v902
        %v1453 = vtanh.pop %v904
        %v1454 = vtanh.pop %v908
        %v1455 = vtanh.pop %v910
        %v1456 = vtanh.pop %v914
        %v1457 = vtanh.pop %v916
        %v1458 = vtanh.pop %v920
        %v1459 = vtanh.pop %v922
        %v1460 = vtanh.pop %v926
        %v1461 = vtanh.pop %v928
        %v1462 = vtanh.pop %v932
        %v1463 = vtanh.pop %v934
        %v1464 = vtanh.pop %v938
        %v1465 = vtanh.pop %v940
        %v1466 = vtanh.pop %v944
        %v1467 = vtanh.pop %v946
        %v1468 = vtanh.pop %v950
        %v1469 = vtanh.pop %v952
        %v1470 = vtanh.pop %v956
        %v1471 = vtanh.pop %v958
        %v1472 = vtanh.pop %v962
        %v1473 = vtanh.pop %v964
        %v1474 = vtanh.pop %v968
        %v1475 = vtanh.pop %v970
        %v1476 = vtanh.pop %v974
        %v1477 = vtanh.pop %v976
        %v1478 = vtanh.pop %v980
        %v1479 = vtanh.pop %v982
        %v1480 = vtanh.pop %v986
        %v1481 = vtanh.pop %v988
        %v1482 = vtanh.pop %v992
        %v1483 = vtanh.pop %v994
        %v1484 = vtanh.pop %v998
        %v1485 = vtanh.pop %v1000
        %v1486 = vtanh.pop %v1004
        %v1487 = vtanh.pop %v1006
        %v1488 = vtanh.pop %v1010
        %v1489 = vtanh.pop %v1012
        %v1490 = vtanh.pop %v1016
        %v1491 = vtanh.pop %v1018
        %v1492 = vtanh.pop %v1022
        %v1493 = vtanh.pop %v1024
        %v1494 = vtanh.pop %v1028
        %v1495 = vtanh.pop %v1030
        %v1496 = vtanh.pop %v1034
        %v1497 = vtanh.pop %v1036
        %v1498 = vtanh.pop %v1040
        %v1499 = vtanh.pop %v1042
        %v1500 = vtanh.pop %v1046
        %v1501 = vtanh.pop %v1048
        %v1502 = vtanh.pop %v1052
        %v1503 = vtanh.pop %v1054
        %v1504 = vtanh.pop %v1058
        %v1505 = vtanh.pop %v1060
        %v1506 = vtanh.pop %v1064
        %v1507 = vtanh.pop %v1066
        %v1508 = vtanh.pop %v1070
        %v1509 = vtanh.pop %v1072
        %v1510 = vtanh.pop %v1076
        %v1511 = vtanh.pop %v1078
        %v1512 = vtanh.pop %v1082
        %v1513 = vtanh.pop %v1084
        %v1514 = vtanh.pop %v1088
        %v1515 = vtanh.pop %v1090
        %v1516 = vtanh.pop %v1094
        %v1517 = vtanh.pop %v1096
        %v1518 = vtanh.pop %v1100
        %v1519 = vtanh.pop %v1102
        %v1520 = vtanh.pop %v1106
        %v1521 = vtanh.pop %v1108
        %v1522 = vtanh.pop %v1112
        %v1523 = vtanh.pop %v1114
        %v1524 = vtanh.pop %v1118
        %v1525 = vtanh.pop %v1120
        %v1526 = vtanh.pop %v1124
        %v1527 = vtanh.pop %v1126
        %v1528 = vtanh.pop %v1130
        %v1529 = vtanh.pop %v1132
        %v1530 = vtanh.pop %v1136
        %v1531 = vtanh.pop %v1138
        %v1532 = vtanh.pop %v1142
        %v1533 = vtanh.pop %v1144
        %v1534 = vtanh.pop %v1148
        %v1535 = vtanh.pop %v1150
        %v1536 = vtanh.pop %v1154
        %v1537 = vtanh.pop %v1156
        %v1538 = vtanh.pop %v1160
        %v1539 = vtanh.pop %v1162
        %v1540 = vtanh.pop %v1166
        %v1541 = vtanh.pop %v1168
        %v1542 = vtanh.pop %v1172
        %v1543 = vtanh.pop %v1174
        %v1544 = vtanh.pop %v1178
        %v1545 = vtanh.pop %v1180
        %v1546 = vtanh.pop %v1184
        %v1547 = vtanh.pop %v1186
        %v1548 = vtanh.pop %v1190
        %v1549 = vtanh.pop %v1192
        %v1550 = vtanh.pop %v1196
        %v1551 = vtanh.pop %v1198
        %v1552 = vtanh.pop %v1202
        %v1553 = vtanh.pop %v1204
        %v1554 = vtanh.pop %v1208
        %v1555 = vtanh.pop %v1210
        %v1556 = vtanh.pop %v1214
        %v1557 = vtanh.pop %v1216
        %v1558 = vtanh.pop %v1220
        %v1559 = vtanh.pop %v1222
        %v1560 = vtanh.pop %v1226
        %v1561 = vtanh.pop %v1228
        %v1562 = vtanh.pop %v1232
        %v1563 = vtanh.pop %v1234
        %v1564 = vtanh.pop %v1238
        %v1565 = vtanh.pop %v1240
        %v1566 = vtanh.pop %v1244
        %v1567 = vtanh.pop %v1246
        %v1568 = vtanh.pop %v1250
        %v1569 = vtanh.pop %v1252
        %v1570 = vtanh.pop %v1256
        %v1571 = vtanh.pop %v1258
        %v1572 = vtanh.pop %v1262
        %v1573 = vtanh.pop %v1264
        %v1574 = vtanh.pop %v1268
        %v1575 = vtanh.pop %v1270
        %v1576 = vtanh.pop %v1274
        %v1577 = vtanh.pop %v1276
        %v1578 = vtanh.pop %v1280
        %v1579 = vtanh.pop %v1282
        %v1580 = vtanh.pop %v1286
        %v1581 = vtanh.pop %v1288
        %v1582 = vtanh.pop %v1292
        %v1583 = vtanh.pop %v1294
        %v1584 = vtanh.pop %v1298
        %v1585 = vtanh.pop %v1300
        %v1586 = vtanh.pop %v1304
        %v1587 = vtanh.pop %v1306
        %v1588 = vtanh.pop %v1310
        %v1589 = vtanh.pop %v1312
        %v1590 = vtanh.pop %v1316
        %v1591 = vtanh.pop %v1318
        %v1592 = vtanh.pop %v1322
        %v1593 = vtanh.pop %v1324
        %v1594 = vtanh.pop %v1328
        %v1595 = vtanh.pop %v1330
        %v1596 = vtanh.pop %v1334
        %v1597 = vtanh.pop %v1336
        %v1598 = vtanh.pop %v1340
        %v1599 = vtanh.pop %v1342
        %v1600 = vld [vmem:[%s3] sm:$0xff]
        %v1601 = vld [vmem:[%s3 + $0x8] sm:$0xff]
        %v1602 = vld [vmem:[%s3 + $0x10] sm:$0xff]
        %v1603 = vld [vmem:[%s3 + $0x18] sm:$0xff]
        %v1604 = vld [vmem:[%s3 + $0x20] sm:$0xff]
        %v1605 = vld [vmem:[%s3 + $0x28] sm:$0xff]
        %v1606 = vld [vmem:[%s3 + $0x30] sm:$0xff]
        %v1607 = vld [vmem:[%s3 + $0x38] sm:$0xff]
        %v1608 = vld [vmem:[%s3 + $0x40] sm:$0xff]
        %v1609 = vld [vmem:[%s3 + $0x48] sm:$0xff]
        %v1610 = vld [vmem:[%s3 + $0x50] sm:$0xff]
        %v1611 = vld [vmem:[%s3 + $0x58] sm:$0xff]
        %v1612 = vld [vmem:[%s3 + $0x60] sm:$0xff]
        %v1613 = vld [vmem:[%s3 + $0x68] sm:$0xff]
        %v1614 = vld [vmem:[%s3 + $0x70] sm:$0xff]
        %v1615 = vld [vmem:[%s3 + $0x78] sm:$0xff]
        %v1616 = vld [vmem:[%s4] sm:$0x1]
        %v1618 = vlaneseq
        %v1619 = vshrl.u32 %v1618, 7
        %v1620 = vsub.s32 0, %v1619
        %v1621 = vrot.slane %v1616, %v1620
        %1623 = vmatprep.subr.mxu0 0.0
        %1624 = vmatpush1.msra.mxu0 %v1600
        %1625 = vmatprep.subr.mxu0 0.0
        %1626 = vmatpush1.msra.mxu0 %v1601
        %1627 = vmatprep.subr.mxu0 0.0
        %1628 = vmatpush1.msra.mxu0 %v1602
        %1629 = vmatprep.subr.mxu0 0.0
        %1630 = vmatpush1.msra.mxu0 %v1603
        %1631 = vmatprep.subr.mxu0 0.0
        %1632 = vmatpush1.msra.mxu0 %v1604
        %1633 = vmatprep.subr.mxu0 0.0
        %1634 = vmatpush1.msra.mxu0 %v1605
        %1635 = vmatprep.subr.mxu0 0.0
        %1636 = vmatpush1.msra.mxu0 %v1606
        %1637 = vmatprep.subr.mxu0 0.0
        %1638 = vmatpush1.msra.mxu0 %v1607
        %1639 = vmatprep.subr.mxu0 0.0
        %1640 = vmatpush1.msra.mxu0 %v1608
        %1641 = vmatprep.subr.mxu0 0.0
        %1642 = vmatpush1.msra.mxu0 %v1609
        %1643 = vmatprep.subr.mxu0 0.0
        %1644 = vmatpush1.msra.mxu0 %v1610
        %1645 = vmatprep.subr.mxu0 0.0
        %1646 = vmatpush1.msra.mxu0 %v1611
        %1647 = vmatprep.subr.mxu0 0.0
        %1648 = vmatpush1.msra.mxu0 %v1612
        %1649 = vmatprep.subr.mxu0 0.0
        %1650 = vmatpush1.msra.mxu0 %v1613
        %1651 = vmatprep.subr.mxu0 0.0
        %1652 = vmatpush1.msra.mxu0 %v1614
        %1653 = vmatprep.subr.mxu0 0.0
        %1654 = vmatpush1.msra.mxu0 %v1615
        %1655 = vmatprep.subr.mxu0 0.0
        %1656 = vmatpush1.msra.mxu0 0.0
        %1657 = vmatprep.subr.mxu0 0.0
        %1658 = vmatpush1.msra.mxu0 0.0
        %1659 = vmatprep.subr.mxu0 0.0
        %1660 = vmatpush1.msra.mxu0 0.0
        %1661 = vmatprep.subr.mxu0 0.0
        %1662 = vmatpush1.msra.mxu0 0.0
        %1663 = vmatprep.subr.mxu0 0.0
        %1664 = vmatpush1.msra.mxu0 0.0
        %1665 = vmatprep.subr.mxu0 0.0
        %1666 = vmatpush1.msra.mxu0 0.0
        %1667 = vmatprep.subr.mxu0 0.0
        %1668 = vmatpush1.msra.mxu0 0.0
        %1669 = vmatprep.subr.mxu0 0.0
        %1670 = vmatpush1.msra.mxu0 0.0
        %1671 = vmatprep.subr.mxu0 0.0
        %1672 = vmatpush1.msra.mxu0 0.0
        %1673 = vmatprep.subr.mxu0 0.0
        %1674 = vmatpush1.msra.mxu0 0.0
        %1675 = vmatprep.subr.mxu0 0.0
        %1676 = vmatpush1.msra.mxu0 0.0
        %1677 = vmatprep.subr.mxu0 0.0
        %1678 = vmatpush1.msra.mxu0 0.0
        %1679 = vmatprep.subr.mxu0 0.0
        %1680 = vmatpush1.msra.mxu0 0.0
        %1681 = vmatprep.subr.mxu0 0.0
        %1682 = vmatpush1.msra.mxu0 0.0
        %1683 = vmatprep.subr.mxu0 0.0
        %1684 = vmatpush1.msra.mxu0 0.0
        %1685 = vmatprep.subr.mxu0 0.0
        %1686 = vmatpush1.msra.mxu0 0.0
        %1687 = vmatprep.mubr.f32.mxu0 0.0
        %1688 = vmatmul.mubr.f32.gmra.mrb[0].mxu0 %v1344
        %v1689 = vpop.f32.mrb[0].mxu0
        %v1690 = vadd.f32 %v1621, %v1689
        %v1691 = vpop.f32.mrb[0].mxu0
        %1692 = vmatprep.mubr.f32.mxu0 0.0
        %1693 = vmatmul.mubr.f32.gmra.mrb[0].mxu0 %v1346
        %v1694 = vpop.f32.mrb[0].mxu0
        %v1695 = vadd.f32 %v1621, %v1694
        %v1696 = vpop.f32.mrb[0].mxu0
        %1697 = vmatprep.mubr.f32.mxu0 0.0
        %1698 = vmatmul.mubr.f32.gmra.mrb[0].mxu0 %v1348
        %v1699 = vpop.f32.mrb[0].mxu0
        %v1700 = vadd.f32 %v1621, %v1699
        %v1701 = vpop.f32.mrb[0].mxu0
        %1702 = vmatprep.mubr.f32.mxu0 0.0
        %1703 = vmatmul.mubr.f32.gmra.mrb[0].mxu0 %v1350
        %v1704 = vpop.f32.mrb[0].mxu0
        %v1705 = vadd.f32 %v1621, %v1704
        %v1706 = vpop.f32.mrb[0].mxu0
        %1707 = vmatprep.mubr.f32.mxu0 0.0
        %1708 = vmatmul.mubr.f32.gmra.mrb[0].mxu0 %v1352
        %v1709 = vpop.f32.mrb[0].mxu0
        %v1710 = vadd.f32 %v1621, %v1709
        %v1711 = vpop.f32.mrb[0].mxu0
        %1712 = vmatprep.mubr.f32.mxu0 0.0
        %1713 = vmatmul.mubr.f32.gmra.mrb[0].mxu0 %v1354
        %v1714 = vpop.f32.mrb[0].mxu0
        %v1715 = vadd.f32 %v1621, %v1714
        %v1716 = vpop.f32.mrb[0].mxu0
        %1717 = vmatprep.mubr.f32.mxu0 0.0
        %1718 = vmatmul.mubr.f32.gmra.mrb[0].mxu0 %v1356
        %v1719 = vpop.f32.mrb[0].mxu0
        %v1720 = vadd.f32 %v1621, %v1719
        %v1721 = vpop.f32.mrb[0].mxu0
        %1722 = vmatprep.mubr.f32.mxu0 0.0
        %1723 = vmatmul.mubr.f32.gmra.mrb[0].mxu0 %v1358
        %v1724 = vpop.f32.mrb[0].mxu0
        %v1725 = vadd.f32 %v1621, %v1724
        %v1726 = vpop.f32.mrb[0].mxu0
        %1727 = vmatprep.mubr.f32.mxu0 0.0
        %1728 = vmatmul.mubr.f32.gmra.mrb[0].mxu0 %v1360
        %v1729 = vpop.f32.mrb[0].mxu0
        %v1730 = vadd.f32 %v1621, %v1729
        %v1731 = vpop.f32.mrb[0].mxu0
        %1732 = vmatprep.mubr.f32.mxu0 0.0
        %1733 = vmatmul.mubr.f32.gmra.mrb[0].mxu0 %v1362
        %v1734 = vpop.f32.mrb[0].mxu0
        %v1735 = vadd.f32 %v1621, %v1734
        %v1736 = vpop.f32.mrb[0].mxu0
        %1737 = vmatprep.mubr.f32.mxu0 0.0
        %1738 = vmatmul.mubr.f32.gmra.mrb[0].mxu0 %v1364
        %v1739 = vpop.f32.mrb[0].mxu0
        %v1740 = vadd.f32 %v1621, %v1739
        %v1741 = vpop.f32.mrb[0].mxu0
        %1742 = vmatprep.mubr.f32.mxu0 0.0
        %1743 = vmatmul.mubr.f32.gmra.mrb[0].mxu0 %v1366
        %v1744 = vpop.f32.mrb[0].mxu0
        %v1745 = vadd.f32 %v1621, %v1744
        %v1746 = vpop.f32.mrb[0].mxu0
        %1747 = vmatprep.mubr.f32.mxu0 0.0
        %1748 = vmatmul.mubr.f32.gmra.mrb[0].mxu0 %v1368
        %v1749 = vpop.f32.mrb[0].mxu0
        %v1750 = vadd.f32 %v1621, %v1749
        %v1751 = vpop.f32.mrb[0].mxu0
        %1752 = vmatprep.mubr.f32.mxu0 0.0
        %1753 = vmatmul.mubr.f32.gmra.mrb[0].mxu0 %v1370
        %v1754 = vpop.f32.mrb[0].mxu0
        %v1755 = vadd.f32 %v1621, %v1754
        %v1756 = vpop.f32.mrb[0].mxu0
        %1757 = vmatprep.mubr.f32.mxu0 0.0
        %1758 = vmatmul.mubr.f32.gmra.mrb[0].mxu0 %v1372
        %v1759 = vpop.f32.mrb[0].mxu0
        %v1760 = vadd.f32 %v1621, %v1759
        %v1761 = vpop.f32.mrb[0].mxu0
        %1762 = vmatprep.mubr.f32.mxu0 0.0
        %1763 = vmatmul.mubr.f32.gmra.mrb[0].mxu0 %v1374
        %v1764 = vpop.f32.mrb[0].mxu0
        %v1765 = vadd.f32 %v1621, %v1764
        %v1766 = vpop.f32.mrb[0].mxu0
        %1767 = vmatprep.mubr.f32.mxu0 0.0
        %1768 = vmatmul.mubr.f32.gmra.mrb[0].mxu0 %v1376
        %v1769 = vpop.f32.mrb[0].mxu0
        %v1770 = vadd.f32 %v1621, %v1769
        %v1771 = vpop.f32.mrb[0].mxu0
        %1772 = vmatprep.mubr.f32.mxu0 0.0
        %1773 = vmatmul.mubr.f32.gmra.mrb[0].mxu0 %v1378
        %v1774 = vpop.f32.mrb[0].mxu0
        %v1775 = vadd.f32 %v1621, %v1774
        %v1776 = vpop.f32.mrb[0].mxu0
        %1777 = vmatprep.mubr.f32.mxu0 0.0
        %1778 = vmatmul.mubr.f32.gmra.mrb[0].mxu0 %v1380
        %v1779 = vpop.f32.mrb[0].mxu0
        %v1780 = vadd.f32 %v1621, %v1779
        %v1781 = vpop.f32.mrb[0].mxu0
        %1782 = vmatprep.mubr.f32.mxu0 0.0
        %1783 = vmatmul.mubr.f32.gmra.mrb[0].mxu0 %v1382
        %v1784 = vpop.f32.mrb[0].mxu0
        %v1785 = vadd.f32 %v1621, %v1784
        %v1786 = vpop.f32.mrb[0].mxu0
        %1787 = vmatprep.mubr.f32.mxu0 0.0
        %1788 = vmatmul.mubr.f32.gmra.mrb[0].mxu0 %v1384
        %v1789 = vpop.f32.mrb[0].mxu0
        %v1790 = vadd.f32 %v1621, %v1789
        %v1791 = vpop.f32.mrb[0].mxu0
        %1792 = vmatprep.mubr.f32.mxu0 0.0
        %1793 = vmatmul.mubr.f32.gmra.mrb[0].mxu0 %v1386
        %v1794 = vpop.f32.mrb[0].mxu0
        %v1795 = vadd.f32 %v1621, %v1794
        %v1796 = vpop.f32.mrb[0].mxu0
        %1797 = vmatprep.mubr.f32.mxu0 0.0
        %1798 = vmatmul.mubr.f32.gmra.mrb[0].mxu0 %v1388
        %v1799 = vpop.f32.mrb[0].mxu0
        %v1800 = vadd.f32 %v1621, %v1799
        %v1801 = vpop.f32.mrb[0].mxu0
        %1802 = vmatprep.mubr.f32.mxu0 0.0
        %1803 = vmatmul.mubr.f32.gmra.mrb[0].mxu0 %v1390
        %v1804 = vpop.f32.mrb[0].mxu0
        %v1805 = vadd.f32 %v1621, %v1804
        %v1806 = vpop.f32.mrb[0].mxu0
        %1807 = vmatprep.mubr.f32.mxu0 0.0
        %1808 = vmatmul.mubr.f32.gmra.mrb[0].mxu0 %v1392
        %v1809 = vpop.f32.mrb[0].mxu0
        %v1810 = vadd.f32 %v1621, %v1809
        %v1811 = vpop.f32.mrb[0].mxu0
        %1812 = vmatprep.mubr.f32.mxu0 0.0
        %1813 = vmatmul.mubr.f32.gmra.mrb[0].mxu0 %v1394
        %v1814 = vpop.f32.mrb[0].mxu0
        %v1815 = vadd.f32 %v1621, %v1814
        %v1816 = vpop.f32.mrb[0].mxu0
        %1817 = vmatprep.mubr.f32.mxu0 0.0
        %1818 = vmatmul.mubr.f32.gmra.mrb[0].mxu0 %v1396
        %v1819 = vpop.f32.mrb[0].mxu0
        %v1820 = vadd.f32 %v1621, %v1819
        %v1821 = vpop.f32.mrb[0].mxu0
        %1822 = vmatprep.mubr.f32.mxu0 0.0
        %1823 = vmatmul.mubr.f32.gmra.mrb[0].mxu0 %v1398
        %v1824 = vpop.f32.mrb[0].mxu0
        %v1825 = vadd.f32 %v1621, %v1824
        %v1826 = vpop.f32.mrb[0].mxu0
        %1827 = vmatprep.mubr.f32.mxu0 0.0
        %1828 = vmatmul.mubr.f32.gmra.mrb[0].mxu0 %v1400
        %v1829 = vpop.f32.mrb[0].mxu0
        %v1830 = vadd.f32 %v1621, %v1829
        %v1831 = vpop.f32.mrb[0].mxu0
        %1832 = vmatprep.mubr.f32.mxu0 0.0
        %1833 = vmatmul.mubr.f32.gmra.mrb[0].mxu0 %v1402
        %v1834 = vpop.f32.mrb[0].mxu0
        %v1835 = vadd.f32 %v1621, %v1834
        %v1836 = vpop.f32.mrb[0].mxu0
        %1837 = vmatprep.mubr.f32.mxu0 0.0
        %1838 = vmatmul.mubr.f32.gmra.mrb[0].mxu0 %v1404
        %v1839 = vpop.f32.mrb[0].mxu0
        %v1840 = vadd.f32 %v1621, %v1839
        %v1841 = vpop.f32.mrb[0].mxu0
        %1842 = vmatprep.mubr.f32.mxu0 0.0
        %1843 = vmatmul.mubr.f32.gmra.mrb[0].mxu0 %v1406
        %v1844 = vpop.f32.mrb[0].mxu0
        %v1845 = vadd.f32 %v1621, %v1844
        %v1846 = vpop.f32.mrb[0].mxu0
        %1847 = vmatprep.mubr.f32.mxu0 0.0
        %1848 = vmatmul.mubr.f32.gmra.mrb[0].mxu0 %v1408
        %v1849 = vpop.f32.mrb[0].mxu0
        %v1850 = vadd.f32 %v1621, %v1849
        %v1851 = vpop.f32.mrb[0].mxu0
        %1852 = vmatprep.mubr.f32.mxu0 0.0
        %1853 = vmatmul.mubr.f32.gmra.mrb[0].mxu0 %v1410
        %v1854 = vpop.f32.mrb[0].mxu0
        %v1855 = vadd.f32 %v1621, %v1854
        %v1856 = vpop.f32.mrb[0].mxu0
        %1857 = vmatprep.mubr.f32.mxu0 0.0
        %1858 = vmatmul.mubr.f32.gmra.mrb[0].mxu0 %v1412
        %v1859 = vpop.f32.mrb[0].mxu0
        %v1860 = vadd.f32 %v1621, %v1859
        %v1861 = vpop.f32.mrb[0].mxu0
        %1862 = vmatprep.mubr.f32.mxu0 0.0
        %1863 = vmatmul.mubr.f32.gmra.mrb[0].mxu0 %v1414
        %v1864 = vpop.f32.mrb[0].mxu0
        %v1865 = vadd.f32 %v1621, %v1864
        %v1866 = vpop.f32.mrb[0].mxu0
        %1867 = vmatprep.mubr.f32.mxu0 0.0
        %1868 = vmatmul.mubr.f32.gmra.mrb[0].mxu0 %v1416
        %v1869 = vpop.f32.mrb[0].mxu0
        %v1870 = vadd.f32 %v1621, %v1869
        %v1871 = vpop.f32.mrb[0].mxu0
        %1872 = vmatprep.mubr.f32.mxu0 0.0
        %1873 = vmatmul.mubr.f32.gmra.mrb[0].mxu0 %v1418
        %v1874 = vpop.f32.mrb[0].mxu0
        %v1875 = vadd.f32 %v1621, %v1874
        %v1876 = vpop.f32.mrb[0].mxu0
        %1877 = vmatprep.mubr.f32.mxu0 0.0
        %1878 = vmatmul.mubr.f32.gmra.mrb[0].mxu0 %v1420
        %v1879 = vpop.f32.mrb[0].mxu0
        %v1880 = vadd.f32 %v1621, %v1879
        %v1881 = vpop.f32.mrb[0].mxu0
        %1882 = vmatprep.mubr.f32.mxu0 0.0
        %1883 = vmatmul.mubr.f32.gmra.mrb[0].mxu0 %v1422
        %v1884 = vpop.f32.mrb[0].mxu0
        %v1885 = vadd.f32 %v1621, %v1884
        %v1886 = vpop.f32.mrb[0].mxu0
        %1887 = vmatprep.mubr.f32.mxu0 0.0
        %1888 = vmatmul.mubr.f32.gmra.mrb[0].mxu0 %v1424
        %v1889 = vpop.f32.mrb[0].mxu0
        %v1890 = vadd.f32 %v1621, %v1889
        %v1891 = vpop.f32.mrb[0].mxu0
        %1892 = vmatprep.mubr.f32.mxu0 0.0
        %1893 = vmatmul.mubr.f32.gmra.mrb[0].mxu0 %v1426
        %v1894 = vpop.f32.mrb[0].mxu0
        %v1895 = vadd.f32 %v1621, %v1894
        %v1896 = vpop.f32.mrb[0].mxu0
        %1897 = vmatprep.mubr.f32.mxu0 0.0
        %1898 = vmatmul.mubr.f32.gmra.mrb[0].mxu0 %v1428
        %v1899 = vpop.f32.mrb[0].mxu0
        %v1900 = vadd.f32 %v1621, %v1899
        %v1901 = vpop.f32.mrb[0].mxu0
        %1902 = vmatprep.mubr.f32.mxu0 0.0
        %1903 = vmatmul.mubr.f32.gmra.mrb[0].mxu0 %v1430
        %v1904 = vpop.f32.mrb[0].mxu0
        %v1905 = vadd.f32 %v1621, %v1904
        %v1906 = vpop.f32.mrb[0].mxu0
        %1907 = vmatprep.mubr.f32.mxu0 0.0
        %1908 = vmatmul.mubr.f32.gmra.mrb[0].mxu0 %v1432
        %v1909 = vpop.f32.mrb[0].mxu0
        %v1910 = vadd.f32 %v1621, %v1909
        %v1911 = vpop.f32.mrb[0].mxu0
        %1912 = vmatprep.mubr.f32.mxu0 0.0
        %1913 = vmatmul.mubr.f32.gmra.mrb[0].mxu0 %v1434
        %v1914 = vpop.f32.mrb[0].mxu0
        %v1915 = vadd.f32 %v1621, %v1914
        %v1916 = vpop.f32.mrb[0].mxu0
        %1917 = vmatprep.mubr.f32.mxu0 0.0
        %1918 = vmatmul.mubr.f32.gmra.mrb[0].mxu0 %v1436
        %v1919 = vpop.f32.mrb[0].mxu0
        %v1920 = vadd.f32 %v1621, %v1919
        %v1921 = vpop.f32.mrb[0].mxu0
        %1922 = vmatprep.mubr.f32.mxu0 0.0
        %1923 = vmatmul.mubr.f32.gmra.mrb[0].mxu0 %v1438
        %v1924 = vpop.f32.mrb[0].mxu0
        %v1925 = vadd.f32 %v1621, %v1924
        %v1926 = vpop.f32.mrb[0].mxu0
        %1927 = vmatprep.mubr.f32.mxu0 0.0
        %1928 = vmatmul.mubr.f32.gmra.mrb[0].mxu0 %v1440
        %v1929 = vpop.f32.mrb[0].mxu0
        %v1930 = vadd.f32 %v1621, %v1929
        %v1931 = vpop.f32.mrb[0].mxu0
        %1932 = vmatprep.mubr.f32.mxu0 0.0
        %1933 = vmatmul.mubr.f32.gmra.mrb[0].mxu0 %v1442
        %v1934 = vpop.f32.mrb[0].mxu0
        %v1935 = vadd.f32 %v1621, %v1934
        %v1936 = vpop.f32.mrb[0].mxu0
        %1937 = vmatprep.mubr.f32.mxu0 0.0
        %1938 = vmatmul.mubr.f32.gmra.mrb[0].mxu0 %v1444
        %v1939 = vpop.f32.mrb[0].mxu0
        %v1940 = vadd.f32 %v1621, %v1939
        %v1941 = vpop.f32.mrb[0].mxu0
        %1942 = vmatprep.mubr.f32.mxu0 0.0
        %1943 = vmatmul.mubr.f32.gmra.mrb[0].mxu0 %v1446
        %v1944 = vpop.f32.mrb[0].mxu0
        %v1945 = vadd.f32 %v1621, %v1944
        %v1946 = vpop.f32.mrb[0].mxu0
        %1947 = vmatprep.mubr.f32.mxu0 0.0
        %1948 = vmatmul.mubr.f32.gmra.mrb[0].mxu0 %v1448
        %v1949 = vpop.f32.mrb[0].mxu0
        %v1950 = vadd.f32 %v1621, %v1949
        %v1951 = vpop.f32.mrb[0].mxu0
        %1952 = vmatprep.mubr.f32.mxu0 0.0
        %1953 = vmatmul.mubr.f32.gmra.mrb[0].mxu0 %v1450
        %v1954 = vpop.f32.mrb[0].mxu0
        %v1955 = vadd.f32 %v1621, %v1954
        %v1956 = vpop.f32.mrb[0].mxu0
        %1957 = vmatprep.mubr.f32.mxu0 0.0
        %1958 = vmatmul.mubr.f32.gmra.mrb[0].mxu0 %v1452
        %v1959 = vpop.f32.mrb[0].mxu0
        %v1960 = vadd.f32 %v1621, %v1959
        %v1961 = vpop.f32.mrb[0].mxu0
        %1962 = vmatprep.mubr.f32.mxu0 0.0
        %1963 = vmatmul.mubr.f32.gmra.mrb[0].mxu0 %v1454
        %v1964 = vpop.f32.mrb[0].mxu0
        %v1965 = vadd.f32 %v1621, %v1964
        %v1966 = vpop.f32.mrb[0].mxu0
        %1967 = vmatprep.mubr.f32.mxu0 0.0
        %1968 = vmatmul.mubr.f32.gmra.mrb[0].mxu0 %v1456
        %v1969 = vpop.f32.mrb[0].mxu0
        %v1970 = vadd.f32 %v1621, %v1969
        %v1971 = vpop.f32.mrb[0].mxu0
        %1972 = vmatprep.mubr.f32.mxu0 0.0
        %1973 = vmatmul.mubr.f32.gmra.mrb[0].mxu0 %v1458
        %v1974 = vpop.f32.mrb[0].mxu0
        %v1975 = vadd.f32 %v1621, %v1974
        %v1976 = vpop.f32.mrb[0].mxu0
        %1977 = vmatprep.mubr.f32.mxu0 0.0
        %1978 = vmatmul.mubr.f32.gmra.mrb[0].mxu0 %v1460
        %v1979 = vpop.f32.mrb[0].mxu0
        %v1980 = vadd.f32 %v1621, %v1979
        %v1981 = vpop.f32.mrb[0].mxu0
        %1982 = vmatprep.mubr.f32.mxu0 0.0
        %1983 = vmatmul.mubr.f32.gmra.mrb[0].mxu0 %v1462
        %v1984 = vpop.f32.mrb[0].mxu0
        %v1985 = vadd.f32 %v1621, %v1984
        %v1986 = vpop.f32.mrb[0].mxu0
        %1987 = vmatprep.mubr.f32.mxu0 0.0
        %1988 = vmatmul.mubr.f32.gmra.mrb[0].mxu0 %v1464
        %v1989 = vpop.f32.mrb[0].mxu0
        %v1990 = vadd.f32 %v1621, %v1989
        %v1991 = vpop.f32.mrb[0].mxu0
        %1992 = vmatprep.mubr.f32.mxu0 0.0
        %1993 = vmatmul.mubr.f32.gmra.mrb[0].mxu0 %v1466
        %v1994 = vpop.f32.mrb[0].mxu0
        %v1995 = vadd.f32 %v1621, %v1994
        %v1996 = vpop.f32.mrb[0].mxu0
        %1997 = vmatprep.mubr.f32.mxu0 0.0
        %1998 = vmatmul.mubr.f32.gmra.mrb[0].mxu0 %v1468
        %v1999 = vpop.f32.mrb[0].mxu0
        %v2000 = vadd.f32 %v1621, %v1999
        %v2001 = vpop.f32.mrb[0].mxu0
        %2002 = vmatprep.mubr.f32.mxu0 0.0
        %2003 = vmatmul.mubr.f32.gmra.mrb[0].mxu0 %v1470
        %v2004 = vpop.f32.mrb[0].mxu0
        %v2005 = vadd.f32 %v1621, %v2004
        %v2006 = vpop.f32.mrb[0].mxu0
        %2007 = vmatprep.mubr.f32.mxu0 0.0
        %2008 = vmatmul.mubr.f32.gmra.mrb[0].mxu0 %v1472
        %v2009 = vpop.f32.mrb[0].mxu0
        %v2010 = vadd.f32 %v1621, %v2009
        %v2011 = vpop.f32.mrb[0].mxu0
        %2012 = vmatprep.mubr.f32.mxu0 0.0
        %2013 = vmatmul.mubr.f32.gmra.mrb[0].mxu0 %v1474
        %v2014 = vpop.f32.mrb[0].mxu0
        %v2015 = vadd.f32 %v1621, %v2014
        %v2016 = vpop.f32.mrb[0].mxu0
        %2017 = vmatprep.mubr.f32.mxu0 0.0
        %2018 = vmatmul.mubr.f32.gmra.mrb[0].mxu0 %v1476
        %v2019 = vpop.f32.mrb[0].mxu0
        %v2020 = vadd.f32 %v1621, %v2019
        %v2021 = vpop.f32.mrb[0].mxu0
        %2022 = vmatprep.mubr.f32.mxu0 0.0
        %2023 = vmatmul.mubr.f32.gmra.mrb[0].mxu0 %v1478
        %v2024 = vpop.f32.mrb[0].mxu0
        %v2025 = vadd.f32 %v1621, %v2024
        %v2026 = vpop.f32.mrb[0].mxu0
        %2027 = vmatprep.mubr.f32.mxu0 0.0
        %2028 = vmatmul.mubr.f32.gmra.mrb[0].mxu0 %v1480
        %v2029 = vpop.f32.mrb[0].mxu0
        %v2030 = vadd.f32 %v1621, %v2029
        %v2031 = vpop.f32.mrb[0].mxu0
        %2032 = vmatprep.mubr.f32.mxu0 0.0
        %2033 = vmatmul.mubr.f32.gmra.mrb[0].mxu0 %v1482
        %v2034 = vpop.f32.mrb[0].mxu0
        %v2035 = vadd.f32 %v1621, %v2034
        %v2036 = vpop.f32.mrb[0].mxu0
        %2037 = vmatprep.mubr.f32.mxu0 0.0
        %2038 = vmatmul.mubr.f32.gmra.mrb[0].mxu0 %v1484
        %v2039 = vpop.f32.mrb[0].mxu0
        %v2040 = vadd.f32 %v1621, %v2039
        %v2041 = vpop.f32.mrb[0].mxu0
        %2042 = vmatprep.mubr.f32.mxu0 0.0
        %2043 = vmatmul.mubr.f32.gmra.mrb[0].mxu0 %v1486
        %v2044 = vpop.f32.mrb[0].mxu0
        %v2045 = vadd.f32 %v1621, %v2044
        %v2046 = vpop.f32.mrb[0].mxu0
        %2047 = vmatprep.mubr.f32.mxu0 0.0
        %2048 = vmatmul.mubr.f32.gmra.mrb[0].mxu0 %v1488
        %v2049 = vpop.f32.mrb[0].mxu0
        %v2050 = vadd.f32 %v1621, %v2049
        %v2051 = vpop.f32.mrb[0].mxu0
        %2052 = vmatprep.mubr.f32.mxu0 0.0
        %2053 = vmatmul.mubr.f32.gmra.mrb[0].mxu0 %v1490
        %v2054 = vpop.f32.mrb[0].mxu0
        %v2055 = vadd.f32 %v1621, %v2054
        %v2056 = vpop.f32.mrb[0].mxu0
        %2057 = vmatprep.mubr.f32.mxu0 0.0
        %2058 = vmatmul.mubr.f32.gmra.mrb[0].mxu0 %v1492
        %v2059 = vpop.f32.mrb[0].mxu0
        %v2060 = vadd.f32 %v1621, %v2059
        %v2061 = vpop.f32.mrb[0].mxu0
        %2062 = vmatprep.mubr.f32.mxu0 0.0
        %2063 = vmatmul.mubr.f32.gmra.mrb[0].mxu0 %v1494
        %v2064 = vpop.f32.mrb[0].mxu0
        %v2065 = vadd.f32 %v1621, %v2064
        %v2066 = vpop.f32.mrb[0].mxu0
        %2067 = vmatprep.mubr.f32.mxu0 0.0
        %2068 = vmatmul.mubr.f32.gmra.mrb[0].mxu0 %v1496
        %v2069 = vpop.f32.mrb[0].mxu0
        %v2070 = vadd.f32 %v1621, %v2069
        %v2071 = vpop.f32.mrb[0].mxu0
        %2072 = vmatprep.mubr.f32.mxu0 0.0
        %2073 = vmatmul.mubr.f32.gmra.mrb[0].mxu0 %v1498
        %v2074 = vpop.f32.mrb[0].mxu0
        %v2075 = vadd.f32 %v1621, %v2074
        %v2076 = vpop.f32.mrb[0].mxu0
        %2077 = vmatprep.mubr.f32.mxu0 0.0
        %2078 = vmatmul.mubr.f32.gmra.mrb[0].mxu0 %v1500
        %v2079 = vpop.f32.mrb[0].mxu0
        %v2080 = vadd.f32 %v1621, %v2079
        %v2081 = vpop.f32.mrb[0].mxu0
        %2082 = vmatprep.mubr.f32.mxu0 0.0
        %2083 = vmatmul.mubr.f32.gmra.mrb[0].mxu0 %v1502
        %v2084 = vpop.f32.mrb[0].mxu0
        %v2085 = vadd.f32 %v1621, %v2084
        %v2086 = vpop.f32.mrb[0].mxu0
        %2087 = vmatprep.mubr.f32.mxu0 0.0
        %2088 = vmatmul.mubr.f32.gmra.mrb[0].mxu0 %v1504
        %v2089 = vpop.f32.mrb[0].mxu0
        %v2090 = vadd.f32 %v1621, %v2089
        %v2091 = vpop.f32.mrb[0].mxu0
        %2092 = vmatprep.mubr.f32.mxu0 0.0
        %2093 = vmatmul.mubr.f32.gmra.mrb[0].mxu0 %v1506
        %v2094 = vpop.f32.mrb[0].mxu0
        %v2095 = vadd.f32 %v1621, %v2094
        %v2096 = vpop.f32.mrb[0].mxu0
        %2097 = vmatprep.mubr.f32.mxu0 0.0
        %2098 = vmatmul.mubr.f32.gmra.mrb[0].mxu0 %v1508
        %v2099 = vpop.f32.mrb[0].mxu0
        %v2100 = vadd.f32 %v1621, %v2099
        %v2101 = vpop.f32.mrb[0].mxu0
        %2102 = vmatprep.mubr.f32.mxu0 0.0
        %2103 = vmatmul.mubr.f32.gmra.mrb[0].mxu0 %v1510
        %v2104 = vpop.f32.mrb[0].mxu0
        %v2105 = vadd.f32 %v1621, %v2104
        %v2106 = vpop.f32.mrb[0].mxu0
        %2107 = vmatprep.mubr.f32.mxu0 0.0
        %2108 = vmatmul.mubr.f32.gmra.mrb[0].mxu0 %v1512
        %v2109 = vpop.f32.mrb[0].mxu0
        %v2110 = vadd.f32 %v1621, %v2109
        %v2111 = vpop.f32.mrb[0].mxu0
        %2112 = vmatprep.mubr.f32.mxu0 0.0
        %2113 = vmatmul.mubr.f32.gmra.mrb[0].mxu0 %v1514
        %v2114 = vpop.f32.mrb[0].mxu0
        %v2115 = vadd.f32 %v1621, %v2114
        %v2116 = vpop.f32.mrb[0].mxu0
        %2117 = vmatprep.mubr.f32.mxu0 0.0
        %2118 = vmatmul.mubr.f32.gmra.mrb[0].mxu0 %v1516
        %v2119 = vpop.f32.mrb[0].mxu0
        %v2120 = vadd.f32 %v1621, %v2119
        %v2121 = vpop.f32.mrb[0].mxu0
        %2122 = vmatprep.mubr.f32.mxu0 0.0
        %2123 = vmatmul.mubr.f32.gmra.mrb[0].mxu0 %v1518
        %v2124 = vpop.f32.mrb[0].mxu0
        %v2125 = vadd.f32 %v1621, %v2124
        %v2126 = vpop.f32.mrb[0].mxu0
        %2127 = vmatprep.mubr.f32.mxu0 0.0
        %2128 = vmatmul.mubr.f32.gmra.mrb[0].mxu0 %v1520
        %v2129 = vpop.f32.mrb[0].mxu0
        %v2130 = vadd.f32 %v1621, %v2129
        %v2131 = vpop.f32.mrb[0].mxu0
        %2132 = vmatprep.mubr.f32.mxu0 0.0
        %2133 = vmatmul.mubr.f32.gmra.mrb[0].mxu0 %v1522
        %v2134 = vpop.f32.mrb[0].mxu0
        %v2135 = vadd.f32 %v1621, %v2134
        %v2136 = vpop.f32.mrb[0].mxu0
        %2137 = vmatprep.mubr.f32.mxu0 0.0
        %2138 = vmatmul.mubr.f32.gmra.mrb[0].mxu0 %v1524
        %v2139 = vpop.f32.mrb[0].mxu0
        %v2140 = vadd.f32 %v1621, %v2139
        %v2141 = vpop.f32.mrb[0].mxu0
        %2142 = vmatprep.mubr.f32.mxu0 0.0
        %2143 = vmatmul.mubr.f32.gmra.mrb[0].mxu0 %v1526
        %v2144 = vpop.f32.mrb[0].mxu0
        %v2145 = vadd.f32 %v1621, %v2144
        %v2146 = vpop.f32.mrb[0].mxu0
        %2147 = vmatprep.mubr.f32.mxu0 0.0
        %2148 = vmatmul.mubr.f32.gmra.mrb[0].mxu0 %v1528
        %v2149 = vpop.f32.mrb[0].mxu0
        %v2150 = vadd.f32 %v1621, %v2149
        %v2151 = vpop.f32.mrb[0].mxu0
        %2152 = vmatprep.mubr.f32.mxu0 0.0
        %2153 = vmatmul.mubr.f32.gmra.mrb[0].mxu0 %v1530
        %v2154 = vpop.f32.mrb[0].mxu0
        %v2155 = vadd.f32 %v1621, %v2154
        %v2156 = vpop.f32.mrb[0].mxu0
        %2157 = vmatprep.mubr.f32.mxu0 0.0
        %2158 = vmatmul.mubr.f32.gmra.mrb[0].mxu0 %v1532
        %v2159 = vpop.f32.mrb[0].mxu0
        %v2160 = vadd.f32 %v1621, %v2159
        %v2161 = vpop.f32.mrb[0].mxu0
        %2162 = vmatprep.mubr.f32.mxu0 0.0
        %2163 = vmatmul.mubr.f32.gmra.mrb[0].mxu0 %v1534
        %v2164 = vpop.f32.mrb[0].mxu0
        %v2165 = vadd.f32 %v1621, %v2164
        %v2166 = vpop.f32.mrb[0].mxu0
        %2167 = vmatprep.mubr.f32.mxu0 0.0
        %2168 = vmatmul.mubr.f32.gmra.mrb[0].mxu0 %v1536
        %v2169 = vpop.f32.mrb[0].mxu0
        %v2170 = vadd.f32 %v1621, %v2169
        %v2171 = vpop.f32.mrb[0].mxu0
        %2172 = vmatprep.mubr.f32.mxu0 0.0
        %2173 = vmatmul.mubr.f32.gmra.mrb[0].mxu0 %v1538
        %v2174 = vpop.f32.mrb[0].mxu0
        %v2175 = vadd.f32 %v1621, %v2174
        %v2176 = vpop.f32.mrb[0].mxu0
        %2177 = vmatprep.mubr.f32.mxu0 0.0
        %2178 = vmatmul.mubr.f32.gmra.mrb[0].mxu0 %v1540
        %v2179 = vpop.f32.mrb[0].mxu0
        %v2180 = vadd.f32 %v1621, %v2179
        %v2181 = vpop.f32.mrb[0].mxu0
        %2182 = vmatprep.mubr.f32.mxu0 0.0
        %2183 = vmatmul.mubr.f32.gmra.mrb[0].mxu0 %v1542
        %v2184 = vpop.f32.mrb[0].mxu0
        %v2185 = vadd.f32 %v1621, %v2184
        %v2186 = vpop.f32.mrb[0].mxu0
        %2187 = vmatprep.mubr.f32.mxu0 0.0
        %2188 = vmatmul.mubr.f32.gmra.mrb[0].mxu0 %v1544
        %v2189 = vpop.f32.mrb[0].mxu0
        %v2190 = vadd.f32 %v1621, %v2189
        %v2191 = vpop.f32.mrb[0].mxu0
        %2192 = vmatprep.mubr.f32.mxu0 0.0
        %2193 = vmatmul.mubr.f32.gmra.mrb[0].mxu0 %v1546
        %v2194 = vpop.f32.mrb[0].mxu0
        %v2195 = vadd.f32 %v1621, %v2194
        %v2196 = vpop.f32.mrb[0].mxu0
        %2197 = vmatprep.mubr.f32.mxu0 0.0
        %2198 = vmatmul.mubr.f32.gmra.mrb[0].mxu0 %v1548
        %v2199 = vpop.f32.mrb[0].mxu0
        %v2200 = vadd.f32 %v1621, %v2199
        %v2201 = vpop.f32.mrb[0].mxu0
        %2202 = vmatprep.mubr.f32.mxu0 0.0
        %2203 = vmatmul.mubr.f32.gmra.mrb[0].mxu0 %v1550
        %v2204 = vpop.f32.mrb[0].mxu0
        %v2205 = vadd.f32 %v1621, %v2204
        %v2206 = vpop.f32.mrb[0].mxu0
        %2207 = vmatprep.mubr.f32.mxu0 0.0
        %2208 = vmatmul.mubr.f32.gmra.mrb[0].mxu0 %v1552
        %v2209 = vpop.f32.mrb[0].mxu0
        %v2210 = vadd.f32 %v1621, %v2209
        %v2211 = vpop.f32.mrb[0].mxu0
        %2212 = vmatprep.mubr.f32.mxu0 0.0
        %2213 = vmatmul.mubr.f32.gmra.mrb[0].mxu0 %v1554
        %v2214 = vpop.f32.mrb[0].mxu0
        %v2215 = vadd.f32 %v1621, %v2214
        %v2216 = vpop.f32.mrb[0].mxu0
        %2217 = vmatprep.mubr.f32.mxu0 0.0
        %2218 = vmatmul.mubr.f32.gmra.mrb[0].mxu0 %v1556
        %v2219 = vpop.f32.mrb[0].mxu0
        %v2220 = vadd.f32 %v1621, %v2219
        %v2221 = vpop.f32.mrb[0].mxu0
        %2222 = vmatprep.mubr.f32.mxu0 0.0
        %2223 = vmatmul.mubr.f32.gmra.mrb[0].mxu0 %v1558
        %v2224 = vpop.f32.mrb[0].mxu0
        %v2225 = vadd.f32 %v1621, %v2224
        %v2226 = vpop.f32.mrb[0].mxu0
        %2227 = vmatprep.mubr.f32.mxu0 0.0
        %2228 = vmatmul.mubr.f32.gmra.mrb[0].mxu0 %v1560
        %v2229 = vpop.f32.mrb[0].mxu0
        %v2230 = vadd.f32 %v1621, %v2229
        %v2231 = vpop.f32.mrb[0].mxu0
        %2232 = vmatprep.mubr.f32.mxu0 0.0
        %2233 = vmatmul.mubr.f32.gmra.mrb[0].mxu0 %v1562
        %v2234 = vpop.f32.mrb[0].mxu0
        %v2235 = vadd.f32 %v1621, %v2234
        %v2236 = vpop.f32.mrb[0].mxu0
        %2237 = vmatprep.mubr.f32.mxu0 0.0
        %2238 = vmatmul.mubr.f32.gmra.mrb[0].mxu0 %v1564
        %v2239 = vpop.f32.mrb[0].mxu0
        %v2240 = vadd.f32 %v1621, %v2239
        %v2241 = vpop.f32.mrb[0].mxu0
        %2242 = vmatprep.mubr.f32.mxu0 0.0
        %2243 = vmatmul.mubr.f32.gmra.mrb[0].mxu0 %v1566
        %v2244 = vpop.f32.mrb[0].mxu0
        %v2245 = vadd.f32 %v1621, %v2244
        %v2246 = vpop.f32.mrb[0].mxu0
        %2247 = vmatprep.mubr.f32.mxu0 0.0
        %2248 = vmatmul.mubr.f32.gmra.mrb[0].mxu0 %v1568
        %v2249 = vpop.f32.mrb[0].mxu0
        %v2250 = vadd.f32 %v1621, %v2249
        %v2251 = vpop.f32.mrb[0].mxu0
        %2252 = vmatprep.mubr.f32.mxu0 0.0
        %2253 = vmatmul.mubr.f32.gmra.mrb[0].mxu0 %v1570
        %v2254 = vpop.f32.mrb[0].mxu0
        %v2255 = vadd.f32 %v1621, %v2254
        %v2256 = vpop.f32.mrb[0].mxu0
        %2257 = vmatprep.mubr.f32.mxu0 0.0
        %2258 = vmatmul.mubr.f32.gmra.mrb[0].mxu0 %v1572
        %v2259 = vpop.f32.mrb[0].mxu0
        %v2260 = vadd.f32 %v1621, %v2259
        %v2261 = vpop.f32.mrb[0].mxu0
        %2262 = vmatprep.mubr.f32.mxu0 0.0
        %2263 = vmatmul.mubr.f32.gmra.mrb[0].mxu0 %v1574
        %v2264 = vpop.f32.mrb[0].mxu0
        %v2265 = vadd.f32 %v1621, %v2264
        %v2266 = vpop.f32.mrb[0].mxu0
        %2267 = vmatprep.mubr.f32.mxu0 0.0
        %2268 = vmatmul.mubr.f32.gmra.mrb[0].mxu0 %v1576
        %v2269 = vpop.f32.mrb[0].mxu0
        %v2270 = vadd.f32 %v1621, %v2269
        %v2271 = vpop.f32.mrb[0].mxu0
        %2272 = vmatprep.mubr.f32.mxu0 0.0
        %2273 = vmatmul.mubr.f32.gmra.mrb[0].mxu0 %v1578
        %v2274 = vpop.f32.mrb[0].mxu0
        %v2275 = vadd.f32 %v1621, %v2274
        %v2276 = vpop.f32.mrb[0].mxu0
        %2277 = vmatprep.mubr.f32.mxu0 0.0
        %2278 = vmatmul.mubr.f32.gmra.mrb[0].mxu0 %v1580
        %v2279 = vpop.f32.mrb[0].mxu0
        %v2280 = vadd.f32 %v1621, %v2279
        %v2281 = vpop.f32.mrb[0].mxu0
        %2282 = vmatprep.mubr.f32.mxu0 0.0
        %2283 = vmatmul.mubr.f32.gmra.mrb[0].mxu0 %v1582
        %v2284 = vpop.f32.mrb[0].mxu0
        %v2285 = vadd.f32 %v1621, %v2284
        %v2286 = vpop.f32.mrb[0].mxu0
        %2287 = vmatprep.mubr.f32.mxu0 0.0
        %2288 = vmatmul.mubr.f32.gmra.mrb[0].mxu0 %v1584
        %v2289 = vpop.f32.mrb[0].mxu0
        %v2290 = vadd.f32 %v1621, %v2289
        %v2291 = vpop.f32.mrb[0].mxu0
        %2292 = vmatprep.mubr.f32.mxu0 0.0
        %2293 = vmatmul.mubr.f32.gmra.mrb[0].mxu0 %v1586
        %v2294 = vpop.f32.mrb[0].mxu0
        %v2295 = vadd.f32 %v1621, %v2294
        %v2296 = vpop.f32.mrb[0].mxu0
        %2297 = vmatprep.mubr.f32.mxu0 0.0
        %2298 = vmatmul.mubr.f32.gmra.mrb[0].mxu0 %v1588
        %v2299 = vpop.f32.mrb[0].mxu0
        %v2300 = vadd.f32 %v1621, %v2299
        %v2301 = vpop.f32.mrb[0].mxu0
        %2302 = vmatprep.mubr.f32.mxu0 0.0
        %2303 = vmatmul.mubr.f32.gmra.mrb[0].mxu0 %v1590
        %v2304 = vpop.f32.mrb[0].mxu0
        %v2305 = vadd.f32 %v1621, %v2304
        %v2306 = vpop.f32.mrb[0].mxu0
        %2307 = vmatprep.mubr.f32.mxu0 0.0
        %2308 = vmatmul.mubr.f32.gmra.mrb[0].mxu0 %v1592
        %v2309 = vpop.f32.mrb[0].mxu0
        %v2310 = vadd.f32 %v1621, %v2309
        %v2311 = vpop.f32.mrb[0].mxu0
        %2312 = vmatprep.mubr.f32.mxu0 0.0
        %2313 = vmatmul.mubr.f32.gmra.mrb[0].mxu0 %v1594
        %v2314 = vpop.f32.mrb[0].mxu0
        %v2315 = vadd.f32 %v1621, %v2314
        %v2316 = vpop.f32.mrb[0].mxu0
        %2317 = vmatprep.mubr.f32.mxu0 0.0
        %2318 = vmatmul.mubr.f32.gmra.mrb[0].mxu0 %v1596
        %v2319 = vpop.f32.mrb[0].mxu0
        %v2320 = vadd.f32 %v1621, %v2319
        %v2321 = vpop.f32.mrb[0].mxu0
        %2322 = vmatprep.mubr.f32.mxu0 0.0
        %2323 = vmatmul.mubr.f32.gmra.mrb[0].mxu0 %v1598
        %v2324 = vpop.f32.mrb[0].mxu0
        %v2325 = vadd.f32 %v1621, %v2324
        %v2326 = vpop.f32.mrb[0].mxu0
        %2327 = vdwg.mxu0
        %v2328 = vld [vmem:[%s5] sm:$0xff]
        %v2329 = vld [vmem:[%s5 + $0x8] sm:$0xff]
        %v2330 = vld [vmem:[%s5 + $0x10] sm:$0xff]
        %v2331 = vld [vmem:[%s5 + $0x18] sm:$0xff]
        %v2332 = vld [vmem:[%s5 + $0x20] sm:$0xff]
        %v2333 = vld [vmem:[%s5 + $0x28] sm:$0xff]
        %v2334 = vld [vmem:[%s5 + $0x30] sm:$0xff]
        %v2335 = vld [vmem:[%s5 + $0x38] sm:$0xff]
        %v2336 = vld [vmem:[%s5 + $0x40] sm:$0xff]
        %v2337 = vld [vmem:[%s5 + $0x48] sm:$0xff]
        %v2338 = vld [vmem:[%s5 + $0x50] sm:$0xff]
        %v2339 = vld [vmem:[%s5 + $0x58] sm:$0xff]
        %v2340 = vld [vmem:[%s5 + $0x60] sm:$0xff]
        %v2341 = vld [vmem:[%s5 + $0x68] sm:$0xff]
        %v2342 = vld [vmem:[%s5 + $0x70] sm:$0xff]
        %v2343 = vld [vmem:[%s5 + $0x78] sm:$0xff]
        %v2344 = vld [vmem:[%s6] sm:$0x1]
        %v2346 = vlaneseq
        %v2347 = vshrl.u32 %v2346, 7
        %v2348 = vsub.s32 0, %v2347
        %v2349 = vrot.slane %v2344, %v2348
        %2351 = vmatprep.subr.mxu0 0.0
        %2352 = vmatpush1.msra.mxu0 %v2328
        %2353 = vmatprep.subr.mxu0 0.0
        %2354 = vmatpush1.msra.mxu0 %v2329
        %2355 = vmatprep.subr.mxu0 0.0
        %2356 = vmatpush1.msra.mxu0 %v2330
        %2357 = vmatprep.subr.mxu0 0.0
        %2358 = vmatpush1.msra.mxu0 %v2331
        %2359 = vmatprep.subr.mxu0 0.0
        %2360 = vmatpush1.msra.mxu0 %v2332
        %2361 = vmatprep.subr.mxu0 0.0
        %2362 = vmatpush1.msra.mxu0 %v2333
        %2363 = vmatprep.subr.mxu0 0.0
        %2364 = vmatpush1.msra.mxu0 %v2334
        %2365 = vmatprep.subr.mxu0 0.0
        %2366 = vmatpush1.msra.mxu0 %v2335
        %2367 = vmatprep.subr.mxu0 0.0
        %2368 = vmatpush1.msra.mxu0 %v2336
        %2369 = vmatprep.subr.mxu0 0.0
        %2370 = vmatpush1.msra.mxu0 %v2337
        %2371 = vmatprep.subr.mxu0 0.0
        %2372 = vmatpush1.msra.mxu0 %v2338
        %2373 = vmatprep.subr.mxu0 0.0
        %2374 = vmatpush1.msra.mxu0 %v2339
        %2375 = vmatprep.subr.mxu0 0.0
        %2376 = vmatpush1.msra.mxu0 %v2340
        %2377 = vmatprep.subr.mxu0 0.0
        %2378 = vmatpush1.msra.mxu0 %v2341
        %2379 = vmatprep.subr.mxu0 0.0
        %2380 = vmatpush1.msra.mxu0 %v2342
        %2381 = vmatprep.subr.mxu0 0.0
        %2382 = vmatpush1.msra.mxu0 %v2343
        %2383 = vmatprep.subr.mxu0 0.0
        %2384 = vmatpush1.msra.mxu0 0.0
        %2385 = vmatprep.subr.mxu0 0.0
        %2386 = vmatpush1.msra.mxu0 0.0
        %2387 = vmatprep.subr.mxu0 0.0
        %2388 = vmatpush1.msra.mxu0 0.0
        %2389 = vmatprep.subr.mxu0 0.0
        %2390 = vmatpush1.msra.mxu0 0.0
        %2391 = vmatprep.subr.mxu0 0.0
        %2392 = vmatpush1.msra.mxu0 0.0
        %2393 = vmatprep.subr.mxu0 0.0
        %2394 = vmatpush1.msra.mxu0 0.0
        %2395 = vmatprep.subr.mxu0 0.0
        %2396 = vmatpush1.msra.mxu0 0.0
        %2397 = vmatprep.subr.mxu0 0.0
        %2398 = vmatpush1.msra.mxu0 0.0
        %2399 = vmatprep.subr.mxu0 0.0
        %2400 = vmatpush1.msra.mxu0 0.0
        %2401 = vmatprep.subr.mxu0 0.0
        %2402 = vmatpush1.msra.mxu0 0.0
        %2403 = vmatprep.subr.mxu0 0.0
        %2404 = vmatpush1.msra.mxu0 0.0
        %2405 = vmatprep.subr.mxu0 0.0
        %2406 = vmatpush1.msra.mxu0 0.0
        %2407 = vmatprep.subr.mxu0 0.0
        %2408 = vmatpush1.msra.mxu0 0.0
        %2409 = vmatprep.subr.mxu0 0.0
        %2410 = vmatpush1.msra.mxu0 0.0
        %2411 = vmatprep.subr.mxu0 0.0
        %2412 = vmatpush1.msra.mxu0 0.0
        %2413 = vmatprep.subr.mxu0 0.0
        %2414 = vmatpush1.msra.mxu0 0.0
        %2415 = vmatprep.mubr.f32.mxu0 0.0
        %2416 = vmatmul.mubr.f32.gmra.mrb[0].mxu0 %v1345
        %v2417 = vpop.f32.mrb[0].mxu0
        %v2418 = vadd.f32 %v2349, %v2417
        %v2419 = vpop.f32.mrb[0].mxu0
        %2420 = vmatprep.mubr.f32.mxu0 0.0
        %2421 = vmatmul.mubr.f32.gmra.mrb[0].mxu0 %v1347
        %v2422 = vpop.f32.mrb[0].mxu0
        %v2423 = vadd.f32 %v2349, %v2422
        %v2424 = vpop.f32.mrb[0].mxu0
        %2425 = vmatprep.mubr.f32.mxu0 0.0
        %2426 = vmatmul.mubr.f32.gmra.mrb[0].mxu0 %v1349
        %v2427 = vpop.f32.mrb[0].mxu0
        %v2428 = vadd.f32 %v2349, %v2427
        %v2429 = vpop.f32.mrb[0].mxu0
        %2430 = vmatprep.mubr.f32.mxu0 0.0
        %2431 = vmatmul.mubr.f32.gmra.mrb[0].mxu0 %v1351
        %v2432 = vpop.f32.mrb[0].mxu0
        %v2433 = vadd.f32 %v2349, %v2432
        %v2434 = vpop.f32.mrb[0].mxu0
        %2435 = vmatprep.mubr.f32.mxu0 0.0
        %2436 = vmatmul.mubr.f32.gmra.mrb[0].mxu0 %v1353
        %v2437 = vpop.f32.mrb[0].mxu0
        %v2438 = vadd.f32 %v2349, %v2437
        %v2439 = vpop.f32.mrb[0].mxu0
        %2440 = vmatprep.mubr.f32.mxu0 0.0
        %2441 = vmatmul.mubr.f32.gmra.mrb[0].mxu0 %v1355
        %v2442 = vpop.f32.mrb[0].mxu0
        %v2443 = vadd.f32 %v2349, %v2442
        %v2444 = vpop.f32.mrb[0].mxu0
        %2445 = vmatprep.mubr.f32.mxu0 0.0
        %2446 = vmatmul.mubr.f32.gmra.mrb[0].mxu0 %v1357
        %v2447 = vpop.f32.mrb[0].mxu0
        %v2448 = vadd.f32 %v2349, %v2447
        %v2449 = vpop.f32.mrb[0].mxu0
        %2450 = vmatprep.mubr.f32.mxu0 0.0
        %2451 = vmatmul.mubr.f32.gmra.mrb[0].mxu0 %v1359
        %v2452 = vpop.f32.mrb[0].mxu0
        %v2453 = vadd.f32 %v2349, %v2452
        %v2454 = vpop.f32.mrb[0].mxu0
        %2455 = vmatprep.mubr.f32.mxu0 0.0
        %2456 = vmatmul.mubr.f32.gmra.mrb[0].mxu0 %v1361
        %v2457 = vpop.f32.mrb[0].mxu0
        %v2458 = vadd.f32 %v2349, %v2457
        %v2459 = vpop.f32.mrb[0].mxu0
        %2460 = vmatprep.mubr.f32.mxu0 0.0
        %2461 = vmatmul.mubr.f32.gmra.mrb[0].mxu0 %v1363
        %v2462 = vpop.f32.mrb[0].mxu0
        %v2463 = vadd.f32 %v2349, %v2462
        %v2464 = vpop.f32.mrb[0].mxu0
        %2465 = vmatprep.mubr.f32.mxu0 0.0
        %2466 = vmatmul.mubr.f32.gmra.mrb[0].mxu0 %v1365
        %v2467 = vpop.f32.mrb[0].mxu0
        %v2468 = vadd.f32 %v2349, %v2467
        %v2469 = vpop.f32.mrb[0].mxu0
        %2470 = vmatprep.mubr.f32.mxu0 0.0
        %2471 = vmatmul.mubr.f32.gmra.mrb[0].mxu0 %v1367
        %v2472 = vpop.f32.mrb[0].mxu0
        %v2473 = vadd.f32 %v2349, %v2472
        %v2474 = vpop.f32.mrb[0].mxu0
        %2475 = vmatprep.mubr.f32.mxu0 0.0
        %2476 = vmatmul.mubr.f32.gmra.mrb[0].mxu0 %v1369
        %v2477 = vpop.f32.mrb[0].mxu0
        %v2478 = vadd.f32 %v2349, %v2477
        %v2479 = vpop.f32.mrb[0].mxu0
        %2480 = vmatprep.mubr.f32.mxu0 0.0
        %2481 = vmatmul.mubr.f32.gmra.mrb[0].mxu0 %v1371
        %v2482 = vpop.f32.mrb[0].mxu0
        %v2483 = vadd.f32 %v2349, %v2482
        %v2484 = vpop.f32.mrb[0].mxu0
        %2485 = vmatprep.mubr.f32.mxu0 0.0
        %2486 = vmatmul.mubr.f32.gmra.mrb[0].mxu0 %v1373
        %v2487 = vpop.f32.mrb[0].mxu0
        %v2488 = vadd.f32 %v2349, %v2487
        %v2489 = vpop.f32.mrb[0].mxu0
        %2490 = vmatprep.mubr.f32.mxu0 0.0
        %2491 = vmatmul.mubr.f32.gmra.mrb[0].mxu0 %v1375
        %v2492 = vpop.f32.mrb[0].mxu0
        %v2493 = vadd.f32 %v2349, %v2492
        %v2494 = vpop.f32.mrb[0].mxu0
        %2495 = vmatprep.mubr.f32.mxu0 0.0
        %2496 = vmatmul.mubr.f32.gmra.mrb[0].mxu0 %v1377
        %v2497 = vpop.f32.mrb[0].mxu0
        %v2498 = vadd.f32 %v2349, %v2497
        %v2499 = vpop.f32.mrb[0].mxu0
        %2500 = vmatprep.mubr.f32.mxu0 0.0
        %2501 = vmatmul.mubr.f32.gmra.mrb[0].mxu0 %v1379
        %v2502 = vpop.f32.mrb[0].mxu0
        %v2503 = vadd.f32 %v2349, %v2502
        %v2504 = vpop.f32.mrb[0].mxu0
        %2505 = vmatprep.mubr.f32.mxu0 0.0
        %2506 = vmatmul.mubr.f32.gmra.mrb[0].mxu0 %v1381
        %v2507 = vpop.f32.mrb[0].mxu0
        %v2508 = vadd.f32 %v2349, %v2507
        %v2509 = vpop.f32.mrb[0].mxu0
        %2510 = vmatprep.mubr.f32.mxu0 0.0
        %2511 = vmatmul.mubr.f32.gmra.mrb[0].mxu0 %v1383
        %v2512 = vpop.f32.mrb[0].mxu0
        %v2513 = vadd.f32 %v2349, %v2512
        %v2514 = vpop.f32.mrb[0].mxu0
        %2515 = vmatprep.mubr.f32.mxu0 0.0
        %2516 = vmatmul.mubr.f32.gmra.mrb[0].mxu0 %v1385
        %v2517 = vpop.f32.mrb[0].mxu0
        %v2518 = vadd.f32 %v2349, %v2517
        %v2519 = vpop.f32.mrb[0].mxu0
        %2520 = vmatprep.mubr.f32.mxu0 0.0
        %2521 = vmatmul.mubr.f32.gmra.mrb[0].mxu0 %v1387
        %v2522 = vpop.f32.mrb[0].mxu0
        %v2523 = vadd.f32 %v2349, %v2522
        %v2524 = vpop.f32.mrb[0].mxu0
        %2525 = vmatprep.mubr.f32.mxu0 0.0
        %2526 = vmatmul.mubr.f32.gmra.mrb[0].mxu0 %v1389
        %v2527 = vpop.f32.mrb[0].mxu0
        %v2528 = vadd.f32 %v2349, %v2527
        %v2529 = vpop.f32.mrb[0].mxu0
        %2530 = vmatprep.mubr.f32.mxu0 0.0
        %2531 = vmatmul.mubr.f32.gmra.mrb[0].mxu0 %v1391
        %v2532 = vpop.f32.mrb[0].mxu0
        %v2533 = vadd.f32 %v2349, %v2532
        %v2534 = vpop.f32.mrb[0].mxu0
        %2535 = vmatprep.mubr.f32.mxu0 0.0
        %2536 = vmatmul.mubr.f32.gmra.mrb[0].mxu0 %v1393
        %v2537 = vpop.f32.mrb[0].mxu0
        %v2538 = vadd.f32 %v2349, %v2537
        %v2539 = vpop.f32.mrb[0].mxu0
        %2540 = vmatprep.mubr.f32.mxu0 0.0
        %2541 = vmatmul.mubr.f32.gmra.mrb[0].mxu0 %v1395
        %v2542 = vpop.f32.mrb[0].mxu0
        %v2543 = vadd.f32 %v2349, %v2542
        %v2544 = vpop.f32.mrb[0].mxu0
        %2545 = vmatprep.mubr.f32.mxu0 0.0
        %2546 = vmatmul.mubr.f32.gmra.mrb[0].mxu0 %v1397
        %v2547 = vpop.f32.mrb[0].mxu0
        %v2548 = vadd.f32 %v2349, %v2547
        %v2549 = vpop.f32.mrb[0].mxu0
        %2550 = vmatprep.mubr.f32.mxu0 0.0
        %2551 = vmatmul.mubr.f32.gmra.mrb[0].mxu0 %v1399
        %v2552 = vpop.f32.mrb[0].mxu0
        %v2553 = vadd.f32 %v2349, %v2552
        %v2554 = vpop.f32.mrb[0].mxu0
        %2555 = vmatprep.mubr.f32.mxu0 0.0
        %2556 = vmatmul.mubr.f32.gmra.mrb[0].mxu0 %v1401
        %v2557 = vpop.f32.mrb[0].mxu0
        %v2558 = vadd.f32 %v2349, %v2557
        %v2559 = vpop.f32.mrb[0].mxu0
        %2560 = vmatprep.mubr.f32.mxu0 0.0
        %2561 = vmatmul.mubr.f32.gmra.mrb[0].mxu0 %v1403
        %v2562 = vpop.f32.mrb[0].mxu0
        %v2563 = vadd.f32 %v2349, %v2562
        %v2564 = vpop.f32.mrb[0].mxu0
        %2565 = vmatprep.mubr.f32.mxu0 0.0
        %2566 = vmatmul.mubr.f32.gmra.mrb[0].mxu0 %v1405
        %v2567 = vpop.f32.mrb[0].mxu0
        %v2568 = vadd.f32 %v2349, %v2567
        %v2569 = vpop.f32.mrb[0].mxu0
        %2570 = vmatprep.mubr.f32.mxu0 0.0
        %2571 = vmatmul.mubr.f32.gmra.mrb[0].mxu0 %v1407
        %v2572 = vpop.f32.mrb[0].mxu0
        %v2573 = vadd.f32 %v2349, %v2572
        %v2574 = vpop.f32.mrb[0].mxu0
        %2575 = vmatprep.mubr.f32.mxu0 0.0
        %2576 = vmatmul.mubr.f32.gmra.mrb[0].mxu0 %v1409
        %v2577 = vpop.f32.mrb[0].mxu0
        %v2578 = vadd.f32 %v2349, %v2577
        %v2579 = vpop.f32.mrb[0].mxu0
        %2580 = vmatprep.mubr.f32.mxu0 0.0
        %2581 = vmatmul.mubr.f32.gmra.mrb[0].mxu0 %v1411
        %v2582 = vpop.f32.mrb[0].mxu0
        %v2583 = vadd.f32 %v2349, %v2582
        %v2584 = vpop.f32.mrb[0].mxu0
        %2585 = vmatprep.mubr.f32.mxu0 0.0
        %2586 = vmatmul.mubr.f32.gmra.mrb[0].mxu0 %v1413
        %v2587 = vpop.f32.mrb[0].mxu0
        %v2588 = vadd.f32 %v2349, %v2587
        %v2589 = vpop.f32.mrb[0].mxu0
        %2590 = vmatprep.mubr.f32.mxu0 0.0
        %2591 = vmatmul.mubr.f32.gmra.mrb[0].mxu0 %v1415
        %v2592 = vpop.f32.mrb[0].mxu0
        %v2593 = vadd.f32 %v2349, %v2592
        %v2594 = vpop.f32.mrb[0].mxu0
        %2595 = vmatprep.mubr.f32.mxu0 0.0
        %2596 = vmatmul.mubr.f32.gmra.mrb[0].mxu0 %v1417
        %v2597 = vpop.f32.mrb[0].mxu0
        %v2598 = vadd.f32 %v2349, %v2597
        %v2599 = vpop.f32.mrb[0].mxu0
        %2600 = vmatprep.mubr.f32.mxu0 0.0
        %2601 = vmatmul.mubr.f32.gmra.mrb[0].mxu0 %v1419
        %v2602 = vpop.f32.mrb[0].mxu0
        %v2603 = vadd.f32 %v2349, %v2602
        %v2604 = vpop.f32.mrb[0].mxu0
        %2605 = vmatprep.mubr.f32.mxu0 0.0
        %2606 = vmatmul.mubr.f32.gmra.mrb[0].mxu0 %v1421
        %v2607 = vpop.f32.mrb[0].mxu0
        %v2608 = vadd.f32 %v2349, %v2607
        %v2609 = vpop.f32.mrb[0].mxu0
        %2610 = vmatprep.mubr.f32.mxu0 0.0
        %2611 = vmatmul.mubr.f32.gmra.mrb[0].mxu0 %v1423
        %v2612 = vpop.f32.mrb[0].mxu0
        %v2613 = vadd.f32 %v2349, %v2612
        %v2614 = vpop.f32.mrb[0].mxu0
        %2615 = vmatprep.mubr.f32.mxu0 0.0
        %2616 = vmatmul.mubr.f32.gmra.mrb[0].mxu0 %v1425
        %v2617 = vpop.f32.mrb[0].mxu0
        %v2618 = vadd.f32 %v2349, %v2617
        %v2619 = vpop.f32.mrb[0].mxu0
        %2620 = vmatprep.mubr.f32.mxu0 0.0
        %2621 = vmatmul.mubr.f32.gmra.mrb[0].mxu0 %v1427
        %v2622 = vpop.f32.mrb[0].mxu0
        %v2623 = vadd.f32 %v2349, %v2622
        %v2624 = vpop.f32.mrb[0].mxu0
        %2625 = vmatprep.mubr.f32.mxu0 0.0
        %2626 = vmatmul.mubr.f32.gmra.mrb[0].mxu0 %v1429
        %v2627 = vpop.f32.mrb[0].mxu0
        %v2628 = vadd.f32 %v2349, %v2627
        %v2629 = vpop.f32.mrb[0].mxu0
        %2630 = vmatprep.mubr.f32.mxu0 0.0
        %2631 = vmatmul.mubr.f32.gmra.mrb[0].mxu0 %v1431
        %v2632 = vpop.f32.mrb[0].mxu0
        %v2633 = vadd.f32 %v2349, %v2632
        %v2634 = vpop.f32.mrb[0].mxu0
        %2635 = vmatprep.mubr.f32.mxu0 0.0
        %2636 = vmatmul.mubr.f32.gmra.mrb[0].mxu0 %v1433
        %v2637 = vpop.f32.mrb[0].mxu0
        %v2638 = vadd.f32 %v2349, %v2637
        %v2639 = vpop.f32.mrb[0].mxu0
        %2640 = vmatprep.mubr.f32.mxu0 0.0
        %2641 = vmatmul.mubr.f32.gmra.mrb[0].mxu0 %v1435
        %v2642 = vpop.f32.mrb[0].mxu0
        %v2643 = vadd.f32 %v2349, %v2642
        %v2644 = vpop.f32.mrb[0].mxu0
        %2645 = vmatprep.mubr.f32.mxu0 0.0
        %2646 = vmatmul.mubr.f32.gmra.mrb[0].mxu0 %v1437
        %v2647 = vpop.f32.mrb[0].mxu0
        %v2648 = vadd.f32 %v2349, %v2647
        %v2649 = vpop.f32.mrb[0].mxu0
        %2650 = vmatprep.mubr.f32.mxu0 0.0
        %2651 = vmatmul.mubr.f32.gmra.mrb[0].mxu0 %v1439
        %v2652 = vpop.f32.mrb[0].mxu0
        %v2653 = vadd.f32 %v2349, %v2652
        %v2654 = vpop.f32.mrb[0].mxu0
        %2655 = vmatprep.mubr.f32.mxu0 0.0
        %2656 = vmatmul.mubr.f32.gmra.mrb[0].mxu0 %v1441
        %v2657 = vpop.f32.mrb[0].mxu0
        %v2658 = vadd.f32 %v2349, %v2657
        %v2659 = vpop.f32.mrb[0].mxu0
        %2660 = vmatprep.mubr.f32.mxu0 0.0
        %2661 = vmatmul.mubr.f32.gmra.mrb[0].mxu0 %v1443
        %v2662 = vpop.f32.mrb[0].mxu0
        %v2663 = vadd.f32 %v2349, %v2662
        %v2664 = vpop.f32.mrb[0].mxu0
        %2665 = vmatprep.mubr.f32.mxu0 0.0
        %2666 = vmatmul.mubr.f32.gmra.mrb[0].mxu0 %v1445
        %v2667 = vpop.f32.mrb[0].mxu0
        %v2668 = vadd.f32 %v2349, %v2667
        %v2669 = vpop.f32.mrb[0].mxu0
        %2670 = vmatprep.mubr.f32.mxu0 0.0
        %2671 = vmatmul.mubr.f32.gmra.mrb[0].mxu0 %v1447
        %v2672 = vpop.f32.mrb[0].mxu0
        %v2673 = vadd.f32 %v2349, %v2672
        %v2674 = vpop.f32.mrb[0].mxu0
        %2675 = vmatprep.mubr.f32.mxu0 0.0
        %2676 = vmatmul.mubr.f32.gmra.mrb[0].mxu0 %v1449
        %v2677 = vpop.f32.mrb[0].mxu0
        %v2678 = vadd.f32 %v2349, %v2677
        %v2679 = vpop.f32.mrb[0].mxu0
        %2680 = vmatprep.mubr.f32.mxu0 0.0
        %2681 = vmatmul.mubr.f32.gmra.mrb[0].mxu0 %v1451
        %v2682 = vpop.f32.mrb[0].mxu0
        %v2683 = vadd.f32 %v2349, %v2682
        %v2684 = vpop.f32.mrb[0].mxu0
        %2685 = vmatprep.mubr.f32.mxu0 0.0
        %2686 = vmatmul.mubr.f32.gmra.mrb[0].mxu0 %v1453
        %v2687 = vpop.f32.mrb[0].mxu0
        %v2688 = vadd.f32 %v2349, %v2687
        %v2689 = vpop.f32.mrb[0].mxu0
        %2690 = vmatprep.mubr.f32.mxu0 0.0
        %2691 = vmatmul.mubr.f32.gmra.mrb[0].mxu0 %v1455
        %v2692 = vpop.f32.mrb[0].mxu0
        %v2693 = vadd.f32 %v2349, %v2692
        %v2694 = vpop.f32.mrb[0].mxu0
        %2695 = vmatprep.mubr.f32.mxu0 0.0
        %2696 = vmatmul.mubr.f32.gmra.mrb[0].mxu0 %v1457
        %v2697 = vpop.f32.mrb[0].mxu0
        %v2698 = vadd.f32 %v2349, %v2697
        %v2699 = vpop.f32.mrb[0].mxu0
        %2700 = vmatprep.mubr.f32.mxu0 0.0
        %2701 = vmatmul.mubr.f32.gmra.mrb[0].mxu0 %v1459
        %v2702 = vpop.f32.mrb[0].mxu0
        %v2703 = vadd.f32 %v2349, %v2702
        %v2704 = vpop.f32.mrb[0].mxu0
        %2705 = vmatprep.mubr.f32.mxu0 0.0
        %2706 = vmatmul.mubr.f32.gmra.mrb[0].mxu0 %v1461
        %v2707 = vpop.f32.mrb[0].mxu0
        %v2708 = vadd.f32 %v2349, %v2707
        %v2709 = vpop.f32.mrb[0].mxu0
        %2710 = vmatprep.mubr.f32.mxu0 0.0
        %2711 = vmatmul.mubr.f32.gmra.mrb[0].mxu0 %v1463
        %v2712 = vpop.f32.mrb[0].mxu0
        %v2713 = vadd.f32 %v2349, %v2712
        %v2714 = vpop.f32.mrb[0].mxu0
        %2715 = vmatprep.mubr.f32.mxu0 0.0
        %2716 = vmatmul.mubr.f32.gmra.mrb[0].mxu0 %v1465
        %v2717 = vpop.f32.mrb[0].mxu0
        %v2718 = vadd.f32 %v2349, %v2717
        %v2719 = vpop.f32.mrb[0].mxu0
        %2720 = vmatprep.mubr.f32.mxu0 0.0
        %2721 = vmatmul.mubr.f32.gmra.mrb[0].mxu0 %v1467
        %v2722 = vpop.f32.mrb[0].mxu0
        %v2723 = vadd.f32 %v2349, %v2722
        %v2724 = vpop.f32.mrb[0].mxu0
        %2725 = vmatprep.mubr.f32.mxu0 0.0
        %2726 = vmatmul.mubr.f32.gmra.mrb[0].mxu0 %v1469
        %v2727 = vpop.f32.mrb[0].mxu0
        %v2728 = vadd.f32 %v2349, %v2727
        %v2729 = vpop.f32.mrb[0].mxu0
        %2730 = vmatprep.mubr.f32.mxu0 0.0
        %2731 = vmatmul.mubr.f32.gmra.mrb[0].mxu0 %v1471
        %v2732 = vpop.f32.mrb[0].mxu0
        %v2733 = vadd.f32 %v2349, %v2732
        %v2734 = vpop.f32.mrb[0].mxu0
        %2735 = vmatprep.mubr.f32.mxu0 0.0
        %2736 = vmatmul.mubr.f32.gmra.mrb[0].mxu0 %v1473
        %v2737 = vpop.f32.mrb[0].mxu0
        %v2738 = vadd.f32 %v2349, %v2737
        %v2739 = vpop.f32.mrb[0].mxu0
        %2740 = vmatprep.mubr.f32.mxu0 0.0
        %2741 = vmatmul.mubr.f32.gmra.mrb[0].mxu0 %v1475
        %v2742 = vpop.f32.mrb[0].mxu0
        %v2743 = vadd.f32 %v2349, %v2742
        %v2744 = vpop.f32.mrb[0].mxu0
        %2745 = vmatprep.mubr.f32.mxu0 0.0
        %2746 = vmatmul.mubr.f32.gmra.mrb[0].mxu0 %v1477
        %v2747 = vpop.f32.mrb[0].mxu0
        %v2748 = vadd.f32 %v2349, %v2747
        %v2749 = vpop.f32.mrb[0].mxu0
        %2750 = vmatprep.mubr.f32.mxu0 0.0
        %2751 = vmatmul.mubr.f32.gmra.mrb[0].mxu0 %v1479
        %v2752 = vpop.f32.mrb[0].mxu0
        %v2753 = vadd.f32 %v2349, %v2752
        %v2754 = vpop.f32.mrb[0].mxu0
        %2755 = vmatprep.mubr.f32.mxu0 0.0
        %2756 = vmatmul.mubr.f32.gmra.mrb[0].mxu0 %v1481
        %v2757 = vpop.f32.mrb[0].mxu0
        %v2758 = vadd.f32 %v2349, %v2757
        %v2759 = vpop.f32.mrb[0].mxu0
        %2760 = vmatprep.mubr.f32.mxu0 0.0
        %2761 = vmatmul.mubr.f32.gmra.mrb[0].mxu0 %v1483
        %v2762 = vpop.f32.mrb[0].mxu0
        %v2763 = vadd.f32 %v2349, %v2762
        %v2764 = vpop.f32.mrb[0].mxu0
        %2765 = vmatprep.mubr.f32.mxu0 0.0
        %2766 = vmatmul.mubr.f32.gmra.mrb[0].mxu0 %v1485
        %v2767 = vpop.f32.mrb[0].mxu0
        %v2768 = vadd.f32 %v2349, %v2767
        %v2769 = vpop.f32.mrb[0].mxu0
        %2770 = vmatprep.mubr.f32.mxu0 0.0
        %2771 = vmatmul.mubr.f32.gmra.mrb[0].mxu0 %v1487
        %v2772 = vpop.f32.mrb[0].mxu0
        %v2773 = vadd.f32 %v2349, %v2772
        %v2774 = vpop.f32.mrb[0].mxu0
        %2775 = vmatprep.mubr.f32.mxu0 0.0
        %2776 = vmatmul.mubr.f32.gmra.mrb[0].mxu0 %v1489
        %v2777 = vpop.f32.mrb[0].mxu0
        %v2778 = vadd.f32 %v2349, %v2777
        %v2779 = vpop.f32.mrb[0].mxu0
        %2780 = vmatprep.mubr.f32.mxu0 0.0
        %2781 = vmatmul.mubr.f32.gmra.mrb[0].mxu0 %v1491
        %v2782 = vpop.f32.mrb[0].mxu0
        %v2783 = vadd.f32 %v2349, %v2782
        %v2784 = vpop.f32.mrb[0].mxu0
        %2785 = vmatprep.mubr.f32.mxu0 0.0
        %2786 = vmatmul.mubr.f32.gmra.mrb[0].mxu0 %v1493
        %v2787 = vpop.f32.mrb[0].mxu0
        %v2788 = vadd.f32 %v2349, %v2787
        %v2789 = vpop.f32.mrb[0].mxu0
        %2790 = vmatprep.mubr.f32.mxu0 0.0
        %2791 = vmatmul.mubr.f32.gmra.mrb[0].mxu0 %v1495
        %v2792 = vpop.f32.mrb[0].mxu0
        %v2793 = vadd.f32 %v2349, %v2792
        %v2794 = vpop.f32.mrb[0].mxu0
        %2795 = vmatprep.mubr.f32.mxu0 0.0
        %2796 = vmatmul.mubr.f32.gmra.mrb[0].mxu0 %v1497
        %v2797 = vpop.f32.mrb[0].mxu0
        %v2798 = vadd.f32 %v2349, %v2797
        %v2799 = vpop.f32.mrb[0].mxu0
        %2800 = vmatprep.mubr.f32.mxu0 0.0
        %2801 = vmatmul.mubr.f32.gmra.mrb[0].mxu0 %v1499
        %v2802 = vpop.f32.mrb[0].mxu0
        %v2803 = vadd.f32 %v2349, %v2802
        %v2804 = vpop.f32.mrb[0].mxu0
        %2805 = vmatprep.mubr.f32.mxu0 0.0
        %2806 = vmatmul.mubr.f32.gmra.mrb[0].mxu0 %v1501
        %v2807 = vpop.f32.mrb[0].mxu0
        %v2808 = vadd.f32 %v2349, %v2807
        %v2809 = vpop.f32.mrb[0].mxu0
        %2810 = vmatprep.mubr.f32.mxu0 0.0
        %2811 = vmatmul.mubr.f32.gmra.mrb[0].mxu0 %v1503
        %v2812 = vpop.f32.mrb[0].mxu0
        %v2813 = vadd.f32 %v2349, %v2812
        %v2814 = vpop.f32.mrb[0].mxu0
        %2815 = vmatprep.mubr.f32.mxu0 0.0
        %2816 = vmatmul.mubr.f32.gmra.mrb[0].mxu0 %v1505
        %v2817 = vpop.f32.mrb[0].mxu0
        %v2818 = vadd.f32 %v2349, %v2817
        %v2819 = vpop.f32.mrb[0].mxu0
        %2820 = vmatprep.mubr.f32.mxu0 0.0
        %2821 = vmatmul.mubr.f32.gmra.mrb[0].mxu0 %v1507
        %v2822 = vpop.f32.mrb[0].mxu0
        %v2823 = vadd.f32 %v2349, %v2822
        %v2824 = vpop.f32.mrb[0].mxu0
        %2825 = vmatprep.mubr.f32.mxu0 0.0
        %2826 = vmatmul.mubr.f32.gmra.mrb[0].mxu0 %v1509
        %v2827 = vpop.f32.mrb[0].mxu0
        %v2828 = vadd.f32 %v2349, %v2827
        %v2829 = vpop.f32.mrb[0].mxu0
        %2830 = vmatprep.mubr.f32.mxu0 0.0
        %2831 = vmatmul.mubr.f32.gmra.mrb[0].mxu0 %v1511
        %v2832 = vpop.f32.mrb[0].mxu0
        %v2833 = vadd.f32 %v2349, %v2832
        %v2834 = vpop.f32.mrb[0].mxu0
        %2835 = vmatprep.mubr.f32.mxu0 0.0
        %2836 = vmatmul.mubr.f32.gmra.mrb[0].mxu0 %v1513
        %v2837 = vpop.f32.mrb[0].mxu0
        %v2838 = vadd.f32 %v2349, %v2837
        %v2839 = vpop.f32.mrb[0].mxu0
        %2840 = vmatprep.mubr.f32.mxu0 0.0
        %2841 = vmatmul.mubr.f32.gmra.mrb[0].mxu0 %v1515
        %v2842 = vpop.f32.mrb[0].mxu0
        %v2843 = vadd.f32 %v2349, %v2842
        %v2844 = vpop.f32.mrb[0].mxu0
        %2845 = vmatprep.mubr.f32.mxu0 0.0
        %2846 = vmatmul.mubr.f32.gmra.mrb[0].mxu0 %v1517
        %v2847 = vpop.f32.mrb[0].mxu0
        %v2848 = vadd.f32 %v2349, %v2847
        %v2849 = vpop.f32.mrb[0].mxu0
        %2850 = vmatprep.mubr.f32.mxu0 0.0
        %2851 = vmatmul.mubr.f32.gmra.mrb[0].mxu0 %v1519
        %v2852 = vpop.f32.mrb[0].mxu0
        %v2853 = vadd.f32 %v2349, %v2852
        %v2854 = vpop.f32.mrb[0].mxu0
        %2855 = vmatprep.mubr.f32.mxu0 0.0
        %2856 = vmatmul.mubr.f32.gmra.mrb[0].mxu0 %v1521
        %v2857 = vpop.f32.mrb[0].mxu0
        %v2858 = vadd.f32 %v2349, %v2857
        %v2859 = vpop.f32.mrb[0].mxu0
        %2860 = vmatprep.mubr.f32.mxu0 0.0
        %2861 = vmatmul.mubr.f32.gmra.mrb[0].mxu0 %v1523
        %v2862 = vpop.f32.mrb[0].mxu0
        %v2863 = vadd.f32 %v2349, %v2862
        %v2864 = vpop.f32.mrb[0].mxu0
        %2865 = vmatprep.mubr.f32.mxu0 0.0
        %2866 = vmatmul.mubr.f32.gmra.mrb[0].mxu0 %v1525
        %v2867 = vpop.f32.mrb[0].mxu0
        %v2868 = vadd.f32 %v2349, %v2867
        %v2869 = vpop.f32.mrb[0].mxu0
        %2870 = vmatprep.mubr.f32.mxu0 0.0
        %2871 = vmatmul.mubr.f32.gmra.mrb[0].mxu0 %v1527
        %v2872 = vpop.f32.mrb[0].mxu0
        %v2873 = vadd.f32 %v2349, %v2872
        %v2874 = vpop.f32.mrb[0].mxu0
        %2875 = vmatprep.mubr.f32.mxu0 0.0
        %2876 = vmatmul.mubr.f32.gmra.mrb[0].mxu0 %v1529
        %v2877 = vpop.f32.mrb[0].mxu0
        %v2878 = vadd.f32 %v2349, %v2877
        %v2879 = vpop.f32.mrb[0].mxu0
        %2880 = vmatprep.mubr.f32.mxu0 0.0
        %2881 = vmatmul.mubr.f32.gmra.mrb[0].mxu0 %v1531
        %v2882 = vpop.f32.mrb[0].mxu0
        %v2883 = vadd.f32 %v2349, %v2882
        %v2884 = vpop.f32.mrb[0].mxu0
        %2885 = vmatprep.mubr.f32.mxu0 0.0
        %2886 = vmatmul.mubr.f32.gmra.mrb[0].mxu0 %v1533
        %v2887 = vpop.f32.mrb[0].mxu0
        %v2888 = vadd.f32 %v2349, %v2887
        %v2889 = vpop.f32.mrb[0].mxu0
        %2890 = vmatprep.mubr.f32.mxu0 0.0
        %2891 = vmatmul.mubr.f32.gmra.mrb[0].mxu0 %v1535
        %v2892 = vpop.f32.mrb[0].mxu0
        %v2893 = vadd.f32 %v2349, %v2892
        %v2894 = vpop.f32.mrb[0].mxu0
        %2895 = vmatprep.mubr.f32.mxu0 0.0
        %2896 = vmatmul.mubr.f32.gmra.mrb[0].mxu0 %v1537
        %v2897 = vpop.f32.mrb[0].mxu0
        %v2898 = vadd.f32 %v2349, %v2897
        %v2899 = vpop.f32.mrb[0].mxu0
        %2900 = vmatprep.mubr.f32.mxu0 0.0
        %2901 = vmatmul.mubr.f32.gmra.mrb[0].mxu0 %v1539
        %v2902 = vpop.f32.mrb[0].mxu0
        %v2903 = vadd.f32 %v2349, %v2902
        %v2904 = vpop.f32.mrb[0].mxu0
        %2905 = vmatprep.mubr.f32.mxu0 0.0
        %2906 = vmatmul.mubr.f32.gmra.mrb[0].mxu0 %v1541
        %v2907 = vpop.f32.mrb[0].mxu0
        %v2908 = vadd.f32 %v2349, %v2907
        %v2909 = vpop.f32.mrb[0].mxu0
        %2910 = vmatprep.mubr.f32.mxu0 0.0
        %2911 = vmatmul.mubr.f32.gmra.mrb[0].mxu0 %v1543
        %v2912 = vpop.f32.mrb[0].mxu0
        %v2913 = vadd.f32 %v2349, %v2912
        %v2914 = vpop.f32.mrb[0].mxu0
        %2915 = vmatprep.mubr.f32.mxu0 0.0
        %2916 = vmatmul.mubr.f32.gmra.mrb[0].mxu0 %v1545
        %v2917 = vpop.f32.mrb[0].mxu0
        %v2918 = vadd.f32 %v2349, %v2917
        %v2919 = vpop.f32.mrb[0].mxu0
        %2920 = vmatprep.mubr.f32.mxu0 0.0
        %2921 = vmatmul.mubr.f32.gmra.mrb[0].mxu0 %v1547
        %v2922 = vpop.f32.mrb[0].mxu0
        %v2923 = vadd.f32 %v2349, %v2922
        %v2924 = vpop.f32.mrb[0].mxu0
        %2925 = vmatprep.mubr.f32.mxu0 0.0
        %2926 = vmatmul.mubr.f32.gmra.mrb[0].mxu0 %v1549
        %v2927 = vpop.f32.mrb[0].mxu0
        %v2928 = vadd.f32 %v2349, %v2927
        %v2929 = vpop.f32.mrb[0].mxu0
        %2930 = vmatprep.mubr.f32.mxu0 0.0
        %2931 = vmatmul.mubr.f32.gmra.mrb[0].mxu0 %v1551
        %v2932 = vpop.f32.mrb[0].mxu0
        %v2933 = vadd.f32 %v2349, %v2932
        %v2934 = vpop.f32.mrb[0].mxu0
        %2935 = vmatprep.mubr.f32.mxu0 0.0
        %2936 = vmatmul.mubr.f32.gmra.mrb[0].mxu0 %v1553
        %v2937 = vpop.f32.mrb[0].mxu0
        %v2938 = vadd.f32 %v2349, %v2937
        %v2939 = vpop.f32.mrb[0].mxu0
        %2940 = vmatprep.mubr.f32.mxu0 0.0
        %2941 = vmatmul.mubr.f32.gmra.mrb[0].mxu0 %v1555
        %v2942 = vpop.f32.mrb[0].mxu0
        %v2943 = vadd.f32 %v2349, %v2942
        %v2944 = vpop.f32.mrb[0].mxu0
        %2945 = vmatprep.mubr.f32.mxu0 0.0
        %2946 = vmatmul.mubr.f32.gmra.mrb[0].mxu0 %v1557
        %v2947 = vpop.f32.mrb[0].mxu0
        %v2948 = vadd.f32 %v2349, %v2947
        %v2949 = vpop.f32.mrb[0].mxu0
        %2950 = vmatprep.mubr.f32.mxu0 0.0
        %2951 = vmatmul.mubr.f32.gmra.mrb[0].mxu0 %v1559
        %v2952 = vpop.f32.mrb[0].mxu0
        %v2953 = vadd.f32 %v2349, %v2952
        %v2954 = vpop.f32.mrb[0].mxu0
        %2955 = vmatprep.mubr.f32.mxu0 0.0
        %2956 = vmatmul.mubr.f32.gmra.mrb[0].mxu0 %v1561
        %v2957 = vpop.f32.mrb[0].mxu0
        %v2958 = vadd.f32 %v2349, %v2957
        %v2959 = vpop.f32.mrb[0].mxu0
        %2960 = vmatprep.mubr.f32.mxu0 0.0
        %2961 = vmatmul.mubr.f32.gmra.mrb[0].mxu0 %v1563
        %v2962 = vpop.f32.mrb[0].mxu0
        %v2963 = vadd.f32 %v2349, %v2962
        %v2964 = vpop.f32.mrb[0].mxu0
        %2965 = vmatprep.mubr.f32.mxu0 0.0
        %2966 = vmatmul.mubr.f32.gmra.mrb[0].mxu0 %v1565
        %v2967 = vpop.f32.mrb[0].mxu0
        %v2968 = vadd.f32 %v2349, %v2967
        %v2969 = vpop.f32.mrb[0].mxu0
        %2970 = vmatprep.mubr.f32.mxu0 0.0
        %2971 = vmatmul.mubr.f32.gmra.mrb[0].mxu0 %v1567
        %v2972 = vpop.f32.mrb[0].mxu0
        %v2973 = vadd.f32 %v2349, %v2972
        %v2974 = vpop.f32.mrb[0].mxu0
        %2975 = vmatprep.mubr.f32.mxu0 0.0
        %2976 = vmatmul.mubr.f32.gmra.mrb[0].mxu0 %v1569
        %v2977 = vpop.f32.mrb[0].mxu0
        %v2978 = vadd.f32 %v2349, %v2977
        %v2979 = vpop.f32.mrb[0].mxu0
        %2980 = vmatprep.mubr.f32.mxu0 0.0
        %2981 = vmatmul.mubr.f32.gmra.mrb[0].mxu0 %v1571
        %v2982 = vpop.f32.mrb[0].mxu0
        %v2983 = vadd.f32 %v2349, %v2982
        %v2984 = vpop.f32.mrb[0].mxu0
        %2985 = vmatprep.mubr.f32.mxu0 0.0
        %2986 = vmatmul.mubr.f32.gmra.mrb[0].mxu0 %v1573
        %v2987 = vpop.f32.mrb[0].mxu0
        %v2988 = vadd.f32 %v2349, %v2987
        %v2989 = vpop.f32.mrb[0].mxu0
        %2990 = vmatprep.mubr.f32.mxu0 0.0
        %2991 = vmatmul.mubr.f32.gmra.mrb[0].mxu0 %v1575
        %v2992 = vpop.f32.mrb[0].mxu0
        %v2993 = vadd.f32 %v2349, %v2992
        %v2994 = vpop.f32.mrb[0].mxu0
        %2995 = vmatprep.mubr.f32.mxu0 0.0
        %2996 = vmatmul.mubr.f32.gmra.mrb[0].mxu0 %v1577
        %v2997 = vpop.f32.mrb[0].mxu0
        %v2998 = vadd.f32 %v2349, %v2997
        %v2999 = vpop.f32.mrb[0].mxu0
        %3000 = vmatprep.mubr.f32.mxu0 0.0
        %3001 = vmatmul.mubr.f32.gmra.mrb[0].mxu0 %v1579
        %v3002 = vpop.f32.mrb[0].mxu0
        %v3003 = vadd.f32 %v2349, %v3002
        %v3004 = vpop.f32.mrb[0].mxu0
        %3005 = vmatprep.mubr.f32.mxu0 0.0
        %3006 = vmatmul.mubr.f32.gmra.mrb[0].mxu0 %v1581
        %v3007 = vpop.f32.mrb[0].mxu0
        %v3008 = vadd.f32 %v2349, %v3007
        %v3009 = vpop.f32.mrb[0].mxu0
        %3010 = vmatprep.mubr.f32.mxu0 0.0
        %3011 = vmatmul.mubr.f32.gmra.mrb[0].mxu0 %v1583
        %v3012 = vpop.f32.mrb[0].mxu0
        %v3013 = vadd.f32 %v2349, %v3012
        %v3014 = vpop.f32.mrb[0].mxu0
        %3015 = vmatprep.mubr.f32.mxu0 0.0
        %3016 = vmatmul.mubr.f32.gmra.mrb[0].mxu0 %v1585
        %v3017 = vpop.f32.mrb[0].mxu0
        %v3018 = vadd.f32 %v2349, %v3017
        %v3019 = vpop.f32.mrb[0].mxu0
        %3020 = vmatprep.mubr.f32.mxu0 0.0
        %3021 = vmatmul.mubr.f32.gmra.mrb[0].mxu0 %v1587
        %v3022 = vpop.f32.mrb[0].mxu0
        %v3023 = vadd.f32 %v2349, %v3022
        %v3024 = vpop.f32.mrb[0].mxu0
        %3025 = vmatprep.mubr.f32.mxu0 0.0
        %3026 = vmatmul.mubr.f32.gmra.mrb[0].mxu0 %v1589
        %v3027 = vpop.f32.mrb[0].mxu0
        %v3028 = vadd.f32 %v2349, %v3027
        %v3029 = vpop.f32.mrb[0].mxu0
        %3030 = vmatprep.mubr.f32.mxu0 0.0
        %3031 = vmatmul.mubr.f32.gmra.mrb[0].mxu0 %v1591
        %v3032 = vpop.f32.mrb[0].mxu0
        %v3033 = vadd.f32 %v2349, %v3032
        %v3034 = vpop.f32.mrb[0].mxu0
        %3035 = vmatprep.mubr.f32.mxu0 0.0
        %3036 = vmatmul.mubr.f32.gmra.mrb[0].mxu0 %v1593
        %v3037 = vpop.f32.mrb[0].mxu0
        %v3038 = vadd.f32 %v2349, %v3037
        %v3039 = vpop.f32.mrb[0].mxu0
        %3040 = vmatprep.mubr.f32.mxu0 0.0
        %3041 = vmatmul.mubr.f32.gmra.mrb[0].mxu0 %v1595
        %v3042 = vpop.f32.mrb[0].mxu0
        %v3043 = vadd.f32 %v2349, %v3042
        %v3044 = vpop.f32.mrb[0].mxu0
        %3045 = vmatprep.mubr.f32.mxu0 0.0
        %3046 = vmatmul.mubr.f32.gmra.mrb[0].mxu0 %v1597
        %v3047 = vpop.f32.mrb[0].mxu0
        %v3048 = vadd.f32 %v2349, %v3047
        %v3049 = vpop.f32.mrb[0].mxu0
        %3050 = vmatprep.mubr.f32.mxu0 0.0
        %3051 = vmatmul.mubr.f32.gmra.mrb[0].mxu0 %v1599
        %v3052 = vpop.f32.mrb[0].mxu0
        %v3053 = vadd.f32 %v2349, %v3052
        %v3054 = vpop.f32.mrb[0].mxu0
        %3055 = vdwg.mxu0
        %v3056 = vmax.f32 %v1690, 0.0
        %v3057 = vmax.f32 %v1695, 0.0
        %v3058 = vmax.f32 %v1700, 0.0
        %v3059 = vmax.f32 %v1705, 0.0
        %v3060 = vmax.f32 %v1710, 0.0
        %v3061 = vmax.f32 %v1715, 0.0
        %v3062 = vmax.f32 %v1720, 0.0
        %v3063 = vmax.f32 %v1725, 0.0
        %v3064 = vmax.f32 %v1730, 0.0
        %v3065 = vmax.f32 %v1735, 0.0
        %v3066 = vmax.f32 %v1740, 0.0
        %v3067 = vmax.f32 %v1745, 0.0
        %v3068 = vmax.f32 %v1750, 0.0
        %v3069 = vmax.f32 %v1755, 0.0
        %v3070 = vmax.f32 %v1760, 0.0
        %v3071 = vmax.f32 %v1765, 0.0
        %v3072 = vmax.f32 %v1770, 0.0
        %v3073 = vmax.f32 %v1775, 0.0
        %v3074 = vmax.f32 %v1780, 0.0
        %v3075 = vmax.f32 %v1785, 0.0
        %v3076 = vmax.f32 %v1790, 0.0
        %v3077 = vmax.f32 %v1795, 0.0
        %v3078 = vmax.f32 %v1800, 0.0
        %v3079 = vmax.f32 %v1805, 0.0
        %v3080 = vmax.f32 %v1810, 0.0
        %v3081 = vmax.f32 %v1815, 0.0
        %v3082 = vmax.f32 %v1820, 0.0
        %v3083 = vmax.f32 %v1825, 0.0
        %v3084 = vmax.f32 %v1830, 0.0
        %v3085 = vmax.f32 %v1835, 0.0
        %v3086 = vmax.f32 %v1840, 0.0
        %v3087 = vmax.f32 %v1845, 0.0
        %v3088 = vmax.f32 %v1850, 0.0
        %v3089 = vmax.f32 %v1855, 0.0
        %v3090 = vmax.f32 %v1860, 0.0
        %v3091 = vmax.f32 %v1865, 0.0
        %v3092 = vmax.f32 %v1870, 0.0
        %v3093 = vmax.f32 %v1875, 0.0
        %v3094 = vmax.f32 %v1880, 0.0
        %v3095 = vmax.f32 %v1885, 0.0
        %v3096 = vmax.f32 %v1890, 0.0
        %v3097 = vmax.f32 %v1895, 0.0
        %v3098 = vmax.f32 %v1900, 0.0
        %v3099 = vmax.f32 %v1905, 0.0
        %v3100 = vmax.f32 %v1910, 0.0
        %v3101 = vmax.f32 %v1915, 0.0
        %v3102 = vmax.f32 %v1920, 0.0
        %v3103 = vmax.f32 %v1925, 0.0
        %v3104 = vmax.f32 %v1930, 0.0
        %v3105 = vmax.f32 %v1935, 0.0
        %v3106 = vmax.f32 %v1940, 0.0
        %v3107 = vmax.f32 %v1945, 0.0
        %v3108 = vmax.f32 %v1950, 0.0
        %v3109 = vmax.f32 %v1955, 0.0
        %v3110 = vmax.f32 %v1960, 0.0
        %v3111 = vmax.f32 %v1965, 0.0
        %v3112 = vmax.f32 %v1970, 0.0
        %v3113 = vmax.f32 %v1975, 0.0
        %v3114 = vmax.f32 %v1980, 0.0
        %v3115 = vmax.f32 %v1985, 0.0
        %v3116 = vmax.f32 %v1990, 0.0
        %v3117 = vmax.f32 %v1995, 0.0
        %v3118 = vmax.f32 %v2000, 0.0
        %v3119 = vmax.f32 %v2005, 0.0
        %v3120 = vmax.f32 %v2010, 0.0
        %v3121 = vmax.f32 %v2015, 0.0
        %v3122 = vmax.f32 %v2020, 0.0
        %v3123 = vmax.f32 %v2025, 0.0
        %v3124 = vmax.f32 %v2030, 0.0
        %v3125 = vmax.f32 %v2035, 0.0
        %v3126 = vmax.f32 %v2040, 0.0
        %v3127 = vmax.f32 %v2045, 0.0
        %v3128 = vmax.f32 %v2050, 0.0
        %v3129 = vmax.f32 %v2055, 0.0
        %v3130 = vmax.f32 %v2060, 0.0
        %v3131 = vmax.f32 %v2065, 0.0
        %v3132 = vmax.f32 %v2070, 0.0
        %v3133 = vmax.f32 %v2075, 0.0
        %v3134 = vmax.f32 %v2080, 0.0
        %v3135 = vmax.f32 %v2085, 0.0
        %v3136 = vmax.f32 %v2090, 0.0
        %v3137 = vmax.f32 %v2095, 0.0
        %v3138 = vmax.f32 %v2100, 0.0
        %v3139 = vmax.f32 %v2105, 0.0
        %v3140 = vmax.f32 %v2110, 0.0
        %v3141 = vmax.f32 %v2115, 0.0
        %v3142 = vmax.f32 %v2120, 0.0
        %v3143 = vmax.f32 %v2125, 0.0
        %v3144 = vmax.f32 %v2130, 0.0
        %v3145 = vmax.f32 %v2135, 0.0
        %v3146 = vmax.f32 %v2140, 0.0
        %v3147 = vmax.f32 %v2145, 0.0
        %v3148 = vmax.f32 %v2150, 0.0
        %v3149 = vmax.f32 %v2155, 0.0
        %v3150 = vmax.f32 %v2160, 0.0
        %v3151 = vmax.f32 %v2165, 0.0
        %v3152 = vmax.f32 %v2170, 0.0
        %v3153 = vmax.f32 %v2175, 0.0
        %v3154 = vmax.f32 %v2180, 0.0
        %v3155 = vmax.f32 %v2185, 0.0
        %v3156 = vmax.f32 %v2190, 0.0
        %v3157 = vmax.f32 %v2195, 0.0
        %v3158 = vmax.f32 %v2200, 0.0
        %v3159 = vmax.f32 %v2205, 0.0
        %v3160 = vmax.f32 %v2210, 0.0
        %v3161 = vmax.f32 %v2215, 0.0
        %v3162 = vmax.f32 %v2220, 0.0
        %v3163 = vmax.f32 %v2225, 0.0
        %v3164 = vmax.f32 %v2230, 0.0
        %v3165 = vmax.f32 %v2235, 0.0
        %v3166 = vmax.f32 %v2240, 0.0
        %v3167 = vmax.f32 %v2245, 0.0
        %v3168 = vmax.f32 %v2250, 0.0
        %v3169 = vmax.f32 %v2255, 0.0
        %v3170 = vmax.f32 %v2260, 0.0
        %v3171 = vmax.f32 %v2265, 0.0
        %v3172 = vmax.f32 %v2270, 0.0
        %v3173 = vmax.f32 %v2275, 0.0
        %v3174 = vmax.f32 %v2280, 0.0
        %v3175 = vmax.f32 %v2285, 0.0
        %v3176 = vmax.f32 %v2290, 0.0
        %v3177 = vmax.f32 %v2295, 0.0
        %v3178 = vmax.f32 %v2300, 0.0
        %v3179 = vmax.f32 %v2305, 0.0
        %v3180 = vmax.f32 %v2310, 0.0
        %v3181 = vmax.f32 %v2315, 0.0
        %v3182 = vmax.f32 %v2320, 0.0
        %v3183 = vmax.f32 %v2325, 0.0
        %3184 = vst [vmem:[%s308] sm:$0xff] %v3056
        %3185 = vst [vmem:[%s308 + $0x8] sm:$0xff] %v3057
        %3186 = vst [vmem:[%s308 + $0x10] sm:$0xff] %v3058
        %3187 = vst [vmem:[%s308 + $0x18] sm:$0xff] %v3059
        %3188 = vst [vmem:[%s308 + $0x20] sm:$0xff] %v3060
        %3189 = vst [vmem:[%s308 + $0x28] sm:$0xff] %v3061
        %3190 = vst [vmem:[%s308 + $0x30] sm:$0xff] %v3062
        %3191 = vst [vmem:[%s308 + $0x38] sm:$0xff] %v3063
        %3192 = vst [vmem:[%s308 + $0x40] sm:$0xff] %v3064
        %3193 = vst [vmem:[%s308 + $0x48] sm:$0xff] %v3065
        %3194 = vst [vmem:[%s308 + $0x50] sm:$0xff] %v3066
        %3195 = vst [vmem:[%s308 + $0x58] sm:$0xff] %v3067
        %3196 = vst [vmem:[%s308 + $0x60] sm:$0xff] %v3068
        %3197 = vst [vmem:[%s308 + $0x68] sm:$0xff] %v3069
        %3198 = vst [vmem:[%s308 + $0x70] sm:$0xff] %v3070
        %3199 = vst [vmem:[%s308 + $0x78] sm:$0xff] %v3071
        %3200 = vst [vmem:[%s308 + $0x80] sm:$0xff] %v3072
        %3201 = vst [vmem:[%s308 + $0x88] sm:$0xff] %v3073
        %3202 = vst [vmem:[%s308 + $0x90] sm:$0xff] %v3074
        %3203 = vst [vmem:[%s308 + $0x98] sm:$0xff] %v3075
        %3204 = vst [vmem:[%s308 + $0xa0] sm:$0xff] %v3076
        %3205 = vst [vmem:[%s308 + $0xa8] sm:$0xff] %v3077
        %3206 = vst [vmem:[%s308 + $0xb0] sm:$0xff] %v3078
        %3207 = vst [vmem:[%s308 + $0xb8] sm:$0xff] %v3079
        %3208 = vst [vmem:[%s308 + $0xc0] sm:$0xff] %v3080
        %3209 = vst [vmem:[%s308 + $0xc8] sm:$0xff] %v3081
        %3210 = vst [vmem:[%s308 + $0xd0] sm:$0xff] %v3082
        %3211 = vst [vmem:[%s308 + $0xd8] sm:$0xff] %v3083
        %3212 = vst [vmem:[%s308 + $0xe0] sm:$0xff] %v3084
        %3213 = vst [vmem:[%s308 + $0xe8] sm:$0xff] %v3085
        %3214 = vst [vmem:[%s308 + $0xf0] sm:$0xff] %v3086
        %3215 = vst [vmem:[%s308 + $0xf8] sm:$0xff] %v3087
        %3216 = vst [vmem:[%s308 + $0x100] sm:$0xff] %v3088
        %3217 = vst [vmem:[%s308 + $0x108] sm:$0xff] %v3089
        %3218 = vst [vmem:[%s308 + $0x110] sm:$0xff] %v3090
        %3219 = vst [vmem:[%s308 + $0x118] sm:$0xff] %v3091
        %3220 = vst [vmem:[%s308 + $0x120] sm:$0xff] %v3092
        %3221 = vst [vmem:[%s308 + $0x128] sm:$0xff] %v3093
        %3222 = vst [vmem:[%s308 + $0x130] sm:$0xff] %v3094
        %3223 = vst [vmem:[%s308 + $0x138] sm:$0xff] %v3095
        %3224 = vst [vmem:[%s308 + $0x140] sm:$0xff] %v3096
        %3225 = vst [vmem:[%s308 + $0x148] sm:$0xff] %v3097
        %3226 = vst [vmem:[%s308 + $0x150] sm:$0xff] %v3098
        %3227 = vst [vmem:[%s308 + $0x158] sm:$0xff] %v3099
        %3228 = vst [vmem:[%s308 + $0x160] sm:$0xff] %v3100
        %3229 = vst [vmem:[%s308 + $0x168] sm:$0xff] %v3101
        %3230 = vst [vmem:[%s308 + $0x170] sm:$0xff] %v3102
        %3231 = vst [vmem:[%s308 + $0x178] sm:$0xff] %v3103
        %3232 = vst [vmem:[%s308 + $0x180] sm:$0xff] %v3104
        %3233 = vst [vmem:[%s308 + $0x188] sm:$0xff] %v3105
        %3234 = vst [vmem:[%s308 + $0x190] sm:$0xff] %v3106
        %3235 = vst [vmem:[%s308 + $0x198] sm:$0xff] %v3107
        %3236 = vst [vmem:[%s308 + $0x1a0] sm:$0xff] %v3108
        %3237 = vst [vmem:[%s308 + $0x1a8] sm:$0xff] %v3109
        %3238 = vst [vmem:[%s308 + $0x1b0] sm:$0xff] %v3110
        %3239 = vst [vmem:[%s308 + $0x1b8] sm:$0xff] %v3111
        %3240 = vst [vmem:[%s308 + $0x1c0] sm:$0xff] %v3112
        %3241 = vst [vmem:[%s308 + $0x1c8] sm:$0xff] %v3113
        %3242 = vst [vmem:[%s308 + $0x1d0] sm:$0xff] %v3114
        %3243 = vst [vmem:[%s308 + $0x1d8] sm:$0xff] %v3115
        %3244 = vst [vmem:[%s308 + $0x1e0] sm:$0xff] %v3116
        %3245 = vst [vmem:[%s308 + $0x1e8] sm:$0xff] %v3117
        %3246 = vst [vmem:[%s308 + $0x1f0] sm:$0xff] %v3118
        %3247 = vst [vmem:[%s308 + $0x1f8] sm:$0xff] %v3119
        %3248 = vst [vmem:[%s308 + $0x200] sm:$0xff] %v3120
        %3249 = vst [vmem:[%s308 + $0x208] sm:$0xff] %v3121
        %3250 = vst [vmem:[%s308 + $0x210] sm:$0xff] %v3122
        %3251 = vst [vmem:[%s308 + $0x218] sm:$0xff] %v3123
        %3252 = vst [vmem:[%s308 + $0x220] sm:$0xff] %v3124
        %3253 = vst [vmem:[%s308 + $0x228] sm:$0xff] %v3125
        %3254 = vst [vmem:[%s308 + $0x230] sm:$0xff] %v3126
        %3255 = vst [vmem:[%s308 + $0x238] sm:$0xff] %v3127
        %3256 = vst [vmem:[%s308 + $0x240] sm:$0xff] %v3128
        %3257 = vst [vmem:[%s308 + $0x248] sm:$0xff] %v3129
        %3258 = vst [vmem:[%s308 + $0x250] sm:$0xff] %v3130
        %3259 = vst [vmem:[%s308 + $0x258] sm:$0xff] %v3131
        %3260 = vst [vmem:[%s308 + $0x260] sm:$0xff] %v3132
        %3261 = vst [vmem:[%s308 + $0x268] sm:$0xff] %v3133
        %3262 = vst [vmem:[%s308 + $0x270] sm:$0xff] %v3134
        %3263 = vst [vmem:[%s308 + $0x278] sm:$0xff] %v3135
        %3264 = vst [vmem:[%s308 + $0x280] sm:$0xff] %v3136
        %3265 = vst [vmem:[%s308 + $0x288] sm:$0xff] %v3137
        %3266 = vst [vmem:[%s308 + $0x290] sm:$0xff] %v3138
        %3267 = vst [vmem:[%s308 + $0x298] sm:$0xff] %v3139
        %3268 = vst [vmem:[%s308 + $0x2a0] sm:$0xff] %v3140
        %3269 = vst [vmem:[%s308 + $0x2a8] sm:$0xff] %v3141
        %3270 = vst [vmem:[%s308 + $0x2b0] sm:$0xff] %v3142
        %3271 = vst [vmem:[%s308 + $0x2b8] sm:$0xff] %v3143
        %3272 = vst [vmem:[%s308 + $0x2c0] sm:$0xff] %v3144
        %3273 = vst [vmem:[%s308 + $0x2c8] sm:$0xff] %v3145
        %3274 = vst [vmem:[%s308 + $0x2d0] sm:$0xff] %v3146
        %3275 = vst [vmem:[%s308 + $0x2d8] sm:$0xff] %v3147
        %3276 = vst [vmem:[%s308 + $0x2e0] sm:$0xff] %v3148
        %3277 = vst [vmem:[%s308 + $0x2e8] sm:$0xff] %v3149
        %3278 = vst [vmem:[%s308 + $0x2f0] sm:$0xff] %v3150
        %3279 = vst [vmem:[%s308 + $0x2f8] sm:$0xff] %v3151
        %3280 = vst [vmem:[%s308 + $0x300] sm:$0xff] %v3152
        %3281 = vst [vmem:[%s308 + $0x308] sm:$0xff] %v3153
        %3282 = vst [vmem:[%s308 + $0x310] sm:$0xff] %v3154
        %3283 = vst [vmem:[%s308 + $0x318] sm:$0xff] %v3155
        %3284 = vst [vmem:[%s308 + $0x320] sm:$0xff] %v3156
        %3285 = vst [vmem:[%s308 + $0x328] sm:$0xff] %v3157
        %3286 = vst [vmem:[%s308 + $0x330] sm:$0xff] %v3158
        %3287 = vst [vmem:[%s308 + $0x338] sm:$0xff] %v3159
        %3288 = vst [vmem:[%s308 + $0x340] sm:$0xff] %v3160
        %3289 = vst [vmem:[%s308 + $0x348] sm:$0xff] %v3161
        %3290 = vst [vmem:[%s308 + $0x350] sm:$0xff] %v3162
        %3291 = vst [vmem:[%s308 + $0x358] sm:$0xff] %v3163
        %3292 = vst [vmem:[%s308 + $0x360] sm:$0xff] %v3164
        %3293 = vst [vmem:[%s308 + $0x368] sm:$0xff] %v3165
        %3294 = vst [vmem:[%s308 + $0x370] sm:$0xff] %v3166
        %3295 = vst [vmem:[%s308 + $0x378] sm:$0xff] %v3167
        %3296 = vst [vmem:[%s308 + $0x380] sm:$0xff] %v3168
        %3297 = vst [vmem:[%s308 + $0x388] sm:$0xff] %v3169
        %3298 = vst [vmem:[%s308 + $0x390] sm:$0xff] %v3170
        %3299 = vst [vmem:[%s308 + $0x398] sm:$0xff] %v3171
        %3300 = vst [vmem:[%s308 + $0x3a0] sm:$0xff] %v3172
        %3301 = vst [vmem:[%s308 + $0x3a8] sm:$0xff] %v3173
        %3302 = vst [vmem:[%s308 + $0x3b0] sm:$0xff] %v3174
        %3303 = vst [vmem:[%s308 + $0x3b8] sm:$0xff] %v3175
        %3304 = vst [vmem:[%s308 + $0x3c0] sm:$0xff] %v3176
        %3305 = vst [vmem:[%s308 + $0x3c8] sm:$0xff] %v3177
        %3306 = vst [vmem:[%s308 + $0x3d0] sm:$0xff] %v3178
        %3307 = vst [vmem:[%s308 + $0x3d8] sm:$0xff] %v3179
        %3308 = vst [vmem:[%s308 + $0x3e0] sm:$0xff] %v3180
        %3309 = vst [vmem:[%s308 + $0x3e8] sm:$0xff] %v3181
        %3310 = vst [vmem:[%s308 + $0x3f0] sm:$0xff] %v3182
        %3311 = vst [vmem:[%s308 + $0x3f8] sm:$0xff] %v3183
        %v3312 = vmax.f32 %v2418, 0.0
        %v3313 = vmax.f32 %v2423, 0.0
        %v3314 = vmax.f32 %v2428, 0.0
        %v3315 = vmax.f32 %v2433, 0.0
        %v3316 = vmax.f32 %v2438, 0.0
        %v3317 = vmax.f32 %v2443, 0.0
        %v3318 = vmax.f32 %v2448, 0.0
        %v3319 = vmax.f32 %v2453, 0.0
        %v3320 = vmax.f32 %v2458, 0.0
        %v3321 = vmax.f32 %v2463, 0.0
        %v3322 = vmax.f32 %v2468, 0.0
        %v3323 = vmax.f32 %v2473, 0.0
        %v3324 = vmax.f32 %v2478, 0.0
        %v3325 = vmax.f32 %v2483, 0.0
        %v3326 = vmax.f32 %v2488, 0.0
        %v3327 = vmax.f32 %v2493, 0.0
        %v3328 = vmax.f32 %v2498, 0.0
        %v3329 = vmax.f32 %v2503, 0.0
        %v3330 = vmax.f32 %v2508, 0.0
        %v3331 = vmax.f32 %v2513, 0.0
        %v3332 = vmax.f32 %v2518, 0.0
        %v3333 = vmax.f32 %v2523, 0.0
        %v3334 = vmax.f32 %v2528, 0.0
        %v3335 = vmax.f32 %v2533, 0.0
        %v3336 = vmax.f32 %v2538, 0.0
        %v3337 = vmax.f32 %v2543, 0.0
        %v3338 = vmax.f32 %v2548, 0.0
        %v3339 = vmax.f32 %v2553, 0.0
        %v3340 = vmax.f32 %v2558, 0.0
        %v3341 = vmax.f32 %v2563, 0.0
        %v3342 = vmax.f32 %v2568, 0.0
        %v3343 = vmax.f32 %v2573, 0.0
        %v3344 = vmax.f32 %v2578, 0.0
        %v3345 = vmax.f32 %v2583, 0.0
        %v3346 = vmax.f32 %v2588, 0.0
        %v3347 = vmax.f32 %v2593, 0.0
        %v3348 = vmax.f32 %v2598, 0.0
        %v3349 = vmax.f32 %v2603, 0.0
        %v3350 = vmax.f32 %v2608, 0.0
        %v3351 = vmax.f32 %v2613, 0.0
        %v3352 = vmax.f32 %v2618, 0.0
        %v3353 = vmax.f32 %v2623, 0.0
        %v3354 = vmax.f32 %v2628, 0.0
        %v3355 = vmax.f32 %v2633, 0.0
        %v3356 = vmax.f32 %v2638, 0.0
        %v3357 = vmax.f32 %v2643, 0.0
        %v3358 = vmax.f32 %v2648, 0.0
        %v3359 = vmax.f32 %v2653, 0.0
        %v3360 = vmax.f32 %v2658, 0.0
        %v3361 = vmax.f32 %v2663, 0.0
        %v3362 = vmax.f32 %v2668, 0.0
        %v3363 = vmax.f32 %v2673, 0.0
        %v3364 = vmax.f32 %v2678, 0.0
        %v3365 = vmax.f32 %v2683, 0.0
        %v3366 = vmax.f32 %v2688, 0.0
        %v3367 = vmax.f32 %v2693, 0.0
        %v3368 = vmax.f32 %v2698, 0.0
        %v3369 = vmax.f32 %v2703, 0.0
        %v3370 = vmax.f32 %v2708, 0.0
        %v3371 = vmax.f32 %v2713, 0.0
        %v3372 = vmax.f32 %v2718, 0.0
        %v3373 = vmax.f32 %v2723, 0.0
        %v3374 = vmax.f32 %v2728, 0.0
        %v3375 = vmax.f32 %v2733, 0.0
        %v3376 = vmax.f32 %v2738, 0.0
        %v3377 = vmax.f32 %v2743, 0.0
        %v3378 = vmax.f32 %v2748, 0.0
        %v3379 = vmax.f32 %v2753, 0.0
        %v3380 = vmax.f32 %v2758, 0.0
        %v3381 = vmax.f32 %v2763, 0.0
        %v3382 = vmax.f32 %v2768, 0.0
        %v3383 = vmax.f32 %v2773, 0.0
        %v3384 = vmax.f32 %v2778, 0.0
        %v3385 = vmax.f32 %v2783, 0.0
        %v3386 = vmax.f32 %v2788, 0.0
        %v3387 = vmax.f32 %v2793, 0.0
        %v3388 = vmax.f32 %v2798, 0.0
        %v3389 = vmax.f32 %v2803, 0.0
        %v3390 = vmax.f32 %v2808, 0.0
        %v3391 = vmax.f32 %v2813, 0.0
        %v3392 = vmax.f32 %v2818, 0.0
        %v3393 = vmax.f32 %v2823, 0.0
        %v3394 = vmax.f32 %v2828, 0.0
        %v3395 = vmax.f32 %v2833, 0.0
        %v3396 = vmax.f32 %v2838, 0.0
        %v3397 = vmax.f32 %v2843, 0.0
        %v3398 = vmax.f32 %v2848, 0.0
        %v3399 = vmax.f32 %v2853, 0.0
        %v3400 = vmax.f32 %v2858, 0.0
        %v3401 = vmax.f32 %v2863, 0.0
        %v3402 = vmax.f32 %v2868, 0.0
        %v3403 = vmax.f32 %v2873, 0.0
        %v3404 = vmax.f32 %v2878, 0.0
        %v3405 = vmax.f32 %v2883, 0.0
        %v3406 = vmax.f32 %v2888, 0.0
        %v3407 = vmax.f32 %v2893, 0.0
        %v3408 = vmax.f32 %v2898, 0.0
        %v3409 = vmax.f32 %v2903, 0.0
        %v3410 = vmax.f32 %v2908, 0.0
        %v3411 = vmax.f32 %v2913, 0.0
        %v3412 = vmax.f32 %v2918, 0.0
        %v3413 = vmax.f32 %v2923, 0.0
        %v3414 = vmax.f32 %v2928, 0.0
        %v3415 = vmax.f32 %v2933, 0.0
        %v3416 = vmax.f32 %v2938, 0.0
        %v3417 = vmax.f32 %v2943, 0.0
        %v3418 = vmax.f32 %v2948, 0.0
        %v3419 = vmax.f32 %v2953, 0.0
        %v3420 = vmax.f32 %v2958, 0.0
        %v3421 = vmax.f32 %v2963, 0.0
        %v3422 = vmax.f32 %v2968, 0.0
        %v3423 = vmax.f32 %v2973, 0.0
        %v3424 = vmax.f32 %v2978, 0.0
        %v3425 = vmax.f32 %v2983, 0.0
        %v3426 = vmax.f32 %v2988, 0.0
        %v3427 = vmax.f32 %v2993, 0.0
        %v3428 = vmax.f32 %v2998, 0.0
        %v3429 = vmax.f32 %v3003, 0.0
        %v3430 = vmax.f32 %v3008, 0.0
        %v3431 = vmax.f32 %v3013, 0.0
        %v3432 = vmax.f32 %v3018, 0.0
        %v3433 = vmax.f32 %v3023, 0.0
        %v3434 = vmax.f32 %v3028, 0.0
        %v3435 = vmax.f32 %v3033, 0.0
        %v3436 = vmax.f32 %v3038, 0.0
        %v3437 = vmax.f32 %v3043, 0.0
        %v3438 = vmax.f32 %v3048, 0.0
        %v3439 = vmax.f32 %v3053, 0.0
        %3440 = vst [vmem:[%s314] sm:$0xff] %v3312
        %3441 = vst [vmem:[%s314 + $0x8] sm:$0xff] %v3313
        %3442 = vst [vmem:[%s314 + $0x10] sm:$0xff] %v3314
        %3443 = vst [vmem:[%s314 + $0x18] sm:$0xff] %v3315
        %3444 = vst [vmem:[%s314 + $0x20] sm:$0xff] %v3316
        %3445 = vst [vmem:[%s314 + $0x28] sm:$0xff] %v3317
        %3446 = vst [vmem:[%s314 + $0x30] sm:$0xff] %v3318
        %3447 = vst [vmem:[%s314 + $0x38] sm:$0xff] %v3319
        %3448 = vst [vmem:[%s314 + $0x40] sm:$0xff] %v3320
        %3449 = vst [vmem:[%s314 + $0x48] sm:$0xff] %v3321
        %3450 = vst [vmem:[%s314 + $0x50] sm:$0xff] %v3322
        %3451 = vst [vmem:[%s314 + $0x58] sm:$0xff] %v3323
        %3452 = vst [vmem:[%s314 + $0x60] sm:$0xff] %v3324
        %3453 = vst [vmem:[%s314 + $0x68] sm:$0xff] %v3325
        %3454 = vst [vmem:[%s314 + $0x70] sm:$0xff] %v3326
        %3455 = vst [vmem:[%s314 + $0x78] sm:$0xff] %v3327
        %3456 = vst [vmem:[%s314 + $0x80] sm:$0xff] %v3328
        %3457 = vst [vmem:[%s314 + $0x88] sm:$0xff] %v3329
        %3458 = vst [vmem:[%s314 + $0x90] sm:$0xff] %v3330
        %3459 = vst [vmem:[%s314 + $0x98] sm:$0xff] %v3331
        %3460 = vst [vmem:[%s314 + $0xa0] sm:$0xff] %v3332
        %3461 = vst [vmem:[%s314 + $0xa8] sm:$0xff] %v3333
        %3462 = vst [vmem:[%s314 + $0xb0] sm:$0xff] %v3334
        %3463 = vst [vmem:[%s314 + $0xb8] sm:$0xff] %v3335
        %3464 = vst [vmem:[%s314 + $0xc0] sm:$0xff] %v3336
        %3465 = vst [vmem:[%s314 + $0xc8] sm:$0xff] %v3337
        %3466 = vst [vmem:[%s314 + $0xd0] sm:$0xff] %v3338
        %3467 = vst [vmem:[%s314 + $0xd8] sm:$0xff] %v3339
        %3468 = vst [vmem:[%s314 + $0xe0] sm:$0xff] %v3340
        %3469 = vst [vmem:[%s314 + $0xe8] sm:$0xff] %v3341
        %3470 = vst [vmem:[%s314 + $0xf0] sm:$0xff] %v3342
        %3471 = vst [vmem:[%s314 + $0xf8] sm:$0xff] %v3343
        %3472 = vst [vmem:[%s314 + $0x100] sm:$0xff] %v3344
        %3473 = vst [vmem:[%s314 + $0x108] sm:$0xff] %v3345
        %3474 = vst [vmem:[%s314 + $0x110] sm:$0xff] %v3346
        %3475 = vst [vmem:[%s314 + $0x118] sm:$0xff] %v3347
        %3476 = vst [vmem:[%s314 + $0x120] sm:$0xff] %v3348
        %3477 = vst [vmem:[%s314 + $0x128] sm:$0xff] %v3349
        %3478 = vst [vmem:[%s314 + $0x130] sm:$0xff] %v3350
        %3479 = vst [vmem:[%s314 + $0x138] sm:$0xff] %v3351
        %3480 = vst [vmem:[%s314 + $0x140] sm:$0xff] %v3352
        %3481 = vst [vmem:[%s314 + $0x148] sm:$0xff] %v3353
        %3482 = vst [vmem:[%s314 + $0x150] sm:$0xff] %v3354
        %3483 = vst [vmem:[%s314 + $0x158] sm:$0xff] %v3355
        %3484 = vst [vmem:[%s314 + $0x160] sm:$0xff] %v3356
        %3485 = vst [vmem:[%s314 + $0x168] sm:$0xff] %v3357
        %3486 = vst [vmem:[%s314 + $0x170] sm:$0xff] %v3358
        %3487 = vst [vmem:[%s314 + $0x178] sm:$0xff] %v3359
        %3488 = vst [vmem:[%s314 + $0x180] sm:$0xff] %v3360
        %3489 = vst [vmem:[%s314 + $0x188] sm:$0xff] %v3361
        %3490 = vst [vmem:[%s314 + $0x190] sm:$0xff] %v3362
        %3491 = vst [vmem:[%s314 + $0x198] sm:$0xff] %v3363
        %3492 = vst [vmem:[%s314 + $0x1a0] sm:$0xff] %v3364
        %3493 = vst [vmem:[%s314 + $0x1a8] sm:$0xff] %v3365
        %3494 = vst [vmem:[%s314 + $0x1b0] sm:$0xff] %v3366
        %3495 = vst [vmem:[%s314 + $0x1b8] sm:$0xff] %v3367
        %3496 = vst [vmem:[%s314 + $0x1c0] sm:$0xff] %v3368
        %3497 = vst [vmem:[%s314 + $0x1c8] sm:$0xff] %v3369
        %3498 = vst [vmem:[%s314 + $0x1d0] sm:$0xff] %v3370
        %3499 = vst [vmem:[%s314 + $0x1d8] sm:$0xff] %v3371
        %3500 = vst [vmem:[%s314 + $0x1e0] sm:$0xff] %v3372
        %3501 = vst [vmem:[%s314 + $0x1e8] sm:$0xff] %v3373
        %3502 = vst [vmem:[%s314 + $0x1f0] sm:$0xff] %v3374
        %3503 = vst [vmem:[%s314 + $0x1f8] sm:$0xff] %v3375
        %3504 = vst [vmem:[%s314 + $0x200] sm:$0xff] %v3376
        %3505 = vst [vmem:[%s314 + $0x208] sm:$0xff] %v3377
        %3506 = vst [vmem:[%s314 + $0x210] sm:$0xff] %v3378
        %3507 = vst [vmem:[%s314 + $0x218] sm:$0xff] %v3379
        %3508 = vst [vmem:[%s314 + $0x220] sm:$0xff] %v3380
        %3509 = vst [vmem:[%s314 + $0x228] sm:$0xff] %v3381
        %3510 = vst [vmem:[%s314 + $0x230] sm:$0xff] %v3382
        %3511 = vst [vmem:[%s314 + $0x238] sm:$0xff] %v3383
        %3512 = vst [vmem:[%s314 + $0x240] sm:$0xff] %v3384
        %3513 = vst [vmem:[%s314 + $0x248] sm:$0xff] %v3385
        %3514 = vst [vmem:[%s314 + $0x250] sm:$0xff] %v3386
        %3515 = vst [vmem:[%s314 + $0x258] sm:$0xff] %v3387
        %3516 = vst [vmem:[%s314 + $0x260] sm:$0xff] %v3388
        %3517 = vst [vmem:[%s314 + $0x268] sm:$0xff] %v3389
        %3518 = vst [vmem:[%s314 + $0x270] sm:$0xff] %v3390
        %3519 = vst [vmem:[%s314 + $0x278] sm:$0xff] %v3391
        %3520 = vst [vmem:[%s314 + $0x280] sm:$0xff] %v3392
        %3521 = vst [vmem:[%s314 + $0x288] sm:$0xff] %v3393
        %3522 = vst [vmem:[%s314 + $0x290] sm:$0xff] %v3394
        %3523 = vst [vmem:[%s314 + $0x298] sm:$0xff] %v3395
        %3524 = vst [vmem:[%s314 + $0x2a0] sm:$0xff] %v3396
        %3525 = vst [vmem:[%s314 + $0x2a8] sm:$0xff] %v3397
        %3526 = vst [vmem:[%s314 + $0x2b0] sm:$0xff] %v3398
        %3527 = vst [vmem:[%s314 + $0x2b8] sm:$0xff] %v3399
        %3528 = vst [vmem:[%s314 + $0x2c0] sm:$0xff] %v3400
        %3529 = vst [vmem:[%s314 + $0x2c8] sm:$0xff] %v3401
        %3530 = vst [vmem:[%s314 + $0x2d0] sm:$0xff] %v3402
        %3531 = vst [vmem:[%s314 + $0x2d8] sm:$0xff] %v3403
        %3532 = vst [vmem:[%s314 + $0x2e0] sm:$0xff] %v3404
        %3533 = vst [vmem:[%s314 + $0x2e8] sm:$0xff] %v3405
        %3534 = vst [vmem:[%s314 + $0x2f0] sm:$0xff] %v3406
        %3535 = vst [vmem:[%s314 + $0x2f8] sm:$0xff] %v3407
        %3536 = vst [vmem:[%s314 + $0x300] sm:$0xff] %v3408
        %3537 = vst [vmem:[%s314 + $0x308] sm:$0xff] %v3409
        %3538 = vst [vmem:[%s314 + $0x310] sm:$0xff] %v3410
        %3539 = vst [vmem:[%s314 + $0x318] sm:$0xff] %v3411
        %3540 = vst [vmem:[%s314 + $0x320] sm:$0xff] %v3412
        %3541 = vst [vmem:[%s314 + $0x328] sm:$0xff] %v3413
        %3542 = vst [vmem:[%s314 + $0x330] sm:$0xff] %v3414
        %3543 = vst [vmem:[%s314 + $0x338] sm:$0xff] %v3415
        %3544 = vst [vmem:[%s314 + $0x340] sm:$0xff] %v3416
        %3545 = vst [vmem:[%s314 + $0x348] sm:$0xff] %v3417
        %3546 = vst [vmem:[%s314 + $0x350] sm:$0xff] %v3418
        %3547 = vst [vmem:[%s314 + $0x358] sm:$0xff] %v3419
        %3548 = vst [vmem:[%s314 + $0x360] sm:$0xff] %v3420
        %3549 = vst [vmem:[%s314 + $0x368] sm:$0xff] %v3421
        %3550 = vst [vmem:[%s314 + $0x370] sm:$0xff] %v3422
        %3551 = vst [vmem:[%s314 + $0x378] sm:$0xff] %v3423
        %3552 = vst [vmem:[%s314 + $0x380] sm:$0xff] %v3424
        %3553 = vst [vmem:[%s314 + $0x388] sm:$0xff] %v3425
        %3554 = vst [vmem:[%s314 + $0x390] sm:$0xff] %v3426
        %3555 = vst [vmem:[%s314 + $0x398] sm:$0xff] %v3427
        %3556 = vst [vmem:[%s314 + $0x3a0] sm:$0xff] %v3428
        %3557 = vst [vmem:[%s314 + $0x3a8] sm:$0xff] %v3429
        %3558 = vst [vmem:[%s314 + $0x3b0] sm:$0xff] %v3430
        %3559 = vst [vmem:[%s314 + $0x3b8] sm:$0xff] %v3431
        %3560 = vst [vmem:[%s314 + $0x3c0] sm:$0xff] %v3432
        %3561 = vst [vmem:[%s314 + $0x3c8] sm:$0xff] %v3433
        %3562 = vst [vmem:[%s314 + $0x3d0] sm:$0xff] %v3434
        %3563 = vst [vmem:[%s314 + $0x3d8] sm:$0xff] %v3435
        %3564 = vst [vmem:[%s314 + $0x3e0] sm:$0xff] %v3436
        %3565 = vst [vmem:[%s314 + $0x3e8] sm:$0xff] %v3437
        %3566 = vst [vmem:[%s314 + $0x3f0] sm:$0xff] %v3438
        %3567 = vst [vmem:[%s314 + $0x3f8] sm:$0xff] %v3439
        %s3568 = sand.u32 %s180, 1
        %s3569 = sand.u32 %s180, 1
        %s3570 = smul.addr %s3569, 1024
        %s3571 = scalar_lea.vmem [#allocation2], %s3570
        %s3572 = sand.u32 %s206, 1
        %s3573 = sand.u32 %s206, 1
        %s3574 = smul.addr %s3573, 1024
        %s3575 = scalar_lea.vmem [#allocation3], %s3574
        // Predicated region
        $region49: #{condition_generator_forward.1} parent=47 // pred_check
          %p3576 = pneg %p190
        $region50: #{condition_generator_forward.1} parent=47 // pred_check_branch
          %3578 = sbr.rel (%p3576) target = $region52
        $region51: #{condition_generator_forward.1} parent=47 // pred_region
          %s3579 = smul.u32 128, %s20
          %s3580 = ssub.s32 255, %s3579
          %p3581 = scmp.lt.s32.totalorder %s3580, 128
          %s3582 = scalar_select %p3581, %s3580, 128
          %s3583 = smul.u32 128, %s3582
          %p3584 = scmp.ne.s32.totalorder 0, %s3583
          %s3585 = smul.addr %s3579, 8
          %s3586 = scalar_lea.vmem %s7, %s3585
          // Predicated region
          $region53: #{condition_generator_forward.1} parent=51 // pred_check
            %p3587 = pneg %p3584
          $region54: #{condition_generator_forward.1} parent=51 // pred_check_branch
            %3589 = sbr.rel (%p3587) target = $region56
          $region55: #{condition_generator_forward.1} parent=51 // pred_region
            // Predicated region
            $region57: #{condition_generator_forward.1} parent=55 // pred_check
              _
            $region58: #{condition_generator_forward.1} parent=55 // pred_check_branch
              %3591 = sbr.rel (0) target = $region60
            $region59: #{condition_generator_forward.1} parent=55 // pred_region
              // Predicated region
              $region79: #{condition_generator_forward.1} parent=59 // pred_check
                _
              $region80: #{condition_generator_forward.1} parent=59 // pred_check_branch
                %3766 = sbr.rel (0) target = $region82
              $region81: #{condition_generator_forward.1} parent=59 // pred_region
                %s3767 = sshrl.u32 %s3582, 6
                // While loop
                $region83: #{condition_generator_forward.1} parent=81 // loop_pre_header
                  _
                $region84: #{condition_generator_forward.1} parent=81 // loop_header
                  %s3769 = sphi 0, %s3771
                  %p3770 = scmp.ge.s32.totalorder %s3769, %s3767
                  %s3774 = sphi 0, %s3907
                  %s3775 = sphi %s3571, %s3910
                  %s3776 = sphi %s3586, %s3911
                $region85: #{condition_generator_forward.1} parent=81 // loop_header_branch
                  %3773 = sbr.rel (%p3770) target = $region89
                $region86: #{condition_generator_forward.1} parent=81 // loop_body
                  %v3777 = vld [vmem:[%s3775] sm:$0xff]
                  %3778 = vst [vmem:[%s3776] sm:$0xff] %v3777
                  %v3779 = vld [vmem:[%s3775 + $0x8] sm:$0xff]
                  %3780 = vst [vmem:[%s3776 + $0x8] sm:$0xff] %v3779
                  %v3781 = vld [vmem:[%s3775 + $0x10] sm:$0xff]
                  %3782 = vst [vmem:[%s3776 + $0x10] sm:$0xff] %v3781
                  %v3783 = vld [vmem:[%s3775 + $0x18] sm:$0xff]
                  %3784 = vst [vmem:[%s3776 + $0x18] sm:$0xff] %v3783
                  %v3785 = vld [vmem:[%s3775 + $0x20] sm:$0xff]
                  %3786 = vst [vmem:[%s3776 + $0x20] sm:$0xff] %v3785
                  %v3787 = vld [vmem:[%s3775 + $0x28] sm:$0xff]
                  %3788 = vst [vmem:[%s3776 + $0x28] sm:$0xff] %v3787
                  %v3789 = vld [vmem:[%s3775 + $0x30] sm:$0xff]
                  %3790 = vst [vmem:[%s3776 + $0x30] sm:$0xff] %v3789
                  %v3791 = vld [vmem:[%s3775 + $0x38] sm:$0xff]
                  %3792 = vst [vmem:[%s3776 + $0x38] sm:$0xff] %v3791
                  %v3793 = vld [vmem:[%s3775 + $0x40] sm:$0xff]
                  %3794 = vst [vmem:[%s3776 + $0x40] sm:$0xff] %v3793
                  %v3795 = vld [vmem:[%s3775 + $0x48] sm:$0xff]
                  %3796 = vst [vmem:[%s3776 + $0x48] sm:$0xff] %v3795
                  %v3797 = vld [vmem:[%s3775 + $0x50] sm:$0xff]
                  %3798 = vst [vmem:[%s3776 + $0x50] sm:$0xff] %v3797
                  %v3799 = vld [vmem:[%s3775 + $0x58] sm:$0xff]
                  %3800 = vst [vmem:[%s3776 + $0x58] sm:$0xff] %v3799
                  %v3801 = vld [vmem:[%s3775 + $0x60] sm:$0xff]
                  %3802 = vst [vmem:[%s3776 + $0x60] sm:$0xff] %v3801
                  %v3803 = vld [vmem:[%s3775 + $0x68] sm:$0xff]
                  %3804 = vst [vmem:[%s3776 + $0x68] sm:$0xff] %v3803
                  %v3805 = vld [vmem:[%s3775 + $0x70] sm:$0xff]
                  %3806 = vst [vmem:[%s3776 + $0x70] sm:$0xff] %v3805
                  %v3807 = vld [vmem:[%s3775 + $0x78] sm:$0xff]
                  %3808 = vst [vmem:[%s3776 + $0x78] sm:$0xff] %v3807
                  %v3809 = vld [vmem:[%s3775 + $0x80] sm:$0xff]
                  %3810 = vst [vmem:[%s3776 + $0x80] sm:$0xff] %v3809
                  %v3811 = vld [vmem:[%s3775 + $0x88] sm:$0xff]
                  %3812 = vst [vmem:[%s3776 + $0x88] sm:$0xff] %v3811
                  %v3813 = vld [vmem:[%s3775 + $0x90] sm:$0xff]
                  %3814 = vst [vmem:[%s3776 + $0x90] sm:$0xff] %v3813
                  %v3815 = vld [vmem:[%s3775 + $0x98] sm:$0xff]
                  %3816 = vst [vmem:[%s3776 + $0x98] sm:$0xff] %v3815
                  %v3817 = vld [vmem:[%s3775 + $0xa0] sm:$0xff]
                  %3818 = vst [vmem:[%s3776 + $0xa0] sm:$0xff] %v3817
                  %v3819 = vld [vmem:[%s3775 + $0xa8] sm:$0xff]
                  %3820 = vst [vmem:[%s3776 + $0xa8] sm:$0xff] %v3819
                  %v3821 = vld [vmem:[%s3775 + $0xb0] sm:$0xff]
                  %3822 = vst [vmem:[%s3776 + $0xb0] sm:$0xff] %v3821
                  %v3823 = vld [vmem:[%s3775 + $0xb8] sm:$0xff]
                  %3824 = vst [vmem:[%s3776 + $0xb8] sm:$0xff] %v3823
                  %v3825 = vld [vmem:[%s3775 + $0xc0] sm:$0xff]
                  %3826 = vst [vmem:[%s3776 + $0xc0] sm:$0xff] %v3825
                  %v3827 = vld [vmem:[%s3775 + $0xc8] sm:$0xff]
                  %3828 = vst [vmem:[%s3776 + $0xc8] sm:$0xff] %v3827
                  %v3829 = vld [vmem:[%s3775 + $0xd0] sm:$0xff]
                  %3830 = vst [vmem:[%s3776 + $0xd0] sm:$0xff] %v3829
                  %v3831 = vld [vmem:[%s3775 + $0xd8] sm:$0xff]
                  %3832 = vst [vmem:[%s3776 + $0xd8] sm:$0xff] %v3831
                  %v3833 = vld [vmem:[%s3775 + $0xe0] sm:$0xff]
                  %3834 = vst [vmem:[%s3776 + $0xe0] sm:$0xff] %v3833
                  %v3835 = vld [vmem:[%s3775 + $0xe8] sm:$0xff]
                  %3836 = vst [vmem:[%s3776 + $0xe8] sm:$0xff] %v3835
                  %v3837 = vld [vmem:[%s3775 + $0xf0] sm:$0xff]
                  %3838 = vst [vmem:[%s3776 + $0xf0] sm:$0xff] %v3837
                  %v3839 = vld [vmem:[%s3775 + $0xf8] sm:$0xff]
                  %3840 = vst [vmem:[%s3776 + $0xf8] sm:$0xff] %v3839
                  %v3841 = vld [vmem:[%s3775 + $0x100] sm:$0xff]
                  %3842 = vst [vmem:[%s3776 + $0x100] sm:$0xff] %v3841
                  %v3843 = vld [vmem:[%s3775 + $0x108] sm:$0xff]
                  %3844 = vst [vmem:[%s3776 + $0x108] sm:$0xff] %v3843
                  %v3845 = vld [vmem:[%s3775 + $0x110] sm:$0xff]
                  %3846 = vst [vmem:[%s3776 + $0x110] sm:$0xff] %v3845
                  %v3847 = vld [vmem:[%s3775 + $0x118] sm:$0xff]
                  %3848 = vst [vmem:[%s3776 + $0x118] sm:$0xff] %v3847
                  %v3849 = vld [vmem:[%s3775 + $0x120] sm:$0xff]
                  %3850 = vst [vmem:[%s3776 + $0x120] sm:$0xff] %v3849
                  %v3851 = vld [vmem:[%s3775 + $0x128] sm:$0xff]
                  %3852 = vst [vmem:[%s3776 + $0x128] sm:$0xff] %v3851
                  %v3853 = vld [vmem:[%s3775 + $0x130] sm:$0xff]
                  %3854 = vst [vmem:[%s3776 + $0x130] sm:$0xff] %v3853
                  %v3855 = vld [vmem:[%s3775 + $0x138] sm:$0xff]
                  %3856 = vst [vmem:[%s3776 + $0x138] sm:$0xff] %v3855
                  %v3857 = vld [vmem:[%s3775 + $0x140] sm:$0xff]
                  %3858 = vst [vmem:[%s3776 + $0x140] sm:$0xff] %v3857
                  %v3859 = vld [vmem:[%s3775 + $0x148] sm:$0xff]
                  %3860 = vst [vmem:[%s3776 + $0x148] sm:$0xff] %v3859
                  %v3861 = vld [vmem:[%s3775 + $0x150] sm:$0xff]
                  %3862 = vst [vmem:[%s3776 + $0x150] sm:$0xff] %v3861
                  %v3863 = vld [vmem:[%s3775 + $0x158] sm:$0xff]
                  %3864 = vst [vmem:[%s3776 + $0x158] sm:$0xff] %v3863
                  %v3865 = vld [vmem:[%s3775 + $0x160] sm:$0xff]
                  %3866 = vst [vmem:[%s3776 + $0x160] sm:$0xff] %v3865
                  %v3867 = vld [vmem:[%s3775 + $0x168] sm:$0xff]
                  %3868 = vst [vmem:[%s3776 + $0x168] sm:$0xff] %v3867
                  %v3869 = vld [vmem:[%s3775 + $0x170] sm:$0xff]
                  %3870 = vst [vmem:[%s3776 + $0x170] sm:$0xff] %v3869
                  %v3871 = vld [vmem:[%s3775 + $0x178] sm:$0xff]
                  %3872 = vst [vmem:[%s3776 + $0x178] sm:$0xff] %v3871
                  %v3873 = vld [vmem:[%s3775 + $0x180] sm:$0xff]
                  %3874 = vst [vmem:[%s3776 + $0x180] sm:$0xff] %v3873
                  %v3875 = vld [vmem:[%s3775 + $0x188] sm:$0xff]
                  %3876 = vst [vmem:[%s3776 + $0x188] sm:$0xff] %v3875
                  %v3877 = vld [vmem:[%s3775 + $0x190] sm:$0xff]
                  %3878 = vst [vmem:[%s3776 + $0x190] sm:$0xff] %v3877
                  %v3879 = vld [vmem:[%s3775 + $0x198] sm:$0xff]
                  %3880 = vst [vmem:[%s3776 + $0x198] sm:$0xff] %v3879
                  %v3881 = vld [vmem:[%s3775 + $0x1a0] sm:$0xff]
                  %3882 = vst [vmem:[%s3776 + $0x1a0] sm:$0xff] %v3881
                  %v3883 = vld [vmem:[%s3775 + $0x1a8] sm:$0xff]
                  %3884 = vst [vmem:[%s3776 + $0x1a8] sm:$0xff] %v3883
                  %v3885 = vld [vmem:[%s3775 + $0x1b0] sm:$0xff]
                  %3886 = vst [vmem:[%s3776 + $0x1b0] sm:$0xff] %v3885
                  %v3887 = vld [vmem:[%s3775 + $0x1b8] sm:$0xff]
                  %3888 = vst [vmem:[%s3776 + $0x1b8] sm:$0xff] %v3887
                  %v3889 = vld [vmem:[%s3775 + $0x1c0] sm:$0xff]
                  %3890 = vst [vmem:[%s3776 + $0x1c0] sm:$0xff] %v3889
                  %v3891 = vld [vmem:[%s3775 + $0x1c8] sm:$0xff]
                  %3892 = vst [vmem:[%s3776 + $0x1c8] sm:$0xff] %v3891
                  %v3893 = vld [vmem:[%s3775 + $0x1d0] sm:$0xff]
                  %3894 = vst [vmem:[%s3776 + $0x1d0] sm:$0xff] %v3893
                  %v3895 = vld [vmem:[%s3775 + $0x1d8] sm:$0xff]
                  %3896 = vst [vmem:[%s3776 + $0x1d8] sm:$0xff] %v3895
                  %v3897 = vld [vmem:[%s3775 + $0x1e0] sm:$0xff]
                  %3898 = vst [vmem:[%s3776 + $0x1e0] sm:$0xff] %v3897
                  %v3899 = vld [vmem:[%s3775 + $0x1e8] sm:$0xff]
                  %3900 = vst [vmem:[%s3776 + $0x1e8] sm:$0xff] %v3899
                  %v3901 = vld [vmem:[%s3775 + $0x1f0] sm:$0xff]
                  %3902 = vst [vmem:[%s3776 + $0x1f0] sm:$0xff] %v3901
                  %v3903 = vld [vmem:[%s3775 + $0x1f8] sm:$0xff]
                  %3904 = vst [vmem:[%s3776 + $0x1f8] sm:$0xff] %v3903
                  %s3905 = sadd.s32 1, %s3774
                  %p3906 = scmp.ge.s32.totalorder %s3905, %s3767
                  %s3907 = scalar_select %p3906, 0, %s3905
                  %s3908 = smul.u32 %s3907, 512
                  %s3909 = smul.u32 %s3907, 512
                  %s3910 = scalar_lea.vmem %s3571, %s3908 [#allocation2]
                  %s3911 = scalar_lea.vmem %s3586, %s3909
                $region87: #{condition_generator_forward.1} parent=81 // loop_footer
                  %s3771 = sadd.s32 %s3769, 1
                $region88: #{condition_generator_forward.1} parent=81 // loop_footer_branch
                  %3768 = sbr.rel target = $region84
                $region89: #{condition_generator_forward.1} parent=81 // loop_exit
                  _
                %s3912 = sshrl.u32 %s3582, 6
                %s3913 = sand.u32 %s3582, 63
                %s3914 = smul.u32 %s3912, 64
                %s3915 = smul.u32 8, %s3914
                %s3916 = scalar_lea.vmem %s3571, %s3915 [#allocation2]
                %s3917 = smul.u32 8, %s3914
                %s3918 = scalar_lea.vmem %s3586, %s3917
                // While loop
                $region90: #{condition_generator_forward.1} parent=81 // loop_pre_header
                  _
                $region91: #{condition_generator_forward.1} parent=81 // loop_header
                  %s3920 = sphi 0, %s3922
                  %p3921 = scmp.ge.s32.totalorder %s3920, %s3913
                  %s3925 = sphi 0, %s3932
                  %s3926 = sphi %s3916, %s3935
                  %s3927 = sphi %s3918, %s3936
                $region92: #{condition_generator_forward.1} parent=81 // loop_header_branch
                  %3924 = sbr.rel (%p3921) target = $region96
                $region93: #{condition_generator_forward.1} parent=81 // loop_body
                  %v3928 = vld [vmem:[%s3926] sm:$0xff]
                  %3929 = vst [vmem:[%s3927] sm:$0xff] %v3928
                  %s3930 = sadd.s32 1, %s3925
                  %p3931 = scmp.ge.s32.totalorder %s3930, %s3913
                  %s3932 = scalar_select %p3931, 0, %s3930
                  %s3933 = smul.u32 %s3932, 8
                  %s3934 = smul.u32 %s3932, 8
                  %s3935 = scalar_lea.vmem %s3916, %s3933 [#allocation2]
                  %s3936 = scalar_lea.vmem %s3918, %s3934
                $region94: #{condition_generator_forward.1} parent=81 // loop_footer
                  %s3922 = sadd.s32 %s3920, 1
                $region95: #{condition_generator_forward.1} parent=81 // loop_footer_branch
                  %3919 = sbr.rel target = $region91
                $region96: #{condition_generator_forward.1} parent=81 // loop_exit
                  _
              $region82: #{condition_generator_forward.1} parent=59 // pred_fallthru
                _
              // Predicated region
              $region97: #{condition_generator_forward.1} parent=59 // pred_check
                _
              $region98: #{condition_generator_forward.1} parent=59 // pred_check_branch
                %3938 = sbr.rel target = $region100
              $region99: #{condition_generator_forward.1} parent=59 // pred_region
                _
              $region100: #{condition_generator_forward.1} parent=59 // pred_fallthru
                _
            $region60: #{condition_generator_forward.1} parent=55 // pred_fallthru
              _
            // Predicated region
            $region61: #{condition_generator_forward.1} parent=55 // pred_check
              _
            $region62: #{condition_generator_forward.1} parent=55 // pred_check_branch
              %3593 = sbr.rel target = $region64
            $region63: #{condition_generator_forward.1} parent=55 // pred_region
              %s3595 = sshrl.u32 %s3582, 6
              // While loop
              $region65: #{condition_generator_forward.1} parent=63 // loop_pre_header
                _
              $region66: #{condition_generator_forward.1} parent=63 // loop_header
                %s3597 = sphi 0, %s3599
                %p3598 = scmp.ge.s32.totalorder %s3597, %s3595
                %s3602 = sphi 0, %s3735
                %s3603 = sphi %s3571, %s3738
                %s3604 = sphi %s3586, %s3739
              $region67: #{condition_generator_forward.1} parent=63 // loop_header_branch
                %3601 = sbr.rel (%p3598) target = $region71
              $region68: #{condition_generator_forward.1} parent=63 // loop_body
                %v3605 = vld [vmem:[%s3603] sm:$0xff]
                %3606 = vst [vmem:[%s3604] sm:$0xff] %v3605
                %v3607 = vld [vmem:[%s3603 + $0x8] sm:$0xff]
                %3608 = vst [vmem:[%s3604 + $0x8] sm:$0xff] %v3607
                %v3609 = vld [vmem:[%s3603 + $0x10] sm:$0xff]
                %3610 = vst [vmem:[%s3604 + $0x10] sm:$0xff] %v3609
                %v3611 = vld [vmem:[%s3603 + $0x18] sm:$0xff]
                %3612 = vst [vmem:[%s3604 + $0x18] sm:$0xff] %v3611
                %v3613 = vld [vmem:[%s3603 + $0x20] sm:$0xff]
                %3614 = vst [vmem:[%s3604 + $0x20] sm:$0xff] %v3613
                %v3615 = vld [vmem:[%s3603 + $0x28] sm:$0xff]
                %3616 = vst [vmem:[%s3604 + $0x28] sm:$0xff] %v3615
                %v3617 = vld [vmem:[%s3603 + $0x30] sm:$0xff]
                %3618 = vst [vmem:[%s3604 + $0x30] sm:$0xff] %v3617
                %v3619 = vld [vmem:[%s3603 + $0x38] sm:$0xff]
                %3620 = vst [vmem:[%s3604 + $0x38] sm:$0xff] %v3619
                %v3621 = vld [vmem:[%s3603 + $0x40] sm:$0xff]
                %3622 = vst [vmem:[%s3604 + $0x40] sm:$0xff] %v3621
                %v3623 = vld [vmem:[%s3603 + $0x48] sm:$0xff]
                %3624 = vst [vmem:[%s3604 + $0x48] sm:$0xff] %v3623
                %v3625 = vld [vmem:[%s3603 + $0x50] sm:$0xff]
                %3626 = vst [vmem:[%s3604 + $0x50] sm:$0xff] %v3625
                %v3627 = vld [vmem:[%s3603 + $0x58] sm:$0xff]
                %3628 = vst [vmem:[%s3604 + $0x58] sm:$0xff] %v3627
                %v3629 = vld [vmem:[%s3603 + $0x60] sm:$0xff]
                %3630 = vst [vmem:[%s3604 + $0x60] sm:$0xff] %v3629
                %v3631 = vld [vmem:[%s3603 + $0x68] sm:$0xff]
                %3632 = vst [vmem:[%s3604 + $0x68] sm:$0xff] %v3631
                %v3633 = vld [vmem:[%s3603 + $0x70] sm:$0xff]
                %3634 = vst [vmem:[%s3604 + $0x70] sm:$0xff] %v3633
                %v3635 = vld [vmem:[%s3603 + $0x78] sm:$0xff]
                %3636 = vst [vmem:[%s3604 + $0x78] sm:$0xff] %v3635
                %v3637 = vld [vmem:[%s3603 + $0x80] sm:$0xff]
                %3638 = vst [vmem:[%s3604 + $0x80] sm:$0xff] %v3637
                %v3639 = vld [vmem:[%s3603 + $0x88] sm:$0xff]
                %3640 = vst [vmem:[%s3604 + $0x88] sm:$0xff] %v3639
                %v3641 = vld [vmem:[%s3603 + $0x90] sm:$0xff]
                %3642 = vst [vmem:[%s3604 + $0x90] sm:$0xff] %v3641
                %v3643 = vld [vmem:[%s3603 + $0x98] sm:$0xff]
                %3644 = vst [vmem:[%s3604 + $0x98] sm:$0xff] %v3643
                %v3645 = vld [vmem:[%s3603 + $0xa0] sm:$0xff]
                %3646 = vst [vmem:[%s3604 + $0xa0] sm:$0xff] %v3645
                %v3647 = vld [vmem:[%s3603 + $0xa8] sm:$0xff]
                %3648 = vst [vmem:[%s3604 + $0xa8] sm:$0xff] %v3647
                %v3649 = vld [vmem:[%s3603 + $0xb0] sm:$0xff]
                %3650 = vst [vmem:[%s3604 + $0xb0] sm:$0xff] %v3649
                %v3651 = vld [vmem:[%s3603 + $0xb8] sm:$0xff]
                %3652 = vst [vmem:[%s3604 + $0xb8] sm:$0xff] %v3651
                %v3653 = vld [vmem:[%s3603 + $0xc0] sm:$0xff]
                %3654 = vst [vmem:[%s3604 + $0xc0] sm:$0xff] %v3653
                %v3655 = vld [vmem:[%s3603 + $0xc8] sm:$0xff]
                %3656 = vst [vmem:[%s3604 + $0xc8] sm:$0xff] %v3655
                %v3657 = vld [vmem:[%s3603 + $0xd0] sm:$0xff]
                %3658 = vst [vmem:[%s3604 + $0xd0] sm:$0xff] %v3657
                %v3659 = vld [vmem:[%s3603 + $0xd8] sm:$0xff]
                %3660 = vst [vmem:[%s3604 + $0xd8] sm:$0xff] %v3659
                %v3661 = vld [vmem:[%s3603 + $0xe0] sm:$0xff]
                %3662 = vst [vmem:[%s3604 + $0xe0] sm:$0xff] %v3661
                %v3663 = vld [vmem:[%s3603 + $0xe8] sm:$0xff]
                %3664 = vst [vmem:[%s3604 + $0xe8] sm:$0xff] %v3663
                %v3665 = vld [vmem:[%s3603 + $0xf0] sm:$0xff]
                %3666 = vst [vmem:[%s3604 + $0xf0] sm:$0xff] %v3665
                %v3667 = vld [vmem:[%s3603 + $0xf8] sm:$0xff]
                %3668 = vst [vmem:[%s3604 + $0xf8] sm:$0xff] %v3667
                %v3669 = vld [vmem:[%s3603 + $0x100] sm:$0xff]
                %3670 = vst [vmem:[%s3604 + $0x100] sm:$0xff] %v3669
                %v3671 = vld [vmem:[%s3603 + $0x108] sm:$0xff]
                %3672 = vst [vmem:[%s3604 + $0x108] sm:$0xff] %v3671
                %v3673 = vld [vmem:[%s3603 + $0x110] sm:$0xff]
                %3674 = vst [vmem:[%s3604 + $0x110] sm:$0xff] %v3673
                %v3675 = vld [vmem:[%s3603 + $0x118] sm:$0xff]
                %3676 = vst [vmem:[%s3604 + $0x118] sm:$0xff] %v3675
                %v3677 = vld [vmem:[%s3603 + $0x120] sm:$0xff]
                %3678 = vst [vmem:[%s3604 + $0x120] sm:$0xff] %v3677
                %v3679 = vld [vmem:[%s3603 + $0x128] sm:$0xff]
                %3680 = vst [vmem:[%s3604 + $0x128] sm:$0xff] %v3679
                %v3681 = vld [vmem:[%s3603 + $0x130] sm:$0xff]
                %3682 = vst [vmem:[%s3604 + $0x130] sm:$0xff] %v3681
                %v3683 = vld [vmem:[%s3603 + $0x138] sm:$0xff]
                %3684 = vst [vmem:[%s3604 + $0x138] sm:$0xff] %v3683
                %v3685 = vld [vmem:[%s3603 + $0x140] sm:$0xff]
                %3686 = vst [vmem:[%s3604 + $0x140] sm:$0xff] %v3685
                %v3687 = vld [vmem:[%s3603 + $0x148] sm:$0xff]
                %3688 = vst [vmem:[%s3604 + $0x148] sm:$0xff] %v3687
                %v3689 = vld [vmem:[%s3603 + $0x150] sm:$0xff]
                %3690 = vst [vmem:[%s3604 + $0x150] sm:$0xff] %v3689
                %v3691 = vld [vmem:[%s3603 + $0x158] sm:$0xff]
                %3692 = vst [vmem:[%s3604 + $0x158] sm:$0xff] %v3691
                %v3693 = vld [vmem:[%s3603 + $0x160] sm:$0xff]
                %3694 = vst [vmem:[%s3604 + $0x160] sm:$0xff] %v3693
                %v3695 = vld [vmem:[%s3603 + $0x168] sm:$0xff]
                %3696 = vst [vmem:[%s3604 + $0x168] sm:$0xff] %v3695
                %v3697 = vld [vmem:[%s3603 + $0x170] sm:$0xff]
                %3698 = vst [vmem:[%s3604 + $0x170] sm:$0xff] %v3697
                %v3699 = vld [vmem:[%s3603 + $0x178] sm:$0xff]
                %3700 = vst [vmem:[%s3604 + $0x178] sm:$0xff] %v3699
                %v3701 = vld [vmem:[%s3603 + $0x180] sm:$0xff]
                %3702 = vst [vmem:[%s3604 + $0x180] sm:$0xff] %v3701
                %v3703 = vld [vmem:[%s3603 + $0x188] sm:$0xff]
                %3704 = vst [vmem:[%s3604 + $0x188] sm:$0xff] %v3703
                %v3705 = vld [vmem:[%s3603 + $0x190] sm:$0xff]
                %3706 = vst [vmem:[%s3604 + $0x190] sm:$0xff] %v3705
                %v3707 = vld [vmem:[%s3603 + $0x198] sm:$0xff]
                %3708 = vst [vmem:[%s3604 + $0x198] sm:$0xff] %v3707
                %v3709 = vld [vmem:[%s3603 + $0x1a0] sm:$0xff]
                %3710 = vst [vmem:[%s3604 + $0x1a0] sm:$0xff] %v3709
                %v3711 = vld [vmem:[%s3603 + $0x1a8] sm:$0xff]
                %3712 = vst [vmem:[%s3604 + $0x1a8] sm:$0xff] %v3711
                %v3713 = vld [vmem:[%s3603 + $0x1b0] sm:$0xff]
                %3714 = vst [vmem:[%s3604 + $0x1b0] sm:$0xff] %v3713
                %v3715 = vld [vmem:[%s3603 + $0x1b8] sm:$0xff]
                %3716 = vst [vmem:[%s3604 + $0x1b8] sm:$0xff] %v3715
                %v3717 = vld [vmem:[%s3603 + $0x1c0] sm:$0xff]
                %3718 = vst [vmem:[%s3604 + $0x1c0] sm:$0xff] %v3717
                %v3719 = vld [vmem:[%s3603 + $0x1c8] sm:$0xff]
                %3720 = vst [vmem:[%s3604 + $0x1c8] sm:$0xff] %v3719
                %v3721 = vld [vmem:[%s3603 + $0x1d0] sm:$0xff]
                %3722 = vst [vmem:[%s3604 + $0x1d0] sm:$0xff] %v3721
                %v3723 = vld [vmem:[%s3603 + $0x1d8] sm:$0xff]
                %3724 = vst [vmem:[%s3604 + $0x1d8] sm:$0xff] %v3723
                %v3725 = vld [vmem:[%s3603 + $0x1e0] sm:$0xff]
                %3726 = vst [vmem:[%s3604 + $0x1e0] sm:$0xff] %v3725
                %v3727 = vld [vmem:[%s3603 + $0x1e8] sm:$0xff]
                %3728 = vst [vmem:[%s3604 + $0x1e8] sm:$0xff] %v3727
                %v3729 = vld [vmem:[%s3603 + $0x1f0] sm:$0xff]
                %3730 = vst [vmem:[%s3604 + $0x1f0] sm:$0xff] %v3729
                %v3731 = vld [vmem:[%s3603 + $0x1f8] sm:$0xff]
                %3732 = vst [vmem:[%s3604 + $0x1f8] sm:$0xff] %v3731
                %s3733 = sadd.s32 1, %s3602
                %p3734 = scmp.ge.s32.totalorder %s3733, %s3595
                %s3735 = scalar_select %p3734, 0, %s3733
                %s3736 = smul.u32 %s3735, 512
                %s3737 = smul.u32 %s3735, 512
                %s3738 = scalar_lea.vmem %s3571, %s3736 [#allocation2]
                %s3739 = scalar_lea.vmem %s3586, %s3737
              $region69: #{condition_generator_forward.1} parent=63 // loop_footer
                %s3599 = sadd.s32 %s3597, 1
              $region70: #{condition_generator_forward.1} parent=63 // loop_footer_branch
                %3596 = sbr.rel target = $region66
              $region71: #{condition_generator_forward.1} parent=63 // loop_exit
                _
              %s3740 = sshrl.u32 %s3582, 6
              %s3741 = sand.u32 %s3582, 63
              %s3742 = smul.u32 %s3740, 64
              %s3743 = smul.u32 8, %s3742
              %s3744 = scalar_lea.vmem %s3571, %s3743 [#allocation2]
              %s3745 = smul.u32 8, %s3742
              %s3746 = scalar_lea.vmem %s3586, %s3745
              // While loop
              $region72: #{condition_generator_forward.1} parent=63 // loop_pre_header
                _
              $region73: #{condition_generator_forward.1} parent=63 // loop_header
                %s3748 = sphi 0, %s3750
                %p3749 = scmp.ge.s32.totalorder %s3748, %s3741
                %s3753 = sphi 0, %s3760
                %s3754 = sphi %s3744, %s3763
                %s3755 = sphi %s3746, %s3764
              $region74: #{condition_generator_forward.1} parent=63 // loop_header_branch
                %3752 = sbr.rel (%p3749) target = $region78
              $region75: #{condition_generator_forward.1} parent=63 // loop_body
                %v3756 = vld [vmem:[%s3754] sm:$0xff]
                %3757 = vst [vmem:[%s3755] sm:$0xff] %v3756
                %s3758 = sadd.s32 1, %s3753
                %p3759 = scmp.ge.s32.totalorder %s3758, %s3741
                %s3760 = scalar_select %p3759, 0, %s3758
                %s3761 = smul.u32 %s3760, 8
                %s3762 = smul.u32 %s3760, 8
                %s3763 = scalar_lea.vmem %s3744, %s3761 [#allocation2]
                %s3764 = scalar_lea.vmem %s3746, %s3762
              $region76: #{condition_generator_forward.1} parent=63 // loop_footer
                %s3750 = sadd.s32 %s3748, 1
              $region77: #{condition_generator_forward.1} parent=63 // loop_footer_branch
                %3747 = sbr.rel target = $region73
              $region78: #{condition_generator_forward.1} parent=63 // loop_exit
                _
            $region64: #{condition_generator_forward.1} parent=55 // pred_fallthru
              _
          $region56: #{condition_generator_forward.1} parent=51 // pred_fallthru
            _
          %3939 = vnop
        $region52: #{condition_generator_forward.1} parent=47 // pred_fallthru
          _
        // Predicated region
        $region101: #{condition_generator_forward.1} parent=47 // pred_check
          %p3940 = pneg %p216
        $region102: #{condition_generator_forward.1} parent=47 // pred_check_branch
          %3942 = sbr.rel (%p3940) target = $region104
        $region103: #{condition_generator_forward.1} parent=47 // pred_region
          %s3943 = smul.u32 128, %s20
          %s3944 = ssub.s32 255, %s3943
          %p3945 = scmp.lt.s32.totalorder %s3944, 128
          %s3946 = scalar_select %p3945, %s3944, 128
          %s3947 = smul.u32 128, %s3946
          %p3948 = scmp.ne.s32.totalorder 0, %s3947
          %s3949 = smul.addr %s3943, 8
          %s3950 = scalar_lea.vmem %s8, %s3949
          // Predicated region
          $region105: #{condition_generator_forward.1} parent=103 // pred_check
            %p3951 = pneg %p3948
          $region106: #{condition_generator_forward.1} parent=103 // pred_check_branch
            %3953 = sbr.rel (%p3951) target = $region108
          $region107: #{condition_generator_forward.1} parent=103 // pred_region
            // Predicated region
            $region109: #{condition_generator_forward.1} parent=107 // pred_check
              _
            $region110: #{condition_generator_forward.1} parent=107 // pred_check_branch
              %3955 = sbr.rel (0) target = $region112
            $region111: #{condition_generator_forward.1} parent=107 // pred_region
              // Predicated region
              $region131: #{condition_generator_forward.1} parent=111 // pred_check
                _
              $region132: #{condition_generator_forward.1} parent=111 // pred_check_branch
                %4130 = sbr.rel (0) target = $region134
              $region133: #{condition_generator_forward.1} parent=111 // pred_region
                %s4131 = sshrl.u32 %s3946, 6
                // While loop
                $region135: #{condition_generator_forward.1} parent=133 // loop_pre_header
                  _
                $region136: #{condition_generator_forward.1} parent=133 // loop_header
                  %s4133 = sphi 0, %s4135
                  %p4134 = scmp.ge.s32.totalorder %s4133, %s4131
                  %s4138 = sphi 0, %s4271
                  %s4139 = sphi %s3575, %s4274
                  %s4140 = sphi %s3950, %s4275
                $region137: #{condition_generator_forward.1} parent=133 // loop_header_branch
                  %4137 = sbr.rel (%p4134) target = $region141
                $region138: #{condition_generator_forward.1} parent=133 // loop_body
                  %v4141 = vld [vmem:[%s4139] sm:$0xff]
                  %4142 = vst [vmem:[%s4140] sm:$0xff] %v4141
                  %v4143 = vld [vmem:[%s4139 + $0x8] sm:$0xff]
                  %4144 = vst [vmem:[%s4140 + $0x8] sm:$0xff] %v4143
                  %v4145 = vld [vmem:[%s4139 + $0x10] sm:$0xff]
                  %4146 = vst [vmem:[%s4140 + $0x10] sm:$0xff] %v4145
                  %v4147 = vld [vmem:[%s4139 + $0x18] sm:$0xff]
                  %4148 = vst [vmem:[%s4140 + $0x18] sm:$0xff] %v4147
                  %v4149 = vld [vmem:[%s4139 + $0x20] sm:$0xff]
                  %4150 = vst [vmem:[%s4140 + $0x20] sm:$0xff] %v4149
                  %v4151 = vld [vmem:[%s4139 + $0x28] sm:$0xff]
                  %4152 = vst [vmem:[%s4140 + $0x28] sm:$0xff] %v4151
                  %v4153 = vld [vmem:[%s4139 + $0x30] sm:$0xff]
                  %4154 = vst [vmem:[%s4140 + $0x30] sm:$0xff] %v4153
                  %v4155 = vld [vmem:[%s4139 + $0x38] sm:$0xff]
                  %4156 = vst [vmem:[%s4140 + $0x38] sm:$0xff] %v4155
                  %v4157 = vld [vmem:[%s4139 + $0x40] sm:$0xff]
                  %4158 = vst [vmem:[%s4140 + $0x40] sm:$0xff] %v4157
                  %v4159 = vld [vmem:[%s4139 + $0x48] sm:$0xff]
                  %4160 = vst [vmem:[%s4140 + $0x48] sm:$0xff] %v4159
                  %v4161 = vld [vmem:[%s4139 + $0x50] sm:$0xff]
                  %4162 = vst [vmem:[%s4140 + $0x50] sm:$0xff] %v4161
                  %v4163 = vld [vmem:[%s4139 + $0x58] sm:$0xff]
                  %4164 = vst [vmem:[%s4140 + $0x58] sm:$0xff] %v4163
                  %v4165 = vld [vmem:[%s4139 + $0x60] sm:$0xff]
                  %4166 = vst [vmem:[%s4140 + $0x60] sm:$0xff] %v4165
                  %v4167 = vld [vmem:[%s4139 + $0x68] sm:$0xff]
                  %4168 = vst [vmem:[%s4140 + $0x68] sm:$0xff] %v4167
                  %v4169 = vld [vmem:[%s4139 + $0x70] sm:$0xff]
                  %4170 = vst [vmem:[%s4140 + $0x70] sm:$0xff] %v4169
                  %v4171 = vld [vmem:[%s4139 + $0x78] sm:$0xff]
                  %4172 = vst [vmem:[%s4140 + $0x78] sm:$0xff] %v4171
                  %v4173 = vld [vmem:[%s4139 + $0x80] sm:$0xff]
                  %4174 = vst [vmem:[%s4140 + $0x80] sm:$0xff] %v4173
                  %v4175 = vld [vmem:[%s4139 + $0x88] sm:$0xff]
                  %4176 = vst [vmem:[%s4140 + $0x88] sm:$0xff] %v4175
                  %v4177 = vld [vmem:[%s4139 + $0x90] sm:$0xff]
                  %4178 = vst [vmem:[%s4140 + $0x90] sm:$0xff] %v4177
                  %v4179 = vld [vmem:[%s4139 + $0x98] sm:$0xff]
                  %4180 = vst [vmem:[%s4140 + $0x98] sm:$0xff] %v4179
                  %v4181 = vld [vmem:[%s4139 + $0xa0] sm:$0xff]
                  %4182 = vst [vmem:[%s4140 + $0xa0] sm:$0xff] %v4181
                  %v4183 = vld [vmem:[%s4139 + $0xa8] sm:$0xff]
                  %4184 = vst [vmem:[%s4140 + $0xa8] sm:$0xff] %v4183
                  %v4185 = vld [vmem:[%s4139 + $0xb0] sm:$0xff]
                  %4186 = vst [vmem:[%s4140 + $0xb0] sm:$0xff] %v4185
                  %v4187 = vld [vmem:[%s4139 + $0xb8] sm:$0xff]
                  %4188 = vst [vmem:[%s4140 + $0xb8] sm:$0xff] %v4187
                  %v4189 = vld [vmem:[%s4139 + $0xc0] sm:$0xff]
                  %4190 = vst [vmem:[%s4140 + $0xc0] sm:$0xff] %v4189
                  %v4191 = vld [vmem:[%s4139 + $0xc8] sm:$0xff]
                  %4192 = vst [vmem:[%s4140 + $0xc8] sm:$0xff] %v4191
                  %v4193 = vld [vmem:[%s4139 + $0xd0] sm:$0xff]
                  %4194 = vst [vmem:[%s4140 + $0xd0] sm:$0xff] %v4193
                  %v4195 = vld [vmem:[%s4139 + $0xd8] sm:$0xff]
                  %4196 = vst [vmem:[%s4140 + $0xd8] sm:$0xff] %v4195
                  %v4197 = vld [vmem:[%s4139 + $0xe0] sm:$0xff]
                  %4198 = vst [vmem:[%s4140 + $0xe0] sm:$0xff] %v4197
                  %v4199 = vld [vmem:[%s4139 + $0xe8] sm:$0xff]
                  %4200 = vst [vmem:[%s4140 + $0xe8] sm:$0xff] %v4199
                  %v4201 = vld [vmem:[%s4139 + $0xf0] sm:$0xff]
                  %4202 = vst [vmem:[%s4140 + $0xf0] sm:$0xff] %v4201
                  %v4203 = vld [vmem:[%s4139 + $0xf8] sm:$0xff]
                  %4204 = vst [vmem:[%s4140 + $0xf8] sm:$0xff] %v4203
                  %v4205 = vld [vmem:[%s4139 + $0x100] sm:$0xff]
                  %4206 = vst [vmem:[%s4140 + $0x100] sm:$0xff] %v4205
                  %v4207 = vld [vmem:[%s4139 + $0x108] sm:$0xff]
                  %4208 = vst [vmem:[%s4140 + $0x108] sm:$0xff] %v4207
                  %v4209 = vld [vmem:[%s4139 + $0x110] sm:$0xff]
                  %4210 = vst [vmem:[%s4140 + $0x110] sm:$0xff] %v4209
                  %v4211 = vld [vmem:[%s4139 + $0x118] sm:$0xff]
                  %4212 = vst [vmem:[%s4140 + $0x118] sm:$0xff] %v4211
                  %v4213 = vld [vmem:[%s4139 + $0x120] sm:$0xff]
                  %4214 = vst [vmem:[%s4140 + $0x120] sm:$0xff] %v4213
                  %v4215 = vld [vmem:[%s4139 + $0x128] sm:$0xff]
                  %4216 = vst [vmem:[%s4140 + $0x128] sm:$0xff] %v4215
                  %v4217 = vld [vmem:[%s4139 + $0x130] sm:$0xff]
                  %4218 = vst [vmem:[%s4140 + $0x130] sm:$0xff] %v4217
                  %v4219 = vld [vmem:[%s4139 + $0x138] sm:$0xff]
                  %4220 = vst [vmem:[%s4140 + $0x138] sm:$0xff] %v4219
                  %v4221 = vld [vmem:[%s4139 + $0x140] sm:$0xff]
                  %4222 = vst [vmem:[%s4140 + $0x140] sm:$0xff] %v4221
                  %v4223 = vld [vmem:[%s4139 + $0x148] sm:$0xff]
                  %4224 = vst [vmem:[%s4140 + $0x148] sm:$0xff] %v4223
                  %v4225 = vld [vmem:[%s4139 + $0x150] sm:$0xff]
                  %4226 = vst [vmem:[%s4140 + $0x150] sm:$0xff] %v4225
                  %v4227 = vld [vmem:[%s4139 + $0x158] sm:$0xff]
                  %4228 = vst [vmem:[%s4140 + $0x158] sm:$0xff] %v4227
                  %v4229 = vld [vmem:[%s4139 + $0x160] sm:$0xff]
                  %4230 = vst [vmem:[%s4140 + $0x160] sm:$0xff] %v4229
                  %v4231 = vld [vmem:[%s4139 + $0x168] sm:$0xff]
                  %4232 = vst [vmem:[%s4140 + $0x168] sm:$0xff] %v4231
                  %v4233 = vld [vmem:[%s4139 + $0x170] sm:$0xff]
                  %4234 = vst [vmem:[%s4140 + $0x170] sm:$0xff] %v4233
                  %v4235 = vld [vmem:[%s4139 + $0x178] sm:$0xff]
                  %4236 = vst [vmem:[%s4140 + $0x178] sm:$0xff] %v4235
                  %v4237 = vld [vmem:[%s4139 + $0x180] sm:$0xff]
                  %4238 = vst [vmem:[%s4140 + $0x180] sm:$0xff] %v4237
                  %v4239 = vld [vmem:[%s4139 + $0x188] sm:$0xff]
                  %4240 = vst [vmem:[%s4140 + $0x188] sm:$0xff] %v4239
                  %v4241 = vld [vmem:[%s4139 + $0x190] sm:$0xff]
                  %4242 = vst [vmem:[%s4140 + $0x190] sm:$0xff] %v4241
                  %v4243 = vld [vmem:[%s4139 + $0x198] sm:$0xff]
                  %4244 = vst [vmem:[%s4140 + $0x198] sm:$0xff] %v4243
                  %v4245 = vld [vmem:[%s4139 + $0x1a0] sm:$0xff]
                  %4246 = vst [vmem:[%s4140 + $0x1a0] sm:$0xff] %v4245
                  %v4247 = vld [vmem:[%s4139 + $0x1a8] sm:$0xff]
                  %4248 = vst [vmem:[%s4140 + $0x1a8] sm:$0xff] %v4247
                  %v4249 = vld [vmem:[%s4139 + $0x1b0] sm:$0xff]
                  %4250 = vst [vmem:[%s4140 + $0x1b0] sm:$0xff] %v4249
                  %v4251 = vld [vmem:[%s4139 + $0x1b8] sm:$0xff]
                  %4252 = vst [vmem:[%s4140 + $0x1b8] sm:$0xff] %v4251
                  %v4253 = vld [vmem:[%s4139 + $0x1c0] sm:$0xff]
                  %4254 = vst [vmem:[%s4140 + $0x1c0] sm:$0xff] %v4253
                  %v4255 = vld [vmem:[%s4139 + $0x1c8] sm:$0xff]
                  %4256 = vst [vmem:[%s4140 + $0x1c8] sm:$0xff] %v4255
                  %v4257 = vld [vmem:[%s4139 + $0x1d0] sm:$0xff]
                  %4258 = vst [vmem:[%s4140 + $0x1d0] sm:$0xff] %v4257
                  %v4259 = vld [vmem:[%s4139 + $0x1d8] sm:$0xff]
                  %4260 = vst [vmem:[%s4140 + $0x1d8] sm:$0xff] %v4259
                  %v4261 = vld [vmem:[%s4139 + $0x1e0] sm:$0xff]
                  %4262 = vst [vmem:[%s4140 + $0x1e0] sm:$0xff] %v4261
                  %v4263 = vld [vmem:[%s4139 + $0x1e8] sm:$0xff]
                  %4264 = vst [vmem:[%s4140 + $0x1e8] sm:$0xff] %v4263
                  %v4265 = vld [vmem:[%s4139 + $0x1f0] sm:$0xff]
                  %4266 = vst [vmem:[%s4140 + $0x1f0] sm:$0xff] %v4265
                  %v4267 = vld [vmem:[%s4139 + $0x1f8] sm:$0xff]
                  %4268 = vst [vmem:[%s4140 + $0x1f8] sm:$0xff] %v4267
                  %s4269 = sadd.s32 1, %s4138
                  %p4270 = scmp.ge.s32.totalorder %s4269, %s4131
                  %s4271 = scalar_select %p4270, 0, %s4269
                  %s4272 = smul.u32 %s4271, 512
                  %s4273 = smul.u32 %s4271, 512
                  %s4274 = scalar_lea.vmem %s3575, %s4272 [#allocation3]
                  %s4275 = scalar_lea.vmem %s3950, %s4273
                $region139: #{condition_generator_forward.1} parent=133 // loop_footer
                  %s4135 = sadd.s32 %s4133, 1
                $region140: #{condition_generator_forward.1} parent=133 // loop_footer_branch
                  %4132 = sbr.rel target = $region136
                $region141: #{condition_generator_forward.1} parent=133 // loop_exit
                  _
                %s4276 = sshrl.u32 %s3946, 6
                %s4277 = sand.u32 %s3946, 63
                %s4278 = smul.u32 %s4276, 64
                %s4279 = smul.u32 8, %s4278
                %s4280 = scalar_lea.vmem %s3575, %s4279 [#allocation3]
                %s4281 = smul.u32 8, %s4278
                %s4282 = scalar_lea.vmem %s3950, %s4281
                // While loop
                $region142: #{condition_generator_forward.1} parent=133 // loop_pre_header
                  _
                $region143: #{condition_generator_forward.1} parent=133 // loop_header
                  %s4284 = sphi 0, %s4286
                  %p4285 = scmp.ge.s32.totalorder %s4284, %s4277
                  %s4289 = sphi 0, %s4296
                  %s4290 = sphi %s4280, %s4299
                  %s4291 = sphi %s4282, %s4300
                $region144: #{condition_generator_forward.1} parent=133 // loop_header_branch
                  %4288 = sbr.rel (%p4285) target = $region148
                $region145: #{condition_generator_forward.1} parent=133 // loop_body
                  %v4292 = vld [vmem:[%s4290] sm:$0xff]
                  %4293 = vst [vmem:[%s4291] sm:$0xff] %v4292
                  %s4294 = sadd.s32 1, %s4289
                  %p4295 = scmp.ge.s32.totalorder %s4294, %s4277
                  %s4296 = scalar_select %p4295, 0, %s4294
                  %s4297 = smul.u32 %s4296, 8
                  %s4298 = smul.u32 %s4296, 8
                  %s4299 = scalar_lea.vmem %s4280, %s4297 [#allocation3]
                  %s4300 = scalar_lea.vmem %s4282, %s4298
                $region146: #{condition_generator_forward.1} parent=133 // loop_footer
                  %s4286 = sadd.s32 %s4284, 1
                $region147: #{condition_generator_forward.1} parent=133 // loop_footer_branch
                  %4283 = sbr.rel target = $region143
                $region148: #{condition_generator_forward.1} parent=133 // loop_exit
                  _
              $region134: #{condition_generator_forward.1} parent=111 // pred_fallthru
                _
              // Predicated region
              $region149: #{condition_generator_forward.1} parent=111 // pred_check
                _
              $region150: #{condition_generator_forward.1} parent=111 // pred_check_branch
                %4302 = sbr.rel target = $region152
              $region151: #{condition_generator_forward.1} parent=111 // pred_region
                _
              $region152: #{condition_generator_forward.1} parent=111 // pred_fallthru
                _
            $region112: #{condition_generator_forward.1} parent=107 // pred_fallthru
              _
            // Predicated region
            $region113: #{condition_generator_forward.1} parent=107 // pred_check
              _
            $region114: #{condition_generator_forward.1} parent=107 // pred_check_branch
              %3957 = sbr.rel target = $region116
            $region115: #{condition_generator_forward.1} parent=107 // pred_region
              %s3959 = sshrl.u32 %s3946, 6
              // While loop
              $region117: #{condition_generator_forward.1} parent=115 // loop_pre_header
                _
              $region118: #{condition_generator_forward.1} parent=115 // loop_header
                %s3961 = sphi 0, %s3963
                %p3962 = scmp.ge.s32.totalorder %s3961, %s3959
                %s3966 = sphi 0, %s4099
                %s3967 = sphi %s3575, %s4102
                %s3968 = sphi %s3950, %s4103
              $region119: #{condition_generator_forward.1} parent=115 // loop_header_branch
                %3965 = sbr.rel (%p3962) target = $region123
              $region120: #{condition_generator_forward.1} parent=115 // loop_body
                %v3969 = vld [vmem:[%s3967] sm:$0xff]
                %3970 = vst [vmem:[%s3968] sm:$0xff] %v3969
                %v3971 = vld [vmem:[%s3967 + $0x8] sm:$0xff]
                %3972 = vst [vmem:[%s3968 + $0x8] sm:$0xff] %v3971
                %v3973 = vld [vmem:[%s3967 + $0x10] sm:$0xff]
                %3974 = vst [vmem:[%s3968 + $0x10] sm:$0xff] %v3973
                %v3975 = vld [vmem:[%s3967 + $0x18] sm:$0xff]
                %3976 = vst [vmem:[%s3968 + $0x18] sm:$0xff] %v3975
                %v3977 = vld [vmem:[%s3967 + $0x20] sm:$0xff]
                %3978 = vst [vmem:[%s3968 + $0x20] sm:$0xff] %v3977
                %v3979 = vld [vmem:[%s3967 + $0x28] sm:$0xff]
                %3980 = vst [vmem:[%s3968 + $0x28] sm:$0xff] %v3979
                %v3981 = vld [vmem:[%s3967 + $0x30] sm:$0xff]
                %3982 = vst [vmem:[%s3968 + $0x30] sm:$0xff] %v3981
                %v3983 = vld [vmem:[%s3967 + $0x38] sm:$0xff]
                %3984 = vst [vmem:[%s3968 + $0x38] sm:$0xff] %v3983
                %v3985 = vld [vmem:[%s3967 + $0x40] sm:$0xff]
                %3986 = vst [vmem:[%s3968 + $0x40] sm:$0xff] %v3985
                %v3987 = vld [vmem:[%s3967 + $0x48] sm:$0xff]
                %3988 = vst [vmem:[%s3968 + $0x48] sm:$0xff] %v3987
                %v3989 = vld [vmem:[%s3967 + $0x50] sm:$0xff]
                %3990 = vst [vmem:[%s3968 + $0x50] sm:$0xff] %v3989
                %v3991 = vld [vmem:[%s3967 + $0x58] sm:$0xff]
                %3992 = vst [vmem:[%s3968 + $0x58] sm:$0xff] %v3991
                %v3993 = vld [vmem:[%s3967 + $0x60] sm:$0xff]
                %3994 = vst [vmem:[%s3968 + $0x60] sm:$0xff] %v3993
                %v3995 = vld [vmem:[%s3967 + $0x68] sm:$0xff]
                %3996 = vst [vmem:[%s3968 + $0x68] sm:$0xff] %v3995
                %v3997 = vld [vmem:[%s3967 + $0x70] sm:$0xff]
                %3998 = vst [vmem:[%s3968 + $0x70] sm:$0xff] %v3997
                %v3999 = vld [vmem:[%s3967 + $0x78] sm:$0xff]
                %4000 = vst [vmem:[%s3968 + $0x78] sm:$0xff] %v3999
                %v4001 = vld [vmem:[%s3967 + $0x80] sm:$0xff]
                %4002 = vst [vmem:[%s3968 + $0x80] sm:$0xff] %v4001
                %v4003 = vld [vmem:[%s3967 + $0x88] sm:$0xff]
                %4004 = vst [vmem:[%s3968 + $0x88] sm:$0xff] %v4003
                %v4005 = vld [vmem:[%s3967 + $0x90] sm:$0xff]
                %4006 = vst [vmem:[%s3968 + $0x90] sm:$0xff] %v4005
                %v4007 = vld [vmem:[%s3967 + $0x98] sm:$0xff]
                %4008 = vst [vmem:[%s3968 + $0x98] sm:$0xff] %v4007
                %v4009 = vld [vmem:[%s3967 + $0xa0] sm:$0xff]
                %4010 = vst [vmem:[%s3968 + $0xa0] sm:$0xff] %v4009
                %v4011 = vld [vmem:[%s3967 + $0xa8] sm:$0xff]
                %4012 = vst [vmem:[%s3968 + $0xa8] sm:$0xff] %v4011
                %v4013 = vld [vmem:[%s3967 + $0xb0] sm:$0xff]
                %4014 = vst [vmem:[%s3968 + $0xb0] sm:$0xff] %v4013
                %v4015 = vld [vmem:[%s3967 + $0xb8] sm:$0xff]
                %4016 = vst [vmem:[%s3968 + $0xb8] sm:$0xff] %v4015
                %v4017 = vld [vmem:[%s3967 + $0xc0] sm:$0xff]
                %4018 = vst [vmem:[%s3968 + $0xc0] sm:$0xff] %v4017
                %v4019 = vld [vmem:[%s3967 + $0xc8] sm:$0xff]
                %4020 = vst [vmem:[%s3968 + $0xc8] sm:$0xff] %v4019
                %v4021 = vld [vmem:[%s3967 + $0xd0] sm:$0xff]
                %4022 = vst [vmem:[%s3968 + $0xd0] sm:$0xff] %v4021
                %v4023 = vld [vmem:[%s3967 + $0xd8] sm:$0xff]
                %4024 = vst [vmem:[%s3968 + $0xd8] sm:$0xff] %v4023
                %v4025 = vld [vmem:[%s3967 + $0xe0] sm:$0xff]
                %4026 = vst [vmem:[%s3968 + $0xe0] sm:$0xff] %v4025
                %v4027 = vld [vmem:[%s3967 + $0xe8] sm:$0xff]
                %4028 = vst [vmem:[%s3968 + $0xe8] sm:$0xff] %v4027
                %v4029 = vld [vmem:[%s3967 + $0xf0] sm:$0xff]
                %4030 = vst [vmem:[%s3968 + $0xf0] sm:$0xff] %v4029
                %v4031 = vld [vmem:[%s3967 + $0xf8] sm:$0xff]
                %4032 = vst [vmem:[%s3968 + $0xf8] sm:$0xff] %v4031
                %v4033 = vld [vmem:[%s3967 + $0x100] sm:$0xff]
                %4034 = vst [vmem:[%s3968 + $0x100] sm:$0xff] %v4033
                %v4035 = vld [vmem:[%s3967 + $0x108] sm:$0xff]
                %4036 = vst [vmem:[%s3968 + $0x108] sm:$0xff] %v4035
                %v4037 = vld [vmem:[%s3967 + $0x110] sm:$0xff]
                %4038 = vst [vmem:[%s3968 + $0x110] sm:$0xff] %v4037
                %v4039 = vld [vmem:[%s3967 + $0x118] sm:$0xff]
                %4040 = vst [vmem:[%s3968 + $0x118] sm:$0xff] %v4039
                %v4041 = vld [vmem:[%s3967 + $0x120] sm:$0xff]
                %4042 = vst [vmem:[%s3968 + $0x120] sm:$0xff] %v4041
                %v4043 = vld [vmem:[%s3967 + $0x128] sm:$0xff]
                %4044 = vst [vmem:[%s3968 + $0x128] sm:$0xff] %v4043
                %v4045 = vld [vmem:[%s3967 + $0x130] sm:$0xff]
                %4046 = vst [vmem:[%s3968 + $0x130] sm:$0xff] %v4045
                %v4047 = vld [vmem:[%s3967 + $0x138] sm:$0xff]
                %4048 = vst [vmem:[%s3968 + $0x138] sm:$0xff] %v4047
                %v4049 = vld [vmem:[%s3967 + $0x140] sm:$0xff]
                %4050 = vst [vmem:[%s3968 + $0x140] sm:$0xff] %v4049
                %v4051 = vld [vmem:[%s3967 + $0x148] sm:$0xff]
                %4052 = vst [vmem:[%s3968 + $0x148] sm:$0xff] %v4051
                %v4053 = vld [vmem:[%s3967 + $0x150] sm:$0xff]
                %4054 = vst [vmem:[%s3968 + $0x150] sm:$0xff] %v4053
                %v4055 = vld [vmem:[%s3967 + $0x158] sm:$0xff]
                %4056 = vst [vmem:[%s3968 + $0x158] sm:$0xff] %v4055
                %v4057 = vld [vmem:[%s3967 + $0x160] sm:$0xff]
                %4058 = vst [vmem:[%s3968 + $0x160] sm:$0xff] %v4057
                %v4059 = vld [vmem:[%s3967 + $0x168] sm:$0xff]
                %4060 = vst [vmem:[%s3968 + $0x168] sm:$0xff] %v4059
                %v4061 = vld [vmem:[%s3967 + $0x170] sm:$0xff]
                %4062 = vst [vmem:[%s3968 + $0x170] sm:$0xff] %v4061
                %v4063 = vld [vmem:[%s3967 + $0x178] sm:$0xff]
                %4064 = vst [vmem:[%s3968 + $0x178] sm:$0xff] %v4063
                %v4065 = vld [vmem:[%s3967 + $0x180] sm:$0xff]
                %4066 = vst [vmem:[%s3968 + $0x180] sm:$0xff] %v4065
                %v4067 = vld [vmem:[%s3967 + $0x188] sm:$0xff]
                %4068 = vst [vmem:[%s3968 + $0x188] sm:$0xff] %v4067
                %v4069 = vld [vmem:[%s3967 + $0x190] sm:$0xff]
                %4070 = vst [vmem:[%s3968 + $0x190] sm:$0xff] %v4069
                %v4071 = vld [vmem:[%s3967 + $0x198] sm:$0xff]
                %4072 = vst [vmem:[%s3968 + $0x198] sm:$0xff] %v4071
                %v4073 = vld [vmem:[%s3967 + $0x1a0] sm:$0xff]
                %4074 = vst [vmem:[%s3968 + $0x1a0] sm:$0xff] %v4073
                %v4075 = vld [vmem:[%s3967 + $0x1a8] sm:$0xff]
                %4076 = vst [vmem:[%s3968 + $0x1a8] sm:$0xff] %v4075
                %v4077 = vld [vmem:[%s3967 + $0x1b0] sm:$0xff]
                %4078 = vst [vmem:[%s3968 + $0x1b0] sm:$0xff] %v4077
                %v4079 = vld [vmem:[%s3967 + $0x1b8] sm:$0xff]
                %4080 = vst [vmem:[%s3968 + $0x1b8] sm:$0xff] %v4079
                %v4081 = vld [vmem:[%s3967 + $0x1c0] sm:$0xff]
                %4082 = vst [vmem:[%s3968 + $0x1c0] sm:$0xff] %v4081
                %v4083 = vld [vmem:[%s3967 + $0x1c8] sm:$0xff]
                %4084 = vst [vmem:[%s3968 + $0x1c8] sm:$0xff] %v4083
                %v4085 = vld [vmem:[%s3967 + $0x1d0] sm:$0xff]
                %4086 = vst [vmem:[%s3968 + $0x1d0] sm:$0xff] %v4085
                %v4087 = vld [vmem:[%s3967 + $0x1d8] sm:$0xff]
                %4088 = vst [vmem:[%s3968 + $0x1d8] sm:$0xff] %v4087
                %v4089 = vld [vmem:[%s3967 + $0x1e0] sm:$0xff]
                %4090 = vst [vmem:[%s3968 + $0x1e0] sm:$0xff] %v4089
                %v4091 = vld [vmem:[%s3967 + $0x1e8] sm:$0xff]
                %4092 = vst [vmem:[%s3968 + $0x1e8] sm:$0xff] %v4091
                %v4093 = vld [vmem:[%s3967 + $0x1f0] sm:$0xff]
                %4094 = vst [vmem:[%s3968 + $0x1f0] sm:$0xff] %v4093
                %v4095 = vld [vmem:[%s3967 + $0x1f8] sm:$0xff]
                %4096 = vst [vmem:[%s3968 + $0x1f8] sm:$0xff] %v4095
                %s4097 = sadd.s32 1, %s3966
                %p4098 = scmp.ge.s32.totalorder %s4097, %s3959
                %s4099 = scalar_select %p4098, 0, %s4097
                %s4100 = smul.u32 %s4099, 512
                %s4101 = smul.u32 %s4099, 512
                %s4102 = scalar_lea.vmem %s3575, %s4100 [#allocation3]
                %s4103 = scalar_lea.vmem %s3950, %s4101
              $region121: #{condition_generator_forward.1} parent=115 // loop_footer
                %s3963 = sadd.s32 %s3961, 1
              $region122: #{condition_generator_forward.1} parent=115 // loop_footer_branch
                %3960 = sbr.rel target = $region118
              $region123: #{condition_generator_forward.1} parent=115 // loop_exit
                _
              %s4104 = sshrl.u32 %s3946, 6
              %s4105 = sand.u32 %s3946, 63
              %s4106 = smul.u32 %s4104, 64
              %s4107 = smul.u32 8, %s4106
              %s4108 = scalar_lea.vmem %s3575, %s4107 [#allocation3]
              %s4109 = smul.u32 8, %s4106
              %s4110 = scalar_lea.vmem %s3950, %s4109
              // While loop
              $region124: #{condition_generator_forward.1} parent=115 // loop_pre_header
                _
              $region125: #{condition_generator_forward.1} parent=115 // loop_header
                %s4112 = sphi 0, %s4114
                %p4113 = scmp.ge.s32.totalorder %s4112, %s4105
                %s4117 = sphi 0, %s4124
                %s4118 = sphi %s4108, %s4127
                %s4119 = sphi %s4110, %s4128
              $region126: #{condition_generator_forward.1} parent=115 // loop_header_branch
                %4116 = sbr.rel (%p4113) target = $region130
              $region127: #{condition_generator_forward.1} parent=115 // loop_body
                %v4120 = vld [vmem:[%s4118] sm:$0xff]
                %4121 = vst [vmem:[%s4119] sm:$0xff] %v4120
                %s4122 = sadd.s32 1, %s4117
                %p4123 = scmp.ge.s32.totalorder %s4122, %s4105
                %s4124 = scalar_select %p4123, 0, %s4122
                %s4125 = smul.u32 %s4124, 8
                %s4126 = smul.u32 %s4124, 8
                %s4127 = scalar_lea.vmem %s4108, %s4125 [#allocation3]
                %s4128 = scalar_lea.vmem %s4110, %s4126
              $region128: #{condition_generator_forward.1} parent=115 // loop_footer
                %s4114 = sadd.s32 %s4112, 1
              $region129: #{condition_generator_forward.1} parent=115 // loop_footer_branch
                %4111 = sbr.rel target = $region125
              $region130: #{condition_generator_forward.1} parent=115 // loop_exit
                _
            $region116: #{condition_generator_forward.1} parent=107 // pred_fallthru
              _
          $region108: #{condition_generator_forward.1} parent=103 // pred_fallthru
            _
          %4303 = vnop
        $region104: #{condition_generator_forward.1} parent=47 // pred_fallthru
          _
      $region48: #{condition_generator_forward.1} parent=5 // pred_fallthru
        _
      %p4304 = scmp.le.s32.totalorder 2, %s15
      // Predicated region
      $region153: #{condition_generator_forward.1} parent=5 // pred_check
        %p4305 = pneg %p4304
      $region154: #{condition_generator_forward.1} parent=5 // pred_check_branch
        %4307 = sbr.rel (%p4305) target = $region156
      $region155: #{condition_generator_forward.1} parent=5 // pred_region
        %s4308 = ssub.s32 %s15, 2
        // Predicated region
        $region157: #{condition_generator_forward.1} parent=155 // pred_check
          %p4309 = pneg %p196
        $region158: #{condition_generator_forward.1} parent=155 // pred_check_branch
          %4311 = sbr.rel (%p4309) target = $region160
        $region159: #{condition_generator_forward.1} parent=155 // pred_region
          %s4312 = sand.u32 %s181, 1
          %s4313 = sand.u32 %s181, 1
          %s4314 = smul.addr %s4313, 1024
          %s4315 = scalar_lea.vmem [#allocation2], %s4314
        $region160: #{condition_generator_forward.1} parent=155 // pred_fallthru
          _
        // Predicated region
        $region161: #{condition_generator_forward.1} parent=155 // pred_check
          %p4316 = pneg %p222
        $region162: #{condition_generator_forward.1} parent=155 // pred_check_branch
          %4318 = sbr.rel (%p4316) target = $region164
        $region163: #{condition_generator_forward.1} parent=155 // pred_region
          %s4319 = sand.u32 %s207, 1
          %s4320 = sand.u32 %s207, 1
          %s4321 = smul.addr %s4320, 1024
          %s4322 = scalar_lea.vmem [#allocation3], %s4321
        $region164: #{condition_generator_forward.1} parent=155 // pred_fallthru
          _
      $region156: #{condition_generator_forward.1} parent=5 // pred_fallthru
        _
    $region6: #{condition_generator_forward.1} parent=1 // loop_footer
      %s19 = sadd.s32 1, %s15
    $region7: #{condition_generator_forward.1} parent=1 // loop_footer_branch
      %14 = sbr.rel target = $region3
    $region8: #{condition_generator_forward.1} parent=1 // loop_exit
      _

</llo_original>
